<compile_context>
chip_gen: v5e
topology: v5e:2x2
jax: 0.10.0
libtpu: 0.0.40
codegen_flags: <defaults>
</compile_context>

<pallas_src>
import functools
import math

import numpy as np

import jax
import jax.numpy as jnp
from jax.experimental import pallas as pl
from jax.experimental.pallas import tpu as pltpu


# ---------------------------------------------------------------------------
# Pallas kernels
# ---------------------------------------------------------------------------
def _matmul_bias_relu_kernel(x_ref, w_ref, b_ref, o_ref):
    # bf16 x bf16 -> f32 accumulate on the MXU, f32 epilogue.
    acc = jnp.dot(x_ref[...], w_ref[...], preferred_element_type=jnp.float32)
    o_ref[...] = jnp.maximum(acc + b_ref[...], 0.0).astype(o_ref.dtype)


def _fc_tail_kernel(xc_ref, s_ref, ws_ref, bs_ref, w1a_ref, w1b_ref, b1_ref,
                    wh_ref, bh_ref, o_ref, *, action_dim):
    # sensor_x = relu(sensor @ Ws + bs)
    sens = jnp.dot(s_ref[...].astype(jnp.bfloat16), ws_ref[...],
                   preferred_element_type=jnp.float32)
    sens = jnp.maximum(sens + bs_ref[...], 0.0)
    # h = relu(concat(x_conv, sensor_x) @ W1 + b1), with W1 split by rows.
    h = jnp.dot(xc_ref[...], w1a_ref[...], preferred_element_type=jnp.float32)
    h = h + jnp.dot(sens.astype(jnp.bfloat16), w1b_ref[...],
                    preferred_element_type=jnp.float32)
    h = jnp.maximum(h + b1_ref[...], 0.0)
    # Both heads as one lane-dense (512, 128) matmul; clamp only log_std cols.
    raw = jnp.dot(h.astype(jnp.bfloat16), wh_ref[...],
                  preferred_element_type=jnp.float32) + bh_ref[...]
    col = jax.lax.broadcasted_iota(jnp.int32, raw.shape, 1)
    is_log_std = (col >= action_dim) & (col < 2 * action_dim)
    o_ref[...] = jnp.where(is_log_std, jnp.clip(raw, -20.0, 2.0), raw)


# ---------------------------------------------------------------------------
# Pallas wrappers
# ---------------------------------------------------------------------------
_VMEM_LIMIT = 32 * 1024 * 1024  # safe on v5e/v6e/v7x (v7x scoped default)


def matmul_bias_relu(x, w, b, *, tile_m=512, out_dtype=jnp.float32):
    """relu(x @ w + b); x:(M,K) bf16, w:(K,N) bf16, b:(1,N) f32."""
    M, K = x.shape
    N = w.shape[1]
    tm = M if M <= tile_m else tile_m          # tile_m=512 is a multiple of 8
    grid = (pl.cdiv(M, tm),)
    cost = pl.CostEstimate(
        flops=2 * M * K * N,
        transcendentals=0,
        bytes_accessed=(M * K * x.dtype.itemsize + K * N * w.dtype.itemsize
                        + N * 4 + M * N * np.dtype(out_dtype).itemsize),
    )
    return pl.pallas_call(
        _matmul_bias_relu_kernel,
        out_shape=jax.ShapeDtypeStruct((M, N), out_dtype),
        grid=grid,
        in_specs=[
            pl.BlockSpec((tm, K), lambda i: (i, 0)),   # row tiles stream in
            pl.BlockSpec((K, N), lambda i: (0, 0)),    # weight resident
            pl.BlockSpec((1, N), lambda i: (0, 0)),    # bias resident
        ],
        out_specs=pl.BlockSpec((tm, N), lambda i: (i, 0)),
        compiler_params=pltpu.CompilerParams(
            dimension_semantics=("parallel",),
            vmem_limit_bytes=_VMEM_LIMIT,
        ),
        cost_estimate=cost,
    )(x, w, b)


def policy_fc_tail(x_conv, sensor, ws, bs, w1a, w1b, b1, wh, bh, *,
                   action_dim, tile_b=256):
    """Fused sensor_fc + concat + fc1 + heads + clamp. Returns (mean, log_std)."""
    B, Kc = x_conv.shape
    S = sensor.shape[1]
    HN = wh.shape[1]
    tb = B if B <= tile_b else tile_b
    grid = (pl.cdiv(B, tb),)
    out = pl.pallas_call(
        functools.partial(_fc_tail_kernel, action_dim=action_dim),
        out_shape=jax.ShapeDtypeStruct((B, HN), jnp.float32),
        grid=grid,
        in_specs=[
            pl.BlockSpec((tb, Kc), lambda i: (i, 0)),
            pl.BlockSpec((tb, S), lambda i: (i, 0)),
            pl.BlockSpec((S, 64), lambda i: (0, 0)),
            pl.BlockSpec((1, 64), lambda i: (0, 0)),
            pl.BlockSpec((Kc, 512), lambda i: (0, 0)),
            pl.BlockSpec((64, 512), lambda i: (0, 0)),
            pl.BlockSpec((1, 512), lambda i: (0, 0)),
            pl.BlockSpec((512, HN), lambda i: (0, 0)),
            pl.BlockSpec((1, HN), lambda i: (0, 0)),
        ],
        out_specs=pl.BlockSpec((tb, HN), lambda i: (i, 0)),
        compiler_params=pltpu.CompilerParams(
            dimension_semantics=("parallel",),
            vmem_limit_bytes=_VMEM_LIMIT,
        ),
    )(x_conv, sensor, ws, bs, w1a, w1b, b1, wh, bh)
    mean = out[:, :action_dim]
    log_std = out[:, action_dim:2 * action_dim]
    return mean, log_std


# ---------------------------------------------------------------------------
# Glue: NHWC im2col (pure strided slices / stack, no transposes)
# ---------------------------------------------------------------------------
def im2col_nhwc(x, k, s):
    """x: (B, H, W, C) -> patches (B*Ho*Wo, k*k*C), K index = kh*k*C + kw*C + c."""
    B, H, W, C = x.shape
    Ho = (H - k) // s + 1
    Wo = (W - k) // s + 1
    cols = []
    for kh in range(k):
        for kw in range(k):
            cols.append(x[:, kh:kh + s * Ho:s, kw:kw + s * Wo:s, :])
    p = jnp.stack(cols, axis=3)                      # (B, Ho, Wo, k*k, C)
    return p.reshape(B * Ho * Wo, k * k * C), Ho, Wo


def conv2d_relu_nhwc(x, w_kkc_oc, b, k, s):
    """x: (B, H, W, C) bf16; w: (k*k*C, OC) bf16; b: (1, OC) f32 -> NHWC bf16."""
    B = x.shape[0]
    patches, Ho, Wo = im2col_nhwc(x, k, s)
    out = matmul_bias_relu(patches, w_kkc_oc, b, out_dtype=jnp.bfloat16)
    OC = w_kkc_oc.shape[1]
    return out.reshape(B, Ho, Wo, OC)


# ---------------------------------------------------------------------------
# Parameter init (PyTorch-like uniform fan-in bounds, optimized layouts)
# ---------------------------------------------------------------------------
def _conv_out_hw(H, W, k, s):
    return (H - k) // s + 1, (W - k) // s + 1


def init_policy_params(key, input_shape, sensor_dim, action_dim):
    C, H, W = input_shape
    keys = jax.random.split(key, 7)

    h1, w1 = _conv_out_hw(H, W, 8, 4)
    h2, w2 = _conv_out_hw(h1, w1, 4, 2)
    h3, w3 = _conv_out_hw(h2, w2, 3, 1)
    conv_out = 64 * h3 * w3

    def init_conv(k_, cin, cout, ksz):
        k1, k2 = jax.random.split(k_)
        fan_in = cin * ksz * ksz
        bound = 1.0 / math.sqrt(fan_in)
        w_pt = jax.random.uniform(k1, (cout, cin, ksz, ksz), jnp.float32, -bound, bound)
        b = jax.random.uniform(k2, (1, cout), jnp.float32, -bound, bound)
        # (OC, C, kh, kw) -> (kh, kw, C, OC) -> (kh*kw*C, OC): matches NHWC im2col K order.
        w = w_pt.transpose(2, 3, 1, 0).reshape(ksz * ksz * cin, cout).astype(jnp.bfloat16)
        return w, b

    def init_linear(k_, fin, fout):
        k1, k2 = jax.random.split(k_)
        bound = 1.0 / math.sqrt(fin)
        w = jax.random.uniform(k1, (fin, fout), jnp.float32, -bound, bound)
        b = jax.random.uniform(k2, (1, fout), jnp.float32, -bound, bound)
        return w, b

    params = {}
    params["conv1"] = init_conv(keys[0], C, 32, 8)
    params["conv2"] = init_conv(keys[1], 32, 64, 4)
    params["conv3"] = init_conv(keys[2], 64, 64, 3)

    ws, bs = init_linear(keys[3], sensor_dim, 64)
    params["sensor_fc"] = (ws.astype(jnp.bfloat16), bs)

    w1, b1 = init_linear(keys[4], conv_out + 64, 512)
    # Bake the PyTorch NCHW flatten order into the conv rows of fc1, so that the
    # NHWC-flattened conv activations reproduce the original module's math.
    perm = np.arange(conv_out).reshape(64, h3, w3).transpose(1, 2, 0).reshape(-1)
    w1a = w1[:conv_out][perm].astype(jnp.bfloat16)
    w1b = w1[conv_out:].astype(jnp.bfloat16)
    params["fc1"] = (w1a, w1b, b1)

    wm, bm = init_linear(keys[5], 512, action_dim)
    wl, bl = init_linear(keys[6], 512, action_dim)
    head_n = max(128, ((2 * action_dim + 127) // 128) * 128)  # lane-dense output slab
    wh = jnp.zeros((512, head_n), jnp.float32)
    wh = wh.at[:, :action_dim].set(wm).at[:, action_dim:2 * action_dim].set(wl)
    bh = jnp.zeros((1, head_n), jnp.float32)
    bh = bh.at[:, :action_dim].set(bm).at[:, action_dim:2 * action_dim].set(bl)
    params["heads"] = (wh.astype(jnp.bfloat16), bh)
    return params


# ---------------------------------------------------------------------------
# Forward pass (matches PolicyNetwork.forward)
# ---------------------------------------------------------------------------
def policy_forward(params, image, sensor_data, *, action_dim):
    # Accept PyTorch-style NCHW input; convert to NHWC + bf16 once at entry.
    x = image.transpose(0, 2, 3, 1).astype(jnp.bfloat16)
    x = conv2d_relu_nhwc(x, *params["conv1"], k=8, s=4)
    x = conv2d_relu_nhwc(x, *params["conv2"], k=4, s=2)
    x = conv2d_relu_nhwc(x, *params["conv3"], k=3, s=1)
    B = x.shape[0]
    x = x.reshape(B, -1)  # NHWC flatten; fc1 rows were permuted to match NCHW order.

    ws, bs = params["sensor_fc"]
    w1a, w1b, b1 = params["fc1"]
    wh, bh = params["heads"]
    mean, log_std = policy_fc_tail(
        x, sensor_data, ws, bs, w1a, w1b, b1, wh, bh, action_dim=action_dim)
    return mean, log_std


if __name__ == "__main__":
    # Small shapes consistent with the module: NCHW image (B, C, H, W)
    B = 2
    input_shape = (4, 64, 64)   # -> conv spatial 15 -> 6 -> 4; conv_out = 64*4*4 = 1024
    sensor_dim = 8
    action_dim = 4

    key = jax.random.PRNGKey(0)
    k_img, k_sens, k_params = jax.random.split(key, 3)

    image = jax.random.normal(k_img, (B,) + input_shape, jnp.float32)
    sensor = jax.random.normal(k_sens, (B, sensor_dim), jnp.float32)

    params = init_policy_params(k_params, input_shape, sensor_dim, action_dim)

    fwd = jax.jit(policy_forward, static_argnames=("action_dim",))
    mean, log_std = fwd(params, image, sensor, action_dim=action_dim)
    jax.block_until_ready((mean, log_std))

    assert mean.shape == (B, action_dim)
    assert log_std.shape == (B, action_dim)
    assert bool(jnp.all(jnp.isfinite(mean))) and bool(jnp.all(jnp.isfinite(log_std)))
    assert bool(jnp.all(log_std >= -20.0)) and bool(jnp.all(log_std <= 2.0))
    print("KERNEL_OK")
</pallas_src>

<mosaic_0001>
module attributes {stable_mosaic.version = 11 : i64} {
  func.func @_matmul_bias_relu_kernel(%arg0: i32, %arg1: memref<450x256xbf16, #tpu.memory_space<vmem>>, %arg2: memref<256x32xbf16, #tpu.memory_space<vmem>>, %arg3: memref<1x32xf32, #tpu.memory_space<vmem>>, %arg4: memref<450x32xbf16, #tpu.memory_space<vmem>>) attributes {dimension_semantics = [#tpu.dimension_semantics<parallel>], iteration_bounds = array<i64: 1>, scalar_prefetch = 0 : i64, scratch_operands = 0 : i64, tpu.core_type = #tpu.core_type<tc>, window_params = [{transform_indices = @transform_0, window_bounds = array<i64: 450, 256>}, {pipeline_mode = #tpu.pipeline_mode<synchronous>, transform_indices = @transform_1, window_bounds = array<i64: 256, 32>}, {pipeline_mode = #tpu.pipeline_mode<synchronous>, transform_indices = @transform_2, window_bounds = array<i64: 1, 32>}, {transform_indices = @transform_3, window_bounds = array<i64: 450, 32>}]} {
    %c0 = arith.constant 0 : index
    %c0_0 = arith.constant 0 : index
    %0 = vector.load %arg1[%c0, %c0_0] : memref<450x256xbf16, #tpu.memory_space<vmem>>, vector<450x256xbf16>
    %c0_1 = arith.constant 0 : index
    %c0_2 = arith.constant 0 : index
    %1 = vector.load %arg2[%c0_1, %c0_2] : memref<256x32xbf16, #tpu.memory_space<vmem>>, vector<256x32xbf16>
    %cst = arith.constant dense<0.000000e+00> : vector<450x32xf32>
    %2 = tpu.matmul %0, %1, %cst {dimension_numbers = #tpu.dot_dimension_numbers<[1], [0], [0], [1], [0, 0, 1, 1], [], []>} : vector<450x256xbf16>, vector<256x32xbf16>, vector<450x32xf32> -> vector<450x32xf32>
    %c0_3 = arith.constant 0 : index
    %c0_4 = arith.constant 0 : index
    %3 = vector.load %arg3[%c0_3, %c0_4] : memref<1x32xf32, #tpu.memory_space<vmem>>, vector<1x32xf32>
    %4 = vector.broadcast %3 : vector<1x32xf32> to vector<450x32xf32>
    %5 = arith.addf %2, %4 : vector<450x32xf32>
    %cst_5 = arith.constant 0.000000e+00 : f32
    %6 = vector.broadcast %cst_5 : f32 to vector<450x32xf32>
    %7 = arith.maximumf %5, %6 : vector<450x32xf32>
    %8 = arith.truncf %7 : vector<450x32xf32> to vector<450x32xbf16>
    %c0_6 = arith.constant 0 : index
    %c0_7 = arith.constant 0 : index
    %9 = vector.load %arg4[%c0_6, %c0_7] : memref<450x32xbf16, #tpu.memory_space<vmem>>, vector<450x32xbf16>
    tpu.vector_store %arg4[%c0_6, %c0_7], %8 {strides = array<i32>} : memref<450x32xbf16, #tpu.memory_space<vmem>>, vector<450x32xbf16>,
    return
  }
  func.func @transform_0(%arg0: i32) -> (i32, i32) {
    %c0_i32 = arith.constant 0 : i32
    %c0_i32_0 = arith.constant 0 : i32
    return %arg0, %c0_i32 : i32, i32
  }
  func.func @transform_1(%arg0: i32) -> (i32, i32) {
    %c0_i32 = arith.constant 0 : i32
    %c0_i32_0 = arith.constant 0 : i32
    %c0_i32_1 = arith.constant 0 : i32
    return %c0_i32, %c0_i32_0 : i32, i32
  }
  func.func @transform_2(%arg0: i32) -> (i32, i32) {
    %c0_i32 = arith.constant 0 : i32
    %c0_i32_0 = arith.constant 0 : i32
    %c0_i32_1 = arith.constant 0 : i32
    return %c0_i32, %c0_i32_0 : i32, i32
  }
  func.func @transform_3(%arg0: i32) -> (i32, i32) {
    %c0_i32 = arith.constant 0 : i32
    %c0_i32_0 = arith.constant 0 : i32
    return %arg0, %c0_i32 : i32, i32
  }
}

module attributes {stable_mosaic.version = 11 : i64} {
  func.func @_matmul_bias_relu_kernel(%arg0: i32, %arg1: memref<72x512xbf16, #tpu.memory_space<vmem>>, %arg2: memref<512x64xbf16, #tpu.memory_space<vmem>>, %arg3: memref<1x64xf32, #tpu.memory_space<vmem>>, %arg4: memref<72x64xbf16, #tpu.memory_space<vmem>>) attributes {dimension_semantics = [#tpu.dimension_semantics<parallel>], iteration_bounds = array<i64: 1>, scalar_prefetch = 0 : i64, scratch_operands = 0 : i64, tpu.core_type = #tpu.core_type<tc>, window_params = [{transform_indices = @transform_0, window_bounds = array<i64: 72, 512>}, {pipeline_mode = #tpu.pipeline_mode<synchronous>, transform_indices = @transform_1, window_bounds = array<i64: 512, 64>}, {pipeline_mode = #tpu.pipeline_mode<synchronous>, transform_indices = @transform_2, window_bounds = array<i64: 1, 64>}, {transform_indices = @transform_3, window_bounds = array<i64: 72, 64>}]} {
    %c0 = arith.constant 0 : index
    %c0_0 = arith.constant 0 : index
    %0 = vector.load %arg1[%c0, %c0_0] : memref<72x512xbf16, #tpu.memory_space<vmem>>, vector<72x512xbf16>
    %c0_1 = arith.constant 0 : index
    %c0_2 = arith.constant 0 : index
    %1 = vector.load %arg2[%c0_1, %c0_2] : memref<512x64xbf16, #tpu.memory_space<vmem>>, vector<512x64xbf16>
    %cst = arith.constant dense<0.000000e+00> : vector<72x64xf32>
    %2 = tpu.matmul %0, %1, %cst {dimension_numbers = #tpu.dot_dimension_numbers<[1], [0], [0], [1], [0, 0, 1, 1], [], []>} : vector<72x512xbf16>, vector<512x64xbf16>, vector<72x64xf32> -> vector<72x64xf32>
    %c0_3 = arith.constant 0 : index
    %c0_4 = arith.constant 0 : index
    %3 = vector.load %arg3[%c0_3, %c0_4] : memref<1x64xf32, #tpu.memory_space<vmem>>, vector<1x64xf32>
    %4 = vector.broadcast %3 : vector<1x64xf32> to vector<72x64xf32>
    %5 = arith.addf %2, %4 : vector<72x64xf32>
    %cst_5 = arith.constant 0.000000e+00 : f32
    %6 = vector.broadcast %cst_5 : f32 to vector<72x64xf32>
    %7 = arith.maximumf %5, %6 : vector<72x64xf32>
    %8 = arith.truncf %7 : vector<72x64xf32> to vector<72x64xbf16>
    %c0_6 = arith.constant 0 : index
    %c0_7 = arith.constant 0 : index
    %9 = vector.load %arg4[%c0_6, %c0_7] : memref<72x64xbf16, #tpu.memory_space<vmem>>, vector<72x64xbf16>
    tpu.vector_store %arg4[%c0_6, %c0_7], %8 {strides = array<i32>} : memref<72x64xbf16, #tpu.memory_space<vmem>>, vector<72x64xbf16>,
    return
  }
  func.func @transform_0(%arg0: i32) -> (i32, i32) {
    %c0_i32 = arith.constant 0 : i32
    %c0_i32_0 = arith.constant 0 : i32
    return %arg0, %c0_i32 : i32, i32
  }
  func.func @transform_1(%arg0: i32) -> (i32, i32) {
    %c0_i32 = arith.constant 0 : i32
    %c0_i32_0 = arith.constant 0 : i32
    %c0_i32_1 = arith.constant 0 : i32
    return %c0_i32, %c0_i32_0 : i32, i32
  }
  func.func @transform_2(%arg0: i32) -> (i32, i32) {
    %c0_i32 = arith.constant 0 : i32
    %c0_i32_0 = arith.constant 0 : i32
    %c0_i32_1 = arith.constant 0 : i32
    return %c0_i32, %c0_i32_0 : i32, i32
  }
  func.func @transform_3(%arg0: i32) -> (i32, i32) {
    %c0_i32 = arith.constant 0 : i32
    %c0_i32_0 = arith.constant 0 : i32
    return %arg0, %c0_i32 : i32, i32
  }
}

module attributes {stable_mosaic.version = 11 : i64} {
  func.func @_matmul_bias_relu_kernel(%arg0: i32, %arg1: memref<32x576xbf16, #tpu.memory_space<vmem>>, %arg2: memref<576x64xbf16, #tpu.memory_space<vmem>>, %arg3: memref<1x64xf32, #tpu.memory_space<vmem>>, %arg4: memref<32x64xbf16, #tpu.memory_space<vmem>>) attributes {dimension_semantics = [#tpu.dimension_semantics<parallel>], iteration_bounds = array<i64: 1>, scalar_prefetch = 0 : i64, scratch_operands = 0 : i64, tpu.core_type = #tpu.core_type<tc>, window_params = [{transform_indices = @transform_0, window_bounds = array<i64: 32, 576>}, {pipeline_mode = #tpu.pipeline_mode<synchronous>, transform_indices = @transform_1, window_bounds = array<i64: 576, 64>}, {pipeline_mode = #tpu.pipeline_mode<synchronous>, transform_indices = @transform_2, window_bounds = array<i64: 1, 64>}, {transform_indices = @transform_3, window_bounds = array<i64: 32, 64>}]} {
    %c0 = arith.constant 0 : index
    %c0_0 = arith.constant 0 : index
    %0 = vector.load %arg1[%c0, %c0_0] : memref<32x576xbf16, #tpu.memory_space<vmem>>, vector<32x576xbf16>
    %c0_1 = arith.constant 0 : index
    %c0_2 = arith.constant 0 : index
    %1 = vector.load %arg2[%c0_1, %c0_2] : memref<576x64xbf16, #tpu.memory_space<vmem>>, vector<576x64xbf16>
    %cst = arith.constant dense<0.000000e+00> : vector<32x64xf32>
    %2 = tpu.matmul %0, %1, %cst {dimension_numbers = #tpu.dot_dimension_numbers<[1], [0], [0], [1], [0, 0, 1, 1], [], []>} : vector<32x576xbf16>, vector<576x64xbf16>, vector<32x64xf32> -> vector<32x64xf32>
    %c0_3 = arith.constant 0 : index
    %c0_4 = arith.constant 0 : index
    %3 = vector.load %arg3[%c0_3, %c0_4] : memref<1x64xf32, #tpu.memory_space<vmem>>, vector<1x64xf32>
    %4 = vector.broadcast %3 : vector<1x64xf32> to vector<32x64xf32>
    %5 = arith.addf %2, %4 : vector<32x64xf32>
    %cst_5 = arith.constant 0.000000e+00 : f32
    %6 = vector.broadcast %cst_5 : f32 to vector<32x64xf32>
    %7 = arith.maximumf %5, %6 : vector<32x64xf32>
    %8 = arith.truncf %7 : vector<32x64xf32> to vector<32x64xbf16>
    %c0_6 = arith.constant 0 : index
    %c0_7 = arith.constant 0 : index
    %9 = vector.load %arg4[%c0_6, %c0_7] : memref<32x64xbf16, #tpu.memory_space<vmem>>, vector<32x64xbf16>
    tpu.vector_store %arg4[%c0_6, %c0_7], %8 {strides = array<i32>} : memref<32x64xbf16, #tpu.memory_space<vmem>>, vector<32x64xbf16>,
    return
  }
  func.func @transform_0(%arg0: i32) -> (i32, i32) {
    %c0_i32 = arith.constant 0 : i32
    %c0_i32_0 = arith.constant 0 : i32
    return %arg0, %c0_i32 : i32, i32
  }
  func.func @transform_1(%arg0: i32) -> (i32, i32) {
    %c0_i32 = arith.constant 0 : i32
    %c0_i32_0 = arith.constant 0 : i32
    %c0_i32_1 = arith.constant 0 : i32
    return %c0_i32, %c0_i32_0 : i32, i32
  }
  func.func @transform_2(%arg0: i32) -> (i32, i32) {
    %c0_i32 = arith.constant 0 : i32
    %c0_i32_0 = arith.constant 0 : i32
    %c0_i32_1 = arith.constant 0 : i32
    return %c0_i32, %c0_i32_0 : i32, i32
  }
  func.func @transform_3(%arg0: i32) -> (i32, i32) {
    %c0_i32 = arith.constant 0 : i32
    %c0_i32_0 = arith.constant 0 : i32
    return %arg0, %c0_i32 : i32, i32
  }
}

module attributes {stable_mosaic.version = 11 : i64} {
  func.func @_fc_tail_kernel(%arg0: i32, %arg1: memref<2x1024xbf16, #tpu.memory_space<vmem>>, %arg2: memref<2x8xf32, #tpu.memory_space<vmem>>, %arg3: memref<8x64xbf16, #tpu.memory_space<vmem>>, %arg4: memref<1x64xf32, #tpu.memory_space<vmem>>, %arg5: memref<1024x512xbf16, #tpu.memory_space<vmem>>, %arg6: memref<64x512xbf16, #tpu.memory_space<vmem>>, %arg7: memref<1x512xf32, #tpu.memory_space<vmem>>, %arg8: memref<512x128xbf16, #tpu.memory_space<vmem>>, %arg9: memref<1x128xf32, #tpu.memory_space<vmem>>, %arg10: memref<2x128xf32, #tpu.memory_space<vmem>>) attributes {dimension_semantics = [#tpu.dimension_semantics<parallel>], iteration_bounds = array<i64: 1>, scalar_prefetch = 0 : i64, scratch_operands = 0 : i64, tpu.core_type = #tpu.core_type<tc>, window_params = [{transform_indices = @transform_0, window_bounds = array<i64: 2, 1024>}, {transform_indices = @transform_1, window_bounds = array<i64: 2, 8>}, {pipeline_mode = #tpu.pipeline_mode<synchronous>, transform_indices = @transform_2, window_bounds = array<i64: 8, 64>}, {pipeline_mode = #tpu.pipeline_mode<synchronous>, transform_indices = @transform_3, window_bounds = array<i64: 1, 64>}, {pipeline_mode = #tpu.pipeline_mode<synchronous>, transform_indices = @transform_4, window_bounds = array<i64: 1024, 512>}, {pipeline_mode = #tpu.pipeline_mode<synchronous>, transform_indices = @transform_5, window_bounds = array<i64: 64, 512>}, {pipeline_mode = #tpu.pipeline_mode<synchronous>, transform_indices = @transform_6, window_bounds = array<i64: 1, 512>}, {pipeline_mode = #tpu.pipeline_mode<synchronous>, transform_indices = @transform_7, window_bounds = array<i64: 512, 128>}, {pipeline_mode = #tpu.pipeline_mode<synchronous>, transform_indices = @transform_8, window_bounds = array<i64: 1, 128>}, {transform_indices = @transform_9, window_bounds = array<i64: 2, 128>}]} {
    %c0 = arith.constant 0 : index
    %c0_0 = arith.constant 0 : index
    %0 = vector.load %arg2[%c0, %c0_0] : memref<2x8xf32, #tpu.memory_space<vmem>>, vector<2x8xf32>
    %1 = arith.truncf %0 : vector<2x8xf32> to vector<2x8xbf16>
    %c0_1 = arith.constant 0 : index
    %c0_2 = arith.constant 0 : index
    %2 = vector.load %arg3[%c0_1, %c0_2] : memref<8x64xbf16, #tpu.memory_space<vmem>>, vector<8x64xbf16>
    %cst = arith.constant dense<0.000000e+00> : vector<2x64xf32>
    %3 = tpu.matmul %1, %2, %cst {dimension_numbers = #tpu.dot_dimension_numbers<[1], [0], [0], [1], [0, 0, 1, 1], [], []>} : vector<2x8xbf16>, vector<8x64xbf16>, vector<2x64xf32> -> vector<2x64xf32>
    %c0_3 = arith.constant 0 : index
    %c0_4 = arith.constant 0 : index
    %4 = vector.load %arg4[%c0_3, %c0_4] : memref<1x64xf32, #tpu.memory_space<vmem>>, vector<1x64xf32>
    %5 = vector.broadcast %4 : vector<1x64xf32> to vector<2x64xf32>
    %6 = arith.addf %3, %5 : vector<2x64xf32>
    %cst_5 = arith.constant 0.000000e+00 : f32
    %7 = vector.broadcast %cst_5 : f32 to vector<2x64xf32>
    %8 = arith.maximumf %6, %7 : vector<2x64xf32>
    %c0_6 = arith.constant 0 : index
    %c0_7 = arith.constant 0 : index
    %9 = vector.load %arg1[%c0_6, %c0_7] : memref<2x1024xbf16, #tpu.memory_space<vmem>>, vector<2x1024xbf16>
    %c0_8 = arith.constant 0 : index
    %c0_9 = arith.constant 0 : index
    %10 = vector.load %arg5[%c0_8, %c0_9] : memref<1024x512xbf16, #tpu.memory_space<vmem>>, vector<1024x512xbf16>
    %cst_10 = arith.constant dense<0.000000e+00> : vector<2x512xf32>
    %11 = tpu.matmul %9, %10, %cst_10 {dimension_numbers = #tpu.dot_dimension_numbers<[1], [0], [0], [1], [0, 0, 1, 1], [], []>} : vector<2x1024xbf16>, vector<1024x512xbf16>, vector<2x512xf32> -> vector<2x512xf32>
    %12 = arith.truncf %8 : vector<2x64xf32> to vector<2x64xbf16>
    %c0_11 = arith.constant 0 : index
    %c0_12 = arith.constant 0 : index
    %13 = vector.load %arg6[%c0_11, %c0_12] : memref<64x512xbf16, #tpu.memory_space<vmem>>, vector<64x512xbf16>
    %cst_13 = arith.constant dense<0.000000e+00> : vector<2x512xf32>
    %14 = tpu.matmul %12, %13, %cst_13 {dimension_numbers = #tpu.dot_dimension_numbers<[1], [0], [0], [1], [0, 0, 1, 1], [], []>} : vector<2x64xbf16>, vector<64x512xbf16>, vector<2x512xf32> -> vector<2x512xf32>
    %15 = arith.addf %11, %14 : vector<2x512xf32>
    %c0_14 = arith.constant 0 : index
    %c0_15 = arith.constant 0 : index
    %16 = vector.load %arg7[%c0_14, %c0_15] : memref<1x512xf32, #tpu.memory_space<vmem>>, vector<1x512xf32>
    %17 = vector.broadcast %16 : vector<1x512xf32> to vector<2x512xf32>
    %18 = arith.addf %15, %17 : vector<2x512xf32>
    %cst_16 = arith.constant 0.000000e+00 : f32
    %19 = vector.broadcast %cst_16 : f32 to vector<2x512xf32>
    %20 = arith.maximumf %18, %19 : vector<2x512xf32>
    %21 = arith.truncf %20 : vector<2x512xf32> to vector<2x512xbf16>
    %c0_17 = arith.constant 0 : index
    %c0_18 = arith.constant 0 : index
    %22 = vector.load %arg8[%c0_17, %c0_18] : memref<512x128xbf16, #tpu.memory_space<vmem>>, vector<512x128xbf16>
    %cst_19 = arith.constant dense<0.000000e+00> : vector<2x128xf32>
    %23 = tpu.matmul %21, %22, %cst_19 {dimension_numbers = #tpu.dot_dimension_numbers<[1], [0], [0], [1], [0, 0, 1, 1], [], []>} : vector<2x512xbf16>, vector<512x128xbf16>, vector<2x128xf32> -> vector<2x128xf32>
    %c0_20 = arith.constant 0 : index
    %c0_21 = arith.constant 0 : index
    %24 = vector.load %arg9[%c0_20, %c0_21] : memref<1x128xf32, #tpu.memory_space<vmem>>, vector<1x128xf32>
    %25 = vector.broadcast %24 : vector<1x128xf32> to vector<2x128xf32>
    %26 = arith.addf %23, %25 : vector<2x128xf32>
    %27 = tpu.iota {dimensions = array<i32: 1>} : vector<2x128xi32>
    %c4_i32 = arith.constant 4 : i32
    %28 = vector.broadcast %c4_i32 : i32 to vector<2x128xi32>
    %29 = arith.cmpi sge, %27, %28 : vector<2x128xi32>
    %c8_i32 = arith.constant 8 : i32
    %30 = vector.broadcast %c8_i32 : i32 to vector<2x128xi32>
    %31 = arith.cmpi slt, %27, %30 : vector<2x128xi32>
    %32 = arith.andi %29, %31 : vector<2x128xi1>
    %cst_22 = arith.constant -2.000000e+01 : f32
    %cst_23 = arith.constant 2.000000e+00 : f32
    %33 = vector.broadcast %cst_22 : f32 to vector<2x128xf32>
    %34 = arith.maximumf %33, %26 : vector<2x128xf32>
    %35 = vector.broadcast %cst_23 : f32 to vector<2x128xf32>
    %36 = arith.minimumf %35, %34 : vector<2x128xf32>
    %37 = arith.select %32, %36, %26 : vector<2x128xi1>, vector<2x128xf32>
    %c0_24 = arith.constant 0 : index
    %c0_25 = arith.constant 0 : index
    %38 = vector.load %arg10[%c0_24, %c0_25] : memref<2x128xf32, #tpu.memory_space<vmem>>, vector<2x128xf32>
    tpu.vector_store %arg10[%c0_24, %c0_25], %37 {strides = array<i32>} : memref<2x128xf32, #tpu.memory_space<vmem>>, vector<2x128xf32>,
    return
  }
  func.func @transform_0(%arg0: i32) -> (i32, i32) {
    %c0_i32 = arith.constant 0 : i32
    %c0_i32_0 = arith.constant 0 : i32
    return %arg0, %c0_i32 : i32, i32
  }
  func.func @transform_1(%arg0: i32) -> (i32, i32) {
    %c0_i32 = arith.constant 0 : i32
    %c0_i32_0 = arith.constant 0 : i32
    return %arg0, %c0_i32 : i32, i32
  }
  func.func @transform_2(%arg0: i32) -> (i32, i32) {
    %c0_i32 = arith.constant 0 : i32
    %c0_i32_0 = arith.constant 0 : i32
    %c0_i32_1 = arith.constant 0 : i32
    return %c0_i32, %c0_i32_0 : i32, i32
  }
  func.func @transform_3(%arg0: i32) -> (i32, i32) {
    %c0_i32 = arith.constant 0 : i32
    %c0_i32_0 = arith.constant 0 : i32
    %c0_i32_1 = arith.constant 0 : i32
    return %c0_i32, %c0_i32_0 : i32, i32
  }
  func.func @transform_4(%arg0: i32) -> (i32, i32) {
    %c0_i32 = arith.constant 0 : i32
    %c0_i32_0 = arith.constant 0 : i32
    %c0_i32_1 = arith.constant 0 : i32
    return %c0_i32, %c0_i32_0 : i32, i32
  }
  func.func @transform_5(%arg0: i32) -> (i32, i32) {
    %c0_i32 = arith.constant 0 : i32
    %c0_i32_0 = arith.constant 0 : i32
    %c0_i32_1 = arith.constant 0 : i32
    return %c0_i32, %c0_i32_0 : i32, i32
  }
  func.func @transform_6(%arg0: i32) -> (i32, i32) {
    %c0_i32 = arith.constant 0 : i32
    %c0_i32_0 = arith.constant 0 : i32
    %c0_i32_1 = arith.constant 0 : i32
    return %c0_i32, %c0_i32_0 : i32, i32
  }
  func.func @transform_7(%arg0: i32) -> (i32, i32) {
    %c0_i32 = arith.constant 0 : i32
    %c0_i32_0 = arith.constant 0 : i32
    %c0_i32_1 = arith.constant 0 : i32
    return %c0_i32, %c0_i32_0 : i32, i32
  }
  func.func @transform_8(%arg0: i32) -> (i32, i32) {
    %c0_i32 = arith.constant 0 : i32
    %c0_i32_0 = arith.constant 0 : i32
    %c0_i32_1 = arith.constant 0 : i32
    return %c0_i32, %c0_i32_0 : i32, i32
  }
  func.func @transform_9(%arg0: i32) -> (i32, i32) {
    %c0_i32 = arith.constant 0 : i32
    %c0_i32_0 = arith.constant 0 : i32
    return %arg0, %c0_i32 : i32, i32
  }
}

</mosaic_0001>

<llo_original>
// kernel: policy_forward.4
$region0: #{policy_forward.4}
  #allocation0 [shape = 'u32[]', space=smem, size = 0x4, offset = 0x4, fixed_abs, tag = 'smem constant byte address 0x4 - core index']
  #allocation1 [shape = 'u32[72,128]{1,0:T(1,128)}', space=vmem, size = 0x9000, scoped, tag = 'internal scratch']
  %s0 = inlined_call_operand.vmem [shape: bf16[450,256], index: 0, kind: input, shape index: {}]
  %s1 = inlined_call_operand.vmem [shape: bf16[256,32], index: 1, kind: input, shape index: {}]
  %s2 = inlined_call_operand.vmem [shape: f32[1,32], index: 2, kind: input, shape index: {}]
  %s3 = inlined_call_operand.vmem [shape: bf16[450,32], index: 3, kind: output, shape index: {}]
  %s4 = sld [smem:[#allocation0]]
  $region22: #{policy_forward.4} parent=0
    _
  %s6 = ssub.s32 1, %s4
  %s7 = scalar_select 0, %s6, %s4
  // Predicated region
  $region2: #{policy_forward.4} parent=0 // pred_check
    _
  $region3: #{policy_forward.4} parent=0 // pred_check_branch
    %9 = sbr.rel (0) target = $region5
  $region4: #{policy_forward.4} parent=0 // pred_region
    _
  $region5: #{policy_forward.4} parent=0 // pred_fallthru
    _
  // Predicated region
  $region6: #{policy_forward.4} parent=0 // pred_check
    _
  $region7: #{policy_forward.4} parent=0 // pred_check_branch
    %11 = sbr.rel (0) target = $region9
  $region8: #{policy_forward.4} parent=0 // pred_region
    _
  $region9: #{policy_forward.4} parent=0 // pred_fallthru
    _
  // Predicated region
  $region10: #{policy_forward.4} parent=0 // pred_check
    _
  $region11: #{policy_forward.4} parent=0 // pred_check_branch
    %13 = sbr.rel (0) target = $region13
  $region12: #{policy_forward.4} parent=0 // pred_region
    _
  $region13: #{policy_forward.4} parent=0 // pred_fallthru
    _
  %v14 = vld [vmem:[%s0] sm:$0xff]
  %v15 = vld [vmem:[%s0 + $0x8] sm:$0xff]
  %v16 = vld [vmem:[%s0 + $0x10] sm:$0xff]
  %v17 = vld [vmem:[%s0 + $0x18] sm:$0xff]
  %v18 = vld [vmem:[%s0 + $0x20] sm:$0xff]
  %v19 = vld [vmem:[%s0 + $0x28] sm:$0xff]
  %v20 = vld [vmem:[%s0 + $0x30] sm:$0xff]
  %v21 = vld [vmem:[%s0 + $0x38] sm:$0xff]
  %v22 = vld [vmem:[%s0 + $0x40] sm:$0xff]
  %v23 = vld [vmem:[%s0 + $0x48] sm:$0xff]
  %v24 = vld [vmem:[%s0 + $0x50] sm:$0xff]
  %v25 = vld [vmem:[%s0 + $0x58] sm:$0xff]
  %v26 = vld [vmem:[%s0 + $0x60] sm:$0xff]
  %v27 = vld [vmem:[%s0 + $0x68] sm:$0xff]
  %v28 = vld [vmem:[%s0 + $0x70] sm:$0xff]
  %v29 = vld [vmem:[%s0 + $0x78] sm:$0xff]
  %v30 = vld [vmem:[%s0 + $0x80] sm:$0xff]
  %v31 = vld [vmem:[%s0 + $0x88] sm:$0xff]
  %v32 = vld [vmem:[%s0 + $0x90] sm:$0xff]
  %v33 = vld [vmem:[%s0 + $0x98] sm:$0xff]
  %v34 = vld [vmem:[%s0 + $0xa0] sm:$0xff]
  %v35 = vld [vmem:[%s0 + $0xa8] sm:$0xff]
  %v36 = vld [vmem:[%s0 + $0xb0] sm:$0xff]
  %v37 = vld [vmem:[%s0 + $0xb8] sm:$0xff]
  %v38 = vld [vmem:[%s0 + $0xc0] sm:$0xff]
  %v39 = vld [vmem:[%s0 + $0xc8] sm:$0xff]
  %v40 = vld [vmem:[%s0 + $0xd0] sm:$0xff]
  %v41 = vld [vmem:[%s0 + $0xd8] sm:$0xff]
  %v42 = vld [vmem:[%s0 + $0xe0] sm:$0xff]
  %v43 = vld [vmem:[%s0 + $0xe8] sm:$0xff]
  %v44 = vld [vmem:[%s0 + $0xf0] sm:$0xff]
  %v45 = vld [vmem:[%s0 + $0xf8] sm:$0xff]
  %v46 = vld [vmem:[%s0 + $0x100] sm:$0xff]
  %v47 = vld [vmem:[%s0 + $0x108] sm:$0xff]
  %v48 = vld [vmem:[%s0 + $0x110] sm:$0xff]
  %v49 = vld [vmem:[%s0 + $0x118] sm:$0xff]
  %v50 = vld [vmem:[%s0 + $0x120] sm:$0xff]
  %v51 = vld [vmem:[%s0 + $0x128] sm:$0xff]
  %v52 = vld [vmem:[%s0 + $0x130] sm:$0xff]
  %v53 = vld [vmem:[%s0 + $0x138] sm:$0xff]
  %v54 = vld [vmem:[%s0 + $0x140] sm:$0xff]
  %v55 = vld [vmem:[%s0 + $0x148] sm:$0xff]
  %v56 = vld [vmem:[%s0 + $0x150] sm:$0xff]
  %v57 = vld [vmem:[%s0 + $0x158] sm:$0xff]
  %v58 = vld [vmem:[%s0 + $0x160] sm:$0xff]
  %v59 = vld [vmem:[%s0 + $0x168] sm:$0xff]
  %v60 = vld [vmem:[%s0 + $0x170] sm:$0xff]
  %v61 = vld [vmem:[%s0 + $0x178] sm:$0xff]
  %v62 = vld [vmem:[%s0 + $0x180] sm:$0xff]
  %v63 = vld [vmem:[%s0 + $0x188] sm:$0xff]
  %v64 = vld [vmem:[%s0 + $0x190] sm:$0xff]
  %v65 = vld [vmem:[%s0 + $0x198] sm:$0xff]
  %v66 = vld [vmem:[%s0 + $0x1a0] sm:$0xff]
  %v67 = vld [vmem:[%s0 + $0x1a8] sm:$0xff]
  %v68 = vld [vmem:[%s0 + $0x1b0] sm:$0xff]
  %v69 = vld [vmem:[%s0 + $0x1b8] sm:$0xff]
  %v70 = vld [vmem:[%s0 + $0x1c0] sm:$0x11]
  %v71 = vld [vmem:[%s1] sm:$0xf]
  %v72 = vld [vmem:[%s1 + $0x4] sm:$0xf]
  %v73 = vld [vmem:[%s1 + $0x8] sm:$0xf]
  %v74 = vld [vmem:[%s1 + $0xc] sm:$0xf]
  %v75 = vld [vmem:[%s1 + $0x10] sm:$0xf]
  %v76 = vld [vmem:[%s1 + $0x14] sm:$0xf]
  %v77 = vld [vmem:[%s1 + $0x18] sm:$0xf]
  %v78 = vld [vmem:[%s1 + $0x1c] sm:$0xf]
  %v79 = vld [vmem:[%s1 + $0x20] sm:$0xf]
  %v80 = vld [vmem:[%s1 + $0x24] sm:$0xf]
  %v81 = vld [vmem:[%s1 + $0x28] sm:$0xf]
  %v82 = vld [vmem:[%s1 + $0x2c] sm:$0xf]
  %v83 = vld [vmem:[%s1 + $0x30] sm:$0xf]
  %v84 = vld [vmem:[%s1 + $0x34] sm:$0xf]
  %v85 = vld [vmem:[%s1 + $0x38] sm:$0xf]
  %v86 = vld [vmem:[%s1 + $0x3c] sm:$0xf]
  %v87 = vld [vmem:[%s1 + $0x40] sm:$0xf]
  %v88 = vld [vmem:[%s1 + $0x44] sm:$0xf]
  %v89 = vld [vmem:[%s1 + $0x48] sm:$0xf]
  %v90 = vld [vmem:[%s1 + $0x4c] sm:$0xf]
  %v91 = vld [vmem:[%s1 + $0x50] sm:$0xf]
  %v92 = vld [vmem:[%s1 + $0x54] sm:$0xf]
  %v93 = vld [vmem:[%s1 + $0x58] sm:$0xf]
  %v94 = vld [vmem:[%s1 + $0x5c] sm:$0xf]
  %v95 = vld [vmem:[%s1 + $0x60] sm:$0xf]
  %v96 = vld [vmem:[%s1 + $0x64] sm:$0xf]
  %v97 = vld [vmem:[%s1 + $0x68] sm:$0xf]
  %v98 = vld [vmem:[%s1 + $0x6c] sm:$0xf]
  %v99 = vld [vmem:[%s1 + $0x70] sm:$0xf]
  %v100 = vld [vmem:[%s1 + $0x74] sm:$0xf]
  %v101 = vld [vmem:[%s1 + $0x78] sm:$0xf]
  %v102 = vld [vmem:[%s1 + $0x7c] sm:$0xf]
  %v103 = vld [vmem:[%s2] sm:$0x1]
  %v105 = vperm.slane %v103, 0
  %v164 = vunpack.c.l.b16 %v14
  %v165 = vunpack.c.h.b16 %v14
  %v166 = vunpack.c.l.b16 %v15
  %v167 = vunpack.c.h.b16 %v15
  %v168 = vunpack.c.l.b16 %v16
  %v169 = vunpack.c.h.b16 %v16
  %v170 = vunpack.c.l.b16 %v17
  %v171 = vunpack.c.h.b16 %v17
  %v172 = vunpack.c.l.b16 %v18
  %v173 = vunpack.c.h.b16 %v18
  %v174 = vunpack.c.l.b16 %v19
  %v175 = vunpack.c.h.b16 %v19
  %v176 = vunpack.c.l.b16 %v20
  %v177 = vunpack.c.h.b16 %v20
  %v178 = vunpack.c.l.b16 %v21
  %v179 = vunpack.c.h.b16 %v21
  %v180 = vunpack.c.l.b16 %v22
  %v181 = vunpack.c.h.b16 %v22
  %v182 = vunpack.c.l.b16 %v23
  %v183 = vunpack.c.h.b16 %v23
  %v184 = vunpack.c.l.b16 %v24
  %v185 = vunpack.c.h.b16 %v24
  %v186 = vunpack.c.l.b16 %v25
  %v187 = vunpack.c.h.b16 %v25
  %v188 = vunpack.c.l.b16 %v26
  %v189 = vunpack.c.h.b16 %v26
  %v190 = vunpack.c.l.b16 %v27
  %v191 = vunpack.c.h.b16 %v27
  %v192 = vunpack.c.l.b16 %v28
  %v193 = vunpack.c.h.b16 %v28
  %v194 = vunpack.c.l.b16 %v29
  %v195 = vunpack.c.h.b16 %v29
  %v196 = vunpack.c.l.b16 %v30
  %v197 = vunpack.c.h.b16 %v30
  %v198 = vunpack.c.l.b16 %v31
  %v199 = vunpack.c.h.b16 %v31
  %v200 = vunpack.c.l.b16 %v32
  %v201 = vunpack.c.h.b16 %v32
  %v202 = vunpack.c.l.b16 %v33
  %v203 = vunpack.c.h.b16 %v33
  %v204 = vunpack.c.l.b16 %v34
  %v205 = vunpack.c.h.b16 %v34
  %v206 = vunpack.c.l.b16 %v35
  %v207 = vunpack.c.h.b16 %v35
  %v208 = vunpack.c.l.b16 %v36
  %v209 = vunpack.c.h.b16 %v36
  %v210 = vunpack.c.l.b16 %v37
  %v211 = vunpack.c.h.b16 %v37
  %v212 = vunpack.c.l.b16 %v38
  %v213 = vunpack.c.h.b16 %v38
  %v214 = vunpack.c.l.b16 %v39
  %v215 = vunpack.c.h.b16 %v39
  %v216 = vunpack.c.l.b16 %v40
  %v217 = vunpack.c.h.b16 %v40
  %v218 = vunpack.c.l.b16 %v41
  %v219 = vunpack.c.h.b16 %v41
  %v220 = vunpack.c.l.b16 %v42
  %v221 = vunpack.c.h.b16 %v42
  %v222 = vunpack.c.l.b16 %v43
  %v223 = vunpack.c.h.b16 %v43
  %v224 = vunpack.c.l.b16 %v44
  %v225 = vunpack.c.h.b16 %v44
  %v226 = vunpack.c.l.b16 %v45
  %v227 = vunpack.c.h.b16 %v45
  %v228 = vunpack.c.l.b16 %v46
  %v229 = vunpack.c.h.b16 %v46
  %v230 = vunpack.c.l.b16 %v47
  %v231 = vunpack.c.h.b16 %v47
  %v232 = vunpack.c.l.b16 %v48
  %v233 = vunpack.c.h.b16 %v48
  %v234 = vunpack.c.l.b16 %v49
  %v235 = vunpack.c.h.b16 %v49
  %v236 = vunpack.c.l.b16 %v50
  %v237 = vunpack.c.h.b16 %v50
  %v238 = vunpack.c.l.b16 %v51
  %v239 = vunpack.c.h.b16 %v51
  %v240 = vunpack.c.l.b16 %v52
  %v241 = vunpack.c.h.b16 %v52
  %v242 = vunpack.c.l.b16 %v53
  %v243 = vunpack.c.h.b16 %v53
  %v244 = vunpack.c.l.b16 %v54
  %v245 = vunpack.c.h.b16 %v54
  %v246 = vunpack.c.l.b16 %v55
  %v247 = vunpack.c.h.b16 %v55
  %v248 = vunpack.c.l.b16 %v56
  %v249 = vunpack.c.h.b16 %v56
  %v250 = vunpack.c.l.b16 %v57
  %v251 = vunpack.c.h.b16 %v57
  %v252 = vunpack.c.l.b16 %v58
  %v253 = vunpack.c.h.b16 %v58
  %v254 = vunpack.c.l.b16 %v59
  %v255 = vunpack.c.h.b16 %v59
  %v256 = vunpack.c.l.b16 %v60
  %v257 = vunpack.c.h.b16 %v60
  %v258 = vunpack.c.l.b16 %v61
  %v259 = vunpack.c.h.b16 %v61
  %v260 = vunpack.c.l.b16 %v62
  %v261 = vunpack.c.h.b16 %v62
  %v262 = vunpack.c.l.b16 %v63
  %v263 = vunpack.c.h.b16 %v63
  %v264 = vunpack.c.l.b16 %v64
  %v265 = vunpack.c.h.b16 %v64
  %v266 = vunpack.c.l.b16 %v65
  %v267 = vunpack.c.h.b16 %v65
  %v268 = vunpack.c.l.b16 %v66
  %v269 = vunpack.c.h.b16 %v66
  %v270 = vunpack.c.l.b16 %v67
  %v271 = vunpack.c.h.b16 %v67
  %v272 = vunpack.c.l.b16 %v68
  %v273 = vunpack.c.h.b16 %v68
  %v274 = vunpack.c.l.b16 %v69
  %v275 = vunpack.c.h.b16 %v69
  %v276 = vunpack.c.l.b16 %v70
  %v277 = vunpack.c.h.b16 %v70
  %v278 = vpack.c.b16 %v166, %v164
  %v279 = vpack.c.b16 %v167, %v165
  %v280 = vpack.c.b16 %v170, %v168
  %v281 = vpack.c.b16 %v171, %v169
  %v282 = vpack.c.b16 %v174, %v172
  %v283 = vpack.c.b16 %v175, %v173
  %v284 = vpack.c.b16 %v178, %v176
  %v285 = vpack.c.b16 %v179, %v177
  %v286 = vpack.c.b16 %v182, %v180
  %v287 = vpack.c.b16 %v183, %v181
  %v288 = vpack.c.b16 %v186, %v184
  %v289 = vpack.c.b16 %v187, %v185
  %v290 = vpack.c.b16 %v190, %v188
  %v291 = vpack.c.b16 %v191, %v189
  %v292 = vpack.c.b16 %v194, %v192
  %v293 = vpack.c.b16 %v195, %v193
  %v294 = vpack.c.b16 %v198, %v196
  %v295 = vpack.c.b16 %v199, %v197
  %v296 = vpack.c.b16 %v202, %v200
  %v297 = vpack.c.b16 %v203, %v201
  %v298 = vpack.c.b16 %v206, %v204
  %v299 = vpack.c.b16 %v207, %v205
  %v300 = vpack.c.b16 %v210, %v208
  %v301 = vpack.c.b16 %v211, %v209
  %v302 = vpack.c.b16 %v214, %v212
  %v303 = vpack.c.b16 %v215, %v213
  %v304 = vpack.c.b16 %v218, %v216
  %v305 = vpack.c.b16 %v219, %v217
  %v306 = vpack.c.b16 %v222, %v220
  %v307 = vpack.c.b16 %v223, %v221
  %v308 = vpack.c.b16 %v226, %v224
  %v309 = vpack.c.b16 %v227, %v225
  %v310 = vpack.c.b16 %v230, %v228
  %v311 = vpack.c.b16 %v231, %v229
  %v312 = vpack.c.b16 %v234, %v232
  %v313 = vpack.c.b16 %v235, %v233
  %v314 = vpack.c.b16 %v238, %v236
  %v315 = vpack.c.b16 %v239, %v237
  %v316 = vpack.c.b16 %v242, %v240
  %v317 = vpack.c.b16 %v243, %v241
  %v318 = vpack.c.b16 %v246, %v244
  %v319 = vpack.c.b16 %v247, %v245
  %v320 = vpack.c.b16 %v250, %v248
  %v321 = vpack.c.b16 %v251, %v249
  %v322 = vpack.c.b16 %v254, %v252
  %v323 = vpack.c.b16 %v255, %v253
  %v324 = vpack.c.b16 %v258, %v256
  %v325 = vpack.c.b16 %v259, %v257
  %v326 = vpack.c.b16 %v262, %v260
  %v327 = vpack.c.b16 %v263, %v261
  %v328 = vpack.c.b16 %v266, %v264
  %v329 = vpack.c.b16 %v267, %v265
  %v330 = vpack.c.b16 %v270, %v268
  %v331 = vpack.c.b16 %v271, %v269
  %v332 = vpack.c.b16 %v274, %v272
  %v333 = vpack.c.b16 %v275, %v273
  %v334 = vpack.c.b16 %v276, %v276
  %v335 = vpack.c.b16 %v277, %v277
  %v426 = vunpack.c.l.b16 %v71
  %v427 = vunpack.c.l.b16 %v72
  %v428 = vunpack.c.l.b16 %v73
  %v429 = vunpack.c.l.b16 %v74
  %v430 = vunpack.c.l.b16 %v75
  %v431 = vunpack.c.l.b16 %v76
  %v432 = vunpack.c.l.b16 %v77
  %v433 = vunpack.c.l.b16 %v78
  %v434 = vunpack.c.l.b16 %v79
  %v435 = vunpack.c.l.b16 %v80
  %v436 = vunpack.c.l.b16 %v81
  %v437 = vunpack.c.l.b16 %v82
  %v438 = vunpack.c.l.b16 %v83
  %v439 = vunpack.c.l.b16 %v84
  %v440 = vunpack.c.l.b16 %v85
  %v441 = vunpack.c.l.b16 %v86
  %v442 = vunpack.c.l.b16 %v87
  %v443 = vunpack.c.l.b16 %v88
  %v444 = vunpack.c.l.b16 %v89
  %v445 = vunpack.c.l.b16 %v90
  %v446 = vunpack.c.l.b16 %v91
  %v447 = vunpack.c.l.b16 %v92
  %v448 = vunpack.c.l.b16 %v93
  %v449 = vunpack.c.l.b16 %v94
  %v450 = vunpack.c.l.b16 %v95
  %v451 = vunpack.c.l.b16 %v96
  %v452 = vunpack.c.l.b16 %v97
  %v453 = vunpack.c.l.b16 %v98
  %v454 = vunpack.c.l.b16 %v99
  %v455 = vunpack.c.l.b16 %v100
  %v456 = vunpack.c.l.b16 %v101
  %v457 = vunpack.c.l.b16 %v102
  %v458 = vpack.c.b16 %v427, %v426
  %v459 = vpack.c.b16 %v429, %v428
  %v460 = vpack.c.b16 %v431, %v430
  %v461 = vpack.c.b16 %v433, %v432
  %v462 = vpack.c.b16 %v435, %v434
  %v463 = vpack.c.b16 %v437, %v436
  %v464 = vpack.c.b16 %v439, %v438
  %v465 = vpack.c.b16 %v441, %v440
  %v466 = vpack.c.b16 %v443, %v442
  %v467 = vpack.c.b16 %v445, %v444
  %v468 = vpack.c.b16 %v447, %v446
  %v469 = vpack.c.b16 %v449, %v448
  %v470 = vpack.c.b16 %v451, %v450
  %v471 = vpack.c.b16 %v453, %v452
  %v472 = vpack.c.b16 %v455, %v454
  %v473 = vpack.c.b16 %v457, %v456
  %490 = vmatpush.bf16.msra.mxu0 %v465
  %491 = vmatpush.bf16.msra.mxu0 %v464
  %492 = vmatpush.bf16.msra.mxu0 %v463
  %493 = vmatpush.bf16.msra.mxu0 %v462
  %494 = vmatpush.bf16.msra.mxu0 %v461
  %495 = vmatpush.bf16.msra.mxu0 %v460
  %496 = vmatpush.bf16.msra.mxu0 %v459
  %497 = vmatpush.bf16.msra.mxu0 %v458
  %498 = vmatmul.bf16.gmra.mxu0 %v278
  %v499 = vpop.f32.mrf.mxu0
  %v500 = vadd.f32 %v105, %v499
  %v501 = vpop.f32.mrf.mxu0
  %v502 = vadd.f32 %v105, %v501
  %503 = vmatmul.bf16.gmra.mxu0 %v280
  %v504 = vpop.f32.mrf.mxu0
  %v505 = vadd.f32 %v105, %v504
  %v506 = vpop.f32.mrf.mxu0
  %v507 = vadd.f32 %v105, %v506
  %508 = vmatmul.bf16.gmra.mxu0 %v282
  %v509 = vpop.f32.mrf.mxu0
  %v510 = vadd.f32 %v105, %v509
  %v511 = vpop.f32.mrf.mxu0
  %v512 = vadd.f32 %v105, %v511
  %513 = vmatmul.bf16.gmra.mxu0 %v284
  %v514 = vpop.f32.mrf.mxu0
  %v515 = vadd.f32 %v105, %v514
  %v516 = vpop.f32.mrf.mxu0
  %v517 = vadd.f32 %v105, %v516
  %518 = vmatmul.bf16.gmra.mxu0 %v286
  %v519 = vpop.f32.mrf.mxu0
  %v520 = vadd.f32 %v105, %v519
  %v521 = vpop.f32.mrf.mxu0
  %v522 = vadd.f32 %v105, %v521
  %523 = vmatmul.bf16.gmra.mxu0 %v288
  %v524 = vpop.f32.mrf.mxu0
  %v525 = vadd.f32 %v105, %v524
  %v526 = vpop.f32.mrf.mxu0
  %v527 = vadd.f32 %v105, %v526
  %528 = vmatmul.bf16.gmra.mxu0 %v290
  %v529 = vpop.f32.mrf.mxu0
  %v530 = vadd.f32 %v105, %v529
  %v531 = vpop.f32.mrf.mxu0
  %v532 = vadd.f32 %v105, %v531
  %533 = vmatmul.bf16.gmra.mxu0 %v292
  %v534 = vpop.f32.mrf.mxu0
  %v535 = vadd.f32 %v105, %v534
  %v536 = vpop.f32.mrf.mxu0
  %v537 = vadd.f32 %v105, %v536
  %538 = vmatmul.bf16.gmra.mxu0 %v294
  %v539 = vpop.f32.mrf.mxu0
  %v540 = vadd.f32 %v105, %v539
  %v541 = vpop.f32.mrf.mxu0
  %v542 = vadd.f32 %v105, %v541
  %543 = vmatmul.bf16.gmra.mxu0 %v296
  %v544 = vpop.f32.mrf.mxu0
  %v545 = vadd.f32 %v105, %v544
  %v546 = vpop.f32.mrf.mxu0
  %v547 = vadd.f32 %v105, %v546
  %548 = vmatmul.bf16.gmra.mxu0 %v298
  %v549 = vpop.f32.mrf.mxu0
  %v550 = vadd.f32 %v105, %v549
  %v551 = vpop.f32.mrf.mxu0
  %v552 = vadd.f32 %v105, %v551
  %553 = vmatmul.bf16.gmra.mxu0 %v300
  %v554 = vpop.f32.mrf.mxu0
  %v555 = vadd.f32 %v105, %v554
  %v556 = vpop.f32.mrf.mxu0
  %v557 = vadd.f32 %v105, %v556
  %558 = vmatmul.bf16.gmra.mxu0 %v302
  %v559 = vpop.f32.mrf.mxu0
  %v560 = vadd.f32 %v105, %v559
  %v561 = vpop.f32.mrf.mxu0
  %v562 = vadd.f32 %v105, %v561
  %563 = vmatmul.bf16.gmra.mxu0 %v304
  %v564 = vpop.f32.mrf.mxu0
  %v565 = vadd.f32 %v105, %v564
  %v566 = vpop.f32.mrf.mxu0
  %v567 = vadd.f32 %v105, %v566
  %568 = vmatmul.bf16.gmra.mxu0 %v306
  %v569 = vpop.f32.mrf.mxu0
  %v570 = vadd.f32 %v105, %v569
  %v571 = vpop.f32.mrf.mxu0
  %v572 = vadd.f32 %v105, %v571
  %573 = vmatmul.bf16.gmra.mxu0 %v308
  %v574 = vpop.f32.mrf.mxu0
  %v575 = vadd.f32 %v105, %v574
  %v576 = vpop.f32.mrf.mxu0
  %v577 = vadd.f32 %v105, %v576
  %578 = vmatmul.bf16.gmra.mxu0 %v310
  %v579 = vpop.f32.mrf.mxu0
  %v580 = vadd.f32 %v105, %v579
  %v581 = vpop.f32.mrf.mxu0
  %v582 = vadd.f32 %v105, %v581
  %583 = vmatmul.bf16.gmra.mxu0 %v312
  %v584 = vpop.f32.mrf.mxu0
  %v585 = vadd.f32 %v105, %v584
  %v586 = vpop.f32.mrf.mxu0
  %v587 = vadd.f32 %v105, %v586
  %588 = vmatmul.bf16.gmra.mxu0 %v314
  %v589 = vpop.f32.mrf.mxu0
  %v590 = vadd.f32 %v105, %v589
  %v591 = vpop.f32.mrf.mxu0
  %v592 = vadd.f32 %v105, %v591
  %593 = vmatmul.bf16.gmra.mxu0 %v316
  %v594 = vpop.f32.mrf.mxu0
  %v595 = vadd.f32 %v105, %v594
  %v596 = vpop.f32.mrf.mxu0
  %v597 = vadd.f32 %v105, %v596
  %598 = vmatmul.bf16.gmra.mxu0 %v318
  %v599 = vpop.f32.mrf.mxu0
  %v600 = vadd.f32 %v105, %v599
  %v601 = vpop.f32.mrf.mxu0
  %v602 = vadd.f32 %v105, %v601
  %603 = vmatmul.bf16.gmra.mxu0 %v320
  %v604 = vpop.f32.mrf.mxu0
  %v605 = vadd.f32 %v105, %v604
  %v606 = vpop.f32.mrf.mxu0
  %v607 = vadd.f32 %v105, %v606
  %608 = vmatmul.bf16.gmra.mxu0 %v322
  %v609 = vpop.f32.mrf.mxu0
  %v610 = vadd.f32 %v105, %v609
  %v611 = vpop.f32.mrf.mxu0
  %v612 = vadd.f32 %v105, %v611
  %613 = vmatmul.bf16.gmra.mxu0 %v324
  %v614 = vpop.f32.mrf.mxu0
  %v615 = vadd.f32 %v105, %v614
  %v616 = vpop.f32.mrf.mxu0
  %v617 = vadd.f32 %v105, %v616
  %618 = vmatmul.bf16.gmra.mxu0 %v326
  %v619 = vpop.f32.mrf.mxu0
  %v620 = vadd.f32 %v105, %v619
  %v621 = vpop.f32.mrf.mxu0
  %v622 = vadd.f32 %v105, %v621
  %623 = vmatmul.bf16.gmra.mxu0 %v328
  %v624 = vpop.f32.mrf.mxu0
  %v625 = vadd.f32 %v105, %v624
  %v626 = vpop.f32.mrf.mxu0
  %v627 = vadd.f32 %v105, %v626
  %628 = vmatmul.bf16.gmra.mxu0 %v330
  %v629 = vpop.f32.mrf.mxu0
  %v630 = vadd.f32 %v105, %v629
  %v631 = vpop.f32.mrf.mxu0
  %v632 = vadd.f32 %v105, %v631
  %633 = vmatmul.bf16.gmra.mxu0 %v332
  %v634 = vpop.f32.mrf.mxu0
  %v635 = vadd.f32 %v105, %v634
  %v636 = vpop.f32.mrf.mxu0
  %v637 = vadd.f32 %v105, %v636
  %638 = vmatmul.bf16.gmra.mxu0 %v334
  %v639 = vpop.f32.mrf.mxu0
  %v640 = vadd.f32 %v105, %v639
  %v641 = vpop.f32.mrf.mxu0
  %642 = vdwg.mxu0
  %643 = vmatpush.bf16.msra.mxu0 %v473
  %644 = vmatpush.bf16.msra.mxu0 %v472
  %645 = vmatpush.bf16.msra.mxu0 %v471
  %646 = vmatpush.bf16.msra.mxu0 %v470
  %647 = vmatpush.bf16.msra.mxu0 %v469
  %648 = vmatpush.bf16.msra.mxu0 %v468
  %649 = vmatpush.bf16.msra.mxu0 %v467
  %650 = vmatpush.bf16.msra.mxu0 %v466
  %651 = vmatmul.bf16.gmra.mxu0 %v279
  %v652 = vpop.f32.mrf.mxu0
  %v653 = vadd.f32 %v500, %v652
  %v654 = vpop.f32.mrf.mxu0
  %v655 = vadd.f32 %v502, %v654
  %656 = vmatmul.bf16.gmra.mxu0 %v281
  %v657 = vpop.f32.mrf.mxu0
  %v658 = vadd.f32 %v505, %v657
  %v659 = vpop.f32.mrf.mxu0
  %v660 = vadd.f32 %v507, %v659
  %661 = vmatmul.bf16.gmra.mxu0 %v283
  %v662 = vpop.f32.mrf.mxu0
  %v663 = vadd.f32 %v510, %v662
  %v664 = vpop.f32.mrf.mxu0
  %v665 = vadd.f32 %v512, %v664
  %666 = vmatmul.bf16.gmra.mxu0 %v285
  %v667 = vpop.f32.mrf.mxu0
  %v668 = vadd.f32 %v515, %v667
  %v669 = vpop.f32.mrf.mxu0
  %v670 = vadd.f32 %v517, %v669
  %671 = vmatmul.bf16.gmra.mxu0 %v287
  %v672 = vpop.f32.mrf.mxu0
  %v673 = vadd.f32 %v520, %v672
  %v674 = vpop.f32.mrf.mxu0
  %v675 = vadd.f32 %v522, %v674
  %676 = vmatmul.bf16.gmra.mxu0 %v289
  %v677 = vpop.f32.mrf.mxu0
  %v678 = vadd.f32 %v525, %v677
  %v679 = vpop.f32.mrf.mxu0
  %v680 = vadd.f32 %v527, %v679
  %681 = vmatmul.bf16.gmra.mxu0 %v291
  %v682 = vpop.f32.mrf.mxu0
  %v683 = vadd.f32 %v530, %v682
  %v684 = vpop.f32.mrf.mxu0
  %v685 = vadd.f32 %v532, %v684
  %686 = vmatmul.bf16.gmra.mxu0 %v293
  %v687 = vpop.f32.mrf.mxu0
  %v688 = vadd.f32 %v535, %v687
  %v689 = vpop.f32.mrf.mxu0
  %v690 = vadd.f32 %v537, %v689
  %691 = vmatmul.bf16.gmra.mxu0 %v295
  %v692 = vpop.f32.mrf.mxu0
  %v693 = vadd.f32 %v540, %v692
  %v694 = vpop.f32.mrf.mxu0
  %v695 = vadd.f32 %v542, %v694
  %696 = vmatmul.bf16.gmra.mxu0 %v297
  %v697 = vpop.f32.mrf.mxu0
  %v698 = vadd.f32 %v545, %v697
  %v699 = vpop.f32.mrf.mxu0
  %v700 = vadd.f32 %v547, %v699
  %701 = vmatmul.bf16.gmra.mxu0 %v299
  %v702 = vpop.f32.mrf.mxu0
  %v703 = vadd.f32 %v550, %v702
  %v704 = vpop.f32.mrf.mxu0
  %v705 = vadd.f32 %v552, %v704
  %706 = vmatmul.bf16.gmra.mxu0 %v301
  %v707 = vpop.f32.mrf.mxu0
  %v708 = vadd.f32 %v555, %v707
  %v709 = vpop.f32.mrf.mxu0
  %v710 = vadd.f32 %v557, %v709
  %711 = vmatmul.bf16.gmra.mxu0 %v303
  %v712 = vpop.f32.mrf.mxu0
  %v713 = vadd.f32 %v560, %v712
  %v714 = vpop.f32.mrf.mxu0
  %v715 = vadd.f32 %v562, %v714
  %716 = vmatmul.bf16.gmra.mxu0 %v305
  %v717 = vpop.f32.mrf.mxu0
  %v718 = vadd.f32 %v565, %v717
  %v719 = vpop.f32.mrf.mxu0
  %v720 = vadd.f32 %v567, %v719
  %721 = vmatmul.bf16.gmra.mxu0 %v307
  %v722 = vpop.f32.mrf.mxu0
  %v723 = vadd.f32 %v570, %v722
  %v724 = vpop.f32.mrf.mxu0
  %v725 = vadd.f32 %v572, %v724
  %726 = vmatmul.bf16.gmra.mxu0 %v309
  %v727 = vpop.f32.mrf.mxu0
  %v728 = vadd.f32 %v575, %v727
  %v729 = vpop.f32.mrf.mxu0
  %v730 = vadd.f32 %v577, %v729
  %731 = vmatmul.bf16.gmra.mxu0 %v311
  %v732 = vpop.f32.mrf.mxu0
  %v733 = vadd.f32 %v580, %v732
  %v734 = vpop.f32.mrf.mxu0
  %v735 = vadd.f32 %v582, %v734
  %736 = vmatmul.bf16.gmra.mxu0 %v313
  %v737 = vpop.f32.mrf.mxu0
  %v738 = vadd.f32 %v585, %v737
  %v739 = vpop.f32.mrf.mxu0
  %v740 = vadd.f32 %v587, %v739
  %741 = vmatmul.bf16.gmra.mxu0 %v315
  %v742 = vpop.f32.mrf.mxu0
  %v743 = vadd.f32 %v590, %v742
  %v744 = vpop.f32.mrf.mxu0
  %v745 = vadd.f32 %v592, %v744
  %746 = vmatmul.bf16.gmra.mxu0 %v317
  %v747 = vpop.f32.mrf.mxu0
  %v748 = vadd.f32 %v595, %v747
  %v749 = vpop.f32.mrf.mxu0
  %v750 = vadd.f32 %v597, %v749
  %751 = vmatmul.bf16.gmra.mxu0 %v319
  %v752 = vpop.f32.mrf.mxu0
  %v753 = vadd.f32 %v600, %v752
  %v754 = vpop.f32.mrf.mxu0
  %v755 = vadd.f32 %v602, %v754
  %756 = vmatmul.bf16.gmra.mxu0 %v321
  %v757 = vpop.f32.mrf.mxu0
  %v758 = vadd.f32 %v605, %v757
  %v759 = vpop.f32.mrf.mxu0
  %v760 = vadd.f32 %v607, %v759
  %761 = vmatmul.bf16.gmra.mxu0 %v323
  %v762 = vpop.f32.mrf.mxu0
  %v763 = vadd.f32 %v610, %v762
  %v764 = vpop.f32.mrf.mxu0
  %v765 = vadd.f32 %v612, %v764
  %766 = vmatmul.bf16.gmra.mxu0 %v325
  %v767 = vpop.f32.mrf.mxu0
  %v768 = vadd.f32 %v615, %v767
  %v769 = vpop.f32.mrf.mxu0
  %v770 = vadd.f32 %v617, %v769
  %771 = vmatmul.bf16.gmra.mxu0 %v327
  %v772 = vpop.f32.mrf.mxu0
  %v773 = vadd.f32 %v620, %v772
  %v774 = vpop.f32.mrf.mxu0
  %v775 = vadd.f32 %v622, %v774
  %776 = vmatmul.bf16.gmra.mxu0 %v329
  %v777 = vpop.f32.mrf.mxu0
  %v778 = vadd.f32 %v625, %v777
  %v779 = vpop.f32.mrf.mxu0
  %v780 = vadd.f32 %v627, %v779
  %781 = vmatmul.bf16.gmra.mxu0 %v331
  %v782 = vpop.f32.mrf.mxu0
  %v783 = vadd.f32 %v630, %v782
  %v784 = vpop.f32.mrf.mxu0
  %v785 = vadd.f32 %v632, %v784
  %786 = vmatmul.bf16.gmra.mxu0 %v333
  %v787 = vpop.f32.mrf.mxu0
  %v788 = vadd.f32 %v635, %v787
  %v789 = vpop.f32.mrf.mxu0
  %v790 = vadd.f32 %v637, %v789
  %791 = vmatmul.bf16.gmra.mxu0 %v335
  %v792 = vpop.f32.mrf.mxu0
  %v793 = vadd.f32 %v640, %v792
  %v794 = vpop.f32.mrf.mxu0
  %795 = vdwg.mxu0
  %v796 = vmax.f32 %v653, 0.0
  %v797 = vmax.f32 %v655, 0.0
  %v798 = vmax.f32 %v658, 0.0
  %v799 = vmax.f32 %v660, 0.0
  %v800 = vmax.f32 %v663, 0.0
  %v801 = vmax.f32 %v665, 0.0
  %v802 = vmax.f32 %v668, 0.0
  %v803 = vmax.f32 %v670, 0.0
  %v804 = vmax.f32 %v673, 0.0
  %v805 = vmax.f32 %v675, 0.0
  %v806 = vmax.f32 %v678, 0.0
  %v807 = vmax.f32 %v680, 0.0
  %v808 = vmax.f32 %v683, 0.0
  %v809 = vmax.f32 %v685, 0.0
  %v810 = vmax.f32 %v688, 0.0
  %v811 = vmax.f32 %v690, 0.0
  %v812 = vmax.f32 %v693, 0.0
  %v813 = vmax.f32 %v695, 0.0
  %v814 = vmax.f32 %v698, 0.0
  %v815 = vmax.f32 %v700, 0.0
  %v816 = vmax.f32 %v703, 0.0
  %v817 = vmax.f32 %v705, 0.0
  %v818 = vmax.f32 %v708, 0.0
  %v819 = vmax.f32 %v710, 0.0
  %v820 = vmax.f32 %v713, 0.0
  %v821 = vmax.f32 %v715, 0.0
  %v822 = vmax.f32 %v718, 0.0
  %v823 = vmax.f32 %v720, 0.0
  %v824 = vmax.f32 %v723, 0.0
  %v825 = vmax.f32 %v725, 0.0
  %v826 = vmax.f32 %v728, 0.0
  %v827 = vmax.f32 %v730, 0.0
  %v828 = vmax.f32 %v733, 0.0
  %v829 = vmax.f32 %v735, 0.0
  %v830 = vmax.f32 %v738, 0.0
  %v831 = vmax.f32 %v740, 0.0
  %v832 = vmax.f32 %v743, 0.0
  %v833 = vmax.f32 %v745, 0.0
  %v834 = vmax.f32 %v748, 0.0
  %v835 = vmax.f32 %v750, 0.0
  %v836 = vmax.f32 %v753, 0.0
  %v837 = vmax.f32 %v755, 0.0
  %v838 = vmax.f32 %v758, 0.0
  %v839 = vmax.f32 %v760, 0.0
  %v840 = vmax.f32 %v763, 0.0
  %v841 = vmax.f32 %v765, 0.0
  %v842 = vmax.f32 %v768, 0.0
  %v843 = vmax.f32 %v770, 0.0
  %v844 = vmax.f32 %v773, 0.0
  %v845 = vmax.f32 %v775, 0.0
  %v846 = vmax.f32 %v778, 0.0
  %v847 = vmax.f32 %v780, 0.0
  %v848 = vmax.f32 %v783, 0.0
  %v849 = vmax.f32 %v785, 0.0
  %v850 = vmax.f32 %v788, 0.0
  %v851 = vmax.f32 %v790, 0.0
  %v852 = vmax.f32 %v793, 0.0
  %v853 = vpack.c.bf16 %v796, %v796
  %v854 = vpack.c.bf16 %v797, %v797
  %v855 = vpack.c.bf16 %v798, %v798
  %v856 = vpack.c.bf16 %v799, %v799
  %v857 = vpack.c.bf16 %v800, %v800
  %v858 = vpack.c.bf16 %v801, %v801
  %v859 = vpack.c.bf16 %v802, %v802
  %v860 = vpack.c.bf16 %v803, %v803
  %v861 = vpack.c.bf16 %v804, %v804
  %v862 = vpack.c.bf16 %v805, %v805
  %v863 = vpack.c.bf16 %v806, %v806
  %v864 = vpack.c.bf16 %v807, %v807
  %v865 = vpack.c.bf16 %v808, %v808
  %v866 = vpack.c.bf16 %v809, %v809
  %v867 = vpack.c.bf16 %v810, %v810
  %v868 = vpack.c.bf16 %v811, %v811
  %v869 = vpack.c.bf16 %v812, %v812
  %v870 = vpack.c.bf16 %v813, %v813
  %v871 = vpack.c.bf16 %v814, %v814
  %v872 = vpack.c.bf16 %v815, %v815
  %v873 = vpack.c.bf16 %v816, %v816
  %v874 = vpack.c.bf16 %v817, %v817
  %v875 = vpack.c.bf16 %v818, %v818
  %v876 = vpack.c.bf16 %v819, %v819
  %v877 = vpack.c.bf16 %v820, %v820
  %v878 = vpack.c.bf16 %v821, %v821
  %v879 = vpack.c.bf16 %v822, %v822
  %v880 = vpack.c.bf16 %v823, %v823
  %v881 = vpack.c.bf16 %v824, %v824
  %v882 = vpack.c.bf16 %v825, %v825
  %v883 = vpack.c.bf16 %v826, %v826
  %v884 = vpack.c.bf16 %v827, %v827
  %v885 = vpack.c.bf16 %v828, %v828
  %v886 = vpack.c.bf16 %v829, %v829
  %v887 = vpack.c.bf16 %v830, %v830
  %v888 = vpack.c.bf16 %v831, %v831
  %v889 = vpack.c.bf16 %v832, %v832
  %v890 = vpack.c.bf16 %v833, %v833
  %v891 = vpack.c.bf16 %v834, %v834
  %v892 = vpack.c.bf16 %v835, %v835
  %v893 = vpack.c.bf16 %v836, %v836
  %v894 = vpack.c.bf16 %v837, %v837
  %v895 = vpack.c.bf16 %v838, %v838
  %v896 = vpack.c.bf16 %v839, %v839
  %v897 = vpack.c.bf16 %v840, %v840
  %v898 = vpack.c.bf16 %v841, %v841
  %v899 = vpack.c.bf16 %v842, %v842
  %v900 = vpack.c.bf16 %v843, %v843
  %v901 = vpack.c.bf16 %v844, %v844
  %v902 = vpack.c.bf16 %v845, %v845
  %v903 = vpack.c.bf16 %v846, %v846
  %v904 = vpack.c.bf16 %v847, %v847
  %v905 = vpack.c.bf16 %v848, %v848
  %v906 = vpack.c.bf16 %v849, %v849
  %v907 = vpack.c.bf16 %v850, %v850
  %v908 = vpack.c.bf16 %v851, %v851
  %v909 = vpack.c.bf16 %v852, %v852
  %vm910 = vcmask 257024
  %911 = vst.msk [vmem:[%s3] sm:$0xf] %vm910, %v853
  %912 = vst.msk [vmem:[%s3 + $0x4] sm:$0xf] %vm910, %v854
  %913 = vst.msk [vmem:[%s3 + $0x8] sm:$0xf] %vm910, %v855
  %914 = vst.msk [vmem:[%s3 + $0xc] sm:$0xf] %vm910, %v856
  %915 = vst.msk [vmem:[%s3 + $0x10] sm:$0xf] %vm910, %v857
  %916 = vst.msk [vmem:[%s3 + $0x14] sm:$0xf] %vm910, %v858
  %917 = vst.msk [vmem:[%s3 + $0x18] sm:$0xf] %vm910, %v859
  %918 = vst.msk [vmem:[%s3 + $0x1c] sm:$0xf] %vm910, %v860
  %919 = vst.msk [vmem:[%s3 + $0x20] sm:$0xf] %vm910, %v861
  %920 = vst.msk [vmem:[%s3 + $0x24] sm:$0xf] %vm910, %v862
  %921 = vst.msk [vmem:[%s3 + $0x28] sm:$0xf] %vm910, %v863
  %922 = vst.msk [vmem:[%s3 + $0x2c] sm:$0xf] %vm910, %v864
  %923 = vst.msk [vmem:[%s3 + $0x30] sm:$0xf] %vm910, %v865
  %924 = vst.msk [vmem:[%s3 + $0x34] sm:$0xf] %vm910, %v866
  %925 = vst.msk [vmem:[%s3 + $0x38] sm:$0xf] %vm910, %v867
  %926 = vst.msk [vmem:[%s3 + $0x3c] sm:$0xf] %vm910, %v868
  %927 = vst.msk [vmem:[%s3 + $0x40] sm:$0xf] %vm910, %v869
  %928 = vst.msk [vmem:[%s3 + $0x44] sm:$0xf] %vm910, %v870
  %929 = vst.msk [vmem:[%s3 + $0x48] sm:$0xf] %vm910, %v871
  %930 = vst.msk [vmem:[%s3 + $0x4c] sm:$0xf] %vm910, %v872
  %931 = vst.msk [vmem:[%s3 + $0x50] sm:$0xf] %vm910, %v873
  %932 = vst.msk [vmem:[%s3 + $0x54] sm:$0xf] %vm910, %v874
  %933 = vst.msk [vmem:[%s3 + $0x58] sm:$0xf] %vm910, %v875
  %934 = vst.msk [vmem:[%s3 + $0x5c] sm:$0xf] %vm910, %v876
  %935 = vst.msk [vmem:[%s3 + $0x60] sm:$0xf] %vm910, %v877
  %936 = vst.msk [vmem:[%s3 + $0x64] sm:$0xf] %vm910, %v878
  %937 = vst.msk [vmem:[%s3 + $0x68] sm:$0xf] %vm910, %v879
  %938 = vst.msk [vmem:[%s3 + $0x6c] sm:$0xf] %vm910, %v880
  %939 = vst.msk [vmem:[%s3 + $0x70] sm:$0xf] %vm910, %v881
  %940 = vst.msk [vmem:[%s3 + $0x74] sm:$0xf] %vm910, %v882
  %941 = vst.msk [vmem:[%s3 + $0x78] sm:$0xf] %vm910, %v883
  %942 = vst.msk [vmem:[%s3 + $0x7c] sm:$0xf] %vm910, %v884
  %943 = vst.msk [vmem:[%s3 + $0x80] sm:$0xf] %vm910, %v885
  %944 = vst.msk [vmem:[%s3 + $0x84] sm:$0xf] %vm910, %v886
  %945 = vst.msk [vmem:[%s3 + $0x88] sm:$0xf] %vm910, %v887
  %946 = vst.msk [vmem:[%s3 + $0x8c] sm:$0xf] %vm910, %v888
  %947 = vst.msk [vmem:[%s3 + $0x90] sm:$0xf] %vm910, %v889
  %948 = vst.msk [vmem:[%s3 + $0x94] sm:$0xf] %vm910, %v890
  %949 = vst.msk [vmem:[%s3 + $0x98] sm:$0xf] %vm910, %v891
  %950 = vst.msk [vmem:[%s3 + $0x9c] sm:$0xf] %vm910, %v892
  %951 = vst.msk [vmem:[%s3 + $0xa0] sm:$0xf] %vm910, %v893
  %952 = vst.msk [vmem:[%s3 + $0xa4] sm:$0xf] %vm910, %v894
  %953 = vst.msk [vmem:[%s3 + $0xa8] sm:$0xf] %vm910, %v895
  %954 = vst.msk [vmem:[%s3 + $0xac] sm:$0xf] %vm910, %v896
  %955 = vst.msk [vmem:[%s3 + $0xb0] sm:$0xf] %vm910, %v897
  %956 = vst.msk [vmem:[%s3 + $0xb4] sm:$0xf] %vm910, %v898
  %957 = vst.msk [vmem:[%s3 + $0xb8] sm:$0xf] %vm910, %v899
  %958 = vst.msk [vmem:[%s3 + $0xbc] sm:$0xf] %vm910, %v900
  %959 = vst.msk [vmem:[%s3 + $0xc0] sm:$0xf] %vm910, %v901
  %960 = vst.msk [vmem:[%s3 + $0xc4] sm:$0xf] %vm910, %v902
  %961 = vst.msk [vmem:[%s3 + $0xc8] sm:$0xf] %vm910, %v903
  %962 = vst.msk [vmem:[%s3 + $0xcc] sm:$0xf] %vm910, %v904
  %963 = vst.msk [vmem:[%s3 + $0xd0] sm:$0xf] %vm910, %v905
  %964 = vst.msk [vmem:[%s3 + $0xd4] sm:$0xf] %vm910, %v906
  %965 = vst.msk [vmem:[%s3 + $0xd8] sm:$0xf] %vm910, %v907
  %966 = vst.msk [vmem:[%s3 + $0xdc] sm:$0xf] %vm910, %v908
  %vm967 = vcmask 253952
  %968 = vst.msk [vmem:[%s3 + $0xe0] sm:$0x1] %vm967, %v909
  // Predicated region
  $region14: #{policy_forward.4} parent=0 // pred_check
    _
  $region15: #{policy_forward.4} parent=0 // pred_check_branch
    %970 = sbr.rel (0) target = $region17
  $region16: #{policy_forward.4} parent=0 // pred_region
    _
  $region17: #{policy_forward.4} parent=0 // pred_fallthru
    _
  // Predicated region
  $region18: #{policy_forward.4} parent=0 // pred_check
    _
  $region19: #{policy_forward.4} parent=0 // pred_check_branch
    %972 = sbr.rel (0) target = $region21
  $region20: #{policy_forward.4} parent=0 // pred_region
    _
  $region21: #{policy_forward.4} parent=0 // pred_fallthru
    _

// kernel: policy_forward.5
$region0: #{policy_forward.5}
  #allocation0 [shape = 'u32[]', space=smem, size = 0x4, offset = 0x4, fixed_abs, tag = 'smem constant byte address 0x4 - core index']
  #allocation1 [shape = 'u32[72,128]{1,0:T(1,128)}', space=vmem, size = 0x9000, scoped, tag = 'internal scratch']
  %s0 = inlined_call_operand.vmem [shape: bf16[72,512], index: 0, kind: input, shape index: {}]
  %s1 = inlined_call_operand.vmem [shape: bf16[512,64], index: 1, kind: input, shape index: {}]
  %s2 = inlined_call_operand.vmem [shape: f32[1,64], index: 2, kind: input, shape index: {}]
  %s3 = inlined_call_operand.vmem [shape: bf16[72,64], index: 3, kind: output, shape index: {}]
  %s4 = sld [smem:[#allocation0]]
  $region22: #{policy_forward.5} parent=0
    _
  %s6 = ssub.s32 1, %s4
  %s7 = scalar_select 0, %s6, %s4
  // Predicated region
  $region2: #{policy_forward.5} parent=0 // pred_check
    _
  $region3: #{policy_forward.5} parent=0 // pred_check_branch
    %9 = sbr.rel (0) target = $region5
  $region4: #{policy_forward.5} parent=0 // pred_region
    _
  $region5: #{policy_forward.5} parent=0 // pred_fallthru
    _
  // Predicated region
  $region6: #{policy_forward.5} parent=0 // pred_check
    _
  $region7: #{policy_forward.5} parent=0 // pred_check_branch
    %11 = sbr.rel (0) target = $region9
  $region8: #{policy_forward.5} parent=0 // pred_region
    _
  $region9: #{policy_forward.5} parent=0 // pred_fallthru
    _
  // Predicated region
  $region10: #{policy_forward.5} parent=0 // pred_check
    _
  $region11: #{policy_forward.5} parent=0 // pred_check_branch
    %13 = sbr.rel (0) target = $region13
  $region12: #{policy_forward.5} parent=0 // pred_region
    _
  $region13: #{policy_forward.5} parent=0 // pred_fallthru
    _
  %v14 = vld [vmem:[%s0] sm:$0xff]
  %v15 = vld [vmem:[%s0 + $0x8] sm:$0xff]
  %v16 = vld [vmem:[%s0 + $0x10] sm:$0xff]
  %v17 = vld [vmem:[%s0 + $0x18] sm:$0xff]
  %v18 = vld [vmem:[%s0 + $0x20] sm:$0xff]
  %v19 = vld [vmem:[%s0 + $0x28] sm:$0xff]
  %v20 = vld [vmem:[%s0 + $0x30] sm:$0xff]
  %v21 = vld [vmem:[%s0 + $0x38] sm:$0xff]
  %v22 = vld [vmem:[%s0 + $0x40] sm:$0xff]
  %v23 = vld [vmem:[%s0 + $0x48] sm:$0xff]
  %v24 = vld [vmem:[%s0 + $0x50] sm:$0xff]
  %v25 = vld [vmem:[%s0 + $0x58] sm:$0xff]
  %v26 = vld [vmem:[%s0 + $0x60] sm:$0xff]
  %v27 = vld [vmem:[%s0 + $0x68] sm:$0xff]
  %v28 = vld [vmem:[%s0 + $0x70] sm:$0xff]
  %v29 = vld [vmem:[%s0 + $0x78] sm:$0xff]
  %v30 = vld [vmem:[%s0 + $0x80] sm:$0xff]
  %v31 = vld [vmem:[%s0 + $0x88] sm:$0xff]
  %v32 = vld [vmem:[%s1] sm:$0xf]
  %v33 = vld [vmem:[%s1 + $0x4] sm:$0xf]
  %v34 = vld [vmem:[%s1 + $0x8] sm:$0xf]
  %v35 = vld [vmem:[%s1 + $0xc] sm:$0xf]
  %v36 = vld [vmem:[%s1 + $0x10] sm:$0xf]
  %v37 = vld [vmem:[%s1 + $0x14] sm:$0xf]
  %v38 = vld [vmem:[%s1 + $0x18] sm:$0xf]
  %v39 = vld [vmem:[%s1 + $0x1c] sm:$0xf]
  %v40 = vld [vmem:[%s1 + $0x20] sm:$0xf]
  %v41 = vld [vmem:[%s1 + $0x24] sm:$0xf]
  %v42 = vld [vmem:[%s1 + $0x28] sm:$0xf]
  %v43 = vld [vmem:[%s1 + $0x2c] sm:$0xf]
  %v44 = vld [vmem:[%s1 + $0x30] sm:$0xf]
  %v45 = vld [vmem:[%s1 + $0x34] sm:$0xf]
  %v46 = vld [vmem:[%s1 + $0x38] sm:$0xf]
  %v47 = vld [vmem:[%s1 + $0x3c] sm:$0xf]
  %v48 = vld [vmem:[%s1 + $0x40] sm:$0xf]
  %v49 = vld [vmem:[%s1 + $0x44] sm:$0xf]
  %v50 = vld [vmem:[%s1 + $0x48] sm:$0xf]
  %v51 = vld [vmem:[%s1 + $0x4c] sm:$0xf]
  %v52 = vld [vmem:[%s1 + $0x50] sm:$0xf]
  %v53 = vld [vmem:[%s1 + $0x54] sm:$0xf]
  %v54 = vld [vmem:[%s1 + $0x58] sm:$0xf]
  %v55 = vld [vmem:[%s1 + $0x5c] sm:$0xf]
  %v56 = vld [vmem:[%s1 + $0x60] sm:$0xf]
  %v57 = vld [vmem:[%s1 + $0x64] sm:$0xf]
  %v58 = vld [vmem:[%s1 + $0x68] sm:$0xf]
  %v59 = vld [vmem:[%s1 + $0x6c] sm:$0xf]
  %v60 = vld [vmem:[%s1 + $0x70] sm:$0xf]
  %v61 = vld [vmem:[%s1 + $0x74] sm:$0xf]
  %v62 = vld [vmem:[%s1 + $0x78] sm:$0xf]
  %v63 = vld [vmem:[%s1 + $0x7c] sm:$0xf]
  %v64 = vld [vmem:[%s1 + $0x80] sm:$0xf]
  %v65 = vld [vmem:[%s1 + $0x84] sm:$0xf]
  %v66 = vld [vmem:[%s1 + $0x88] sm:$0xf]
  %v67 = vld [vmem:[%s1 + $0x8c] sm:$0xf]
  %v68 = vld [vmem:[%s1 + $0x90] sm:$0xf]
  %v69 = vld [vmem:[%s1 + $0x94] sm:$0xf]
  %v70 = vld [vmem:[%s1 + $0x98] sm:$0xf]
  %v71 = vld [vmem:[%s1 + $0x9c] sm:$0xf]
  %v72 = vld [vmem:[%s1 + $0xa0] sm:$0xf]
  %v73 = vld [vmem:[%s1 + $0xa4] sm:$0xf]
  %v74 = vld [vmem:[%s1 + $0xa8] sm:$0xf]
  %v75 = vld [vmem:[%s1 + $0xac] sm:$0xf]
  %v76 = vld [vmem:[%s1 + $0xb0] sm:$0xf]
  %v77 = vld [vmem:[%s1 + $0xb4] sm:$0xf]
  %v78 = vld [vmem:[%s1 + $0xb8] sm:$0xf]
  %v79 = vld [vmem:[%s1 + $0xbc] sm:$0xf]
  %v80 = vld [vmem:[%s1 + $0xc0] sm:$0xf]
  %v81 = vld [vmem:[%s1 + $0xc4] sm:$0xf]
  %v82 = vld [vmem:[%s1 + $0xc8] sm:$0xf]
  %v83 = vld [vmem:[%s1 + $0xcc] sm:$0xf]
  %v84 = vld [vmem:[%s1 + $0xd0] sm:$0xf]
  %v85 = vld [vmem:[%s1 + $0xd4] sm:$0xf]
  %v86 = vld [vmem:[%s1 + $0xd8] sm:$0xf]
  %v87 = vld [vmem:[%s1 + $0xdc] sm:$0xf]
  %v88 = vld [vmem:[%s1 + $0xe0] sm:$0xf]
  %v89 = vld [vmem:[%s1 + $0xe4] sm:$0xf]
  %v90 = vld [vmem:[%s1 + $0xe8] sm:$0xf]
  %v91 = vld [vmem:[%s1 + $0xec] sm:$0xf]
  %v92 = vld [vmem:[%s1 + $0xf0] sm:$0xf]
  %v93 = vld [vmem:[%s1 + $0xf4] sm:$0xf]
  %v94 = vld [vmem:[%s1 + $0xf8] sm:$0xf]
  %v95 = vld [vmem:[%s1 + $0xfc] sm:$0xf]
  %v96 = vld [vmem:[%s2] sm:$0x1]
  %v98 = vperm.slane %v96, 0
  %v118 = vunpack.c.l.b16 %v14
  %v119 = vunpack.c.h.b16 %v14
  %v120 = vunpack.c.l.b16 %v15
  %v121 = vunpack.c.h.b16 %v15
  %v122 = vunpack.c.l.b16 %v16
  %v123 = vunpack.c.h.b16 %v16
  %v124 = vunpack.c.l.b16 %v17
  %v125 = vunpack.c.h.b16 %v17
  %v126 = vunpack.c.l.b16 %v18
  %v127 = vunpack.c.h.b16 %v18
  %v128 = vunpack.c.l.b16 %v19
  %v129 = vunpack.c.h.b16 %v19
  %v130 = vunpack.c.l.b16 %v20
  %v131 = vunpack.c.h.b16 %v20
  %v132 = vunpack.c.l.b16 %v21
  %v133 = vunpack.c.h.b16 %v21
  %v134 = vunpack.c.l.b16 %v22
  %v135 = vunpack.c.h.b16 %v22
  %v136 = vunpack.c.l.b16 %v23
  %v137 = vunpack.c.h.b16 %v23
  %v138 = vunpack.c.l.b16 %v24
  %v139 = vunpack.c.h.b16 %v24
  %v140 = vunpack.c.l.b16 %v25
  %v141 = vunpack.c.h.b16 %v25
  %v142 = vunpack.c.l.b16 %v26
  %v143 = vunpack.c.h.b16 %v26
  %v144 = vunpack.c.l.b16 %v27
  %v145 = vunpack.c.h.b16 %v27
  %v146 = vunpack.c.l.b16 %v28
  %v147 = vunpack.c.h.b16 %v28
  %v148 = vunpack.c.l.b16 %v29
  %v149 = vunpack.c.h.b16 %v29
  %v150 = vunpack.c.l.b16 %v30
  %v151 = vunpack.c.h.b16 %v30
  %v152 = vunpack.c.l.b16 %v31
  %v153 = vunpack.c.h.b16 %v31
  %v154 = vpack.c.b16 %v122, %v118
  %v155 = vpack.c.b16 %v123, %v119
  %v156 = vpack.c.b16 %v124, %v120
  %v157 = vpack.c.b16 %v125, %v121
  %v158 = vpack.c.b16 %v130, %v126
  %v159 = vpack.c.b16 %v131, %v127
  %v160 = vpack.c.b16 %v132, %v128
  %v161 = vpack.c.b16 %v133, %v129
  %v162 = vpack.c.b16 %v138, %v134
  %v163 = vpack.c.b16 %v139, %v135
  %v164 = vpack.c.b16 %v140, %v136
  %v165 = vpack.c.b16 %v141, %v137
  %v166 = vpack.c.b16 %v146, %v142
  %v167 = vpack.c.b16 %v147, %v143
  %v168 = vpack.c.b16 %v148, %v144
  %v169 = vpack.c.b16 %v149, %v145
  %v170 = vpack.c.b16 %v150, %v150
  %v171 = vpack.c.b16 %v151, %v151
  %v172 = vpack.c.b16 %v152, %v152
  %v173 = vpack.c.b16 %v153, %v153
  %v258 = vunpack.c.l.b16 %v32
  %v259 = vunpack.c.l.b16 %v33
  %v260 = vunpack.c.l.b16 %v34
  %v261 = vunpack.c.l.b16 %v35
  %v262 = vunpack.c.l.b16 %v36
  %v263 = vunpack.c.l.b16 %v37
  %v264 = vunpack.c.l.b16 %v38
  %v265 = vunpack.c.l.b16 %v39
  %v266 = vunpack.c.l.b16 %v40
  %v267 = vunpack.c.l.b16 %v41
  %v268 = vunpack.c.l.b16 %v42
  %v269 = vunpack.c.l.b16 %v43
  %v270 = vunpack.c.l.b16 %v44
  %v271 = vunpack.c.l.b16 %v45
  %v272 = vunpack.c.l.b16 %v46
  %v273 = vunpack.c.l.b16 %v47
  %v274 = vunpack.c.l.b16 %v48
  %v275 = vunpack.c.l.b16 %v49
  %v276 = vunpack.c.l.b16 %v50
  %v277 = vunpack.c.l.b16 %v51
  %v278 = vunpack.c.l.b16 %v52
  %v279 = vunpack.c.l.b16 %v53
  %v280 = vunpack.c.l.b16 %v54
  %v281 = vunpack.c.l.b16 %v55
  %v282 = vunpack.c.l.b16 %v56
  %v283 = vunpack.c.l.b16 %v57
  %v284 = vunpack.c.l.b16 %v58
  %v285 = vunpack.c.l.b16 %v59
  %v286 = vunpack.c.l.b16 %v60
  %v287 = vunpack.c.l.b16 %v61
  %v288 = vunpack.c.l.b16 %v62
  %v289 = vunpack.c.l.b16 %v63
  %v290 = vunpack.c.l.b16 %v64
  %v291 = vunpack.c.l.b16 %v65
  %v292 = vunpack.c.l.b16 %v66
  %v293 = vunpack.c.l.b16 %v67
  %v294 = vunpack.c.l.b16 %v68
  %v295 = vunpack.c.l.b16 %v69
  %v296 = vunpack.c.l.b16 %v70
  %v297 = vunpack.c.l.b16 %v71
  %v298 = vunpack.c.l.b16 %v72
  %v299 = vunpack.c.l.b16 %v73
  %v300 = vunpack.c.l.b16 %v74
  %v301 = vunpack.c.l.b16 %v75
  %v302 = vunpack.c.l.b16 %v76
  %v303 = vunpack.c.l.b16 %v77
  %v304 = vunpack.c.l.b16 %v78
  %v305 = vunpack.c.l.b16 %v79
  %v306 = vunpack.c.l.b16 %v80
  %v307 = vunpack.c.l.b16 %v81
  %v308 = vunpack.c.l.b16 %v82
  %v309 = vunpack.c.l.b16 %v83
  %v310 = vunpack.c.l.b16 %v84
  %v311 = vunpack.c.l.b16 %v85
  %v312 = vunpack.c.l.b16 %v86
  %v313 = vunpack.c.l.b16 %v87
  %v314 = vunpack.c.l.b16 %v88
  %v315 = vunpack.c.l.b16 %v89
  %v316 = vunpack.c.l.b16 %v90
  %v317 = vunpack.c.l.b16 %v91
  %v318 = vunpack.c.l.b16 %v92
  %v319 = vunpack.c.l.b16 %v93
  %v320 = vunpack.c.l.b16 %v94
  %v321 = vunpack.c.l.b16 %v95
  %v322 = vpack.c.b16 %v259, %v258
  %v323 = vpack.c.b16 %v261, %v260
  %v324 = vpack.c.b16 %v263, %v262
  %v325 = vpack.c.b16 %v265, %v264
  %v326 = vpack.c.b16 %v267, %v266
  %v327 = vpack.c.b16 %v269, %v268
  %v328 = vpack.c.b16 %v271, %v270
  %v329 = vpack.c.b16 %v273, %v272
  %v330 = vpack.c.b16 %v275, %v274
  %v331 = vpack.c.b16 %v277, %v276
  %v332 = vpack.c.b16 %v279, %v278
  %v333 = vpack.c.b16 %v281, %v280
  %v334 = vpack.c.b16 %v283, %v282
  %v335 = vpack.c.b16 %v285, %v284
  %v336 = vpack.c.b16 %v287, %v286
  %v337 = vpack.c.b16 %v289, %v288
  %v338 = vpack.c.b16 %v291, %v290
  %v339 = vpack.c.b16 %v293, %v292
  %v340 = vpack.c.b16 %v295, %v294
  %v341 = vpack.c.b16 %v297, %v296
  %v342 = vpack.c.b16 %v299, %v298
  %v343 = vpack.c.b16 %v301, %v300
  %v344 = vpack.c.b16 %v303, %v302
  %v345 = vpack.c.b16 %v305, %v304
  %v346 = vpack.c.b16 %v307, %v306
  %v347 = vpack.c.b16 %v309, %v308
  %v348 = vpack.c.b16 %v311, %v310
  %v349 = vpack.c.b16 %v313, %v312
  %v350 = vpack.c.b16 %v315, %v314
  %v351 = vpack.c.b16 %v317, %v316
  %v352 = vpack.c.b16 %v319, %v318
  %v353 = vpack.c.b16 %v321, %v320
  %386 = vmatpush.bf16.msra.mxu0 %v329
  %387 = vmatpush.bf16.msra.mxu0 %v328
  %388 = vmatpush.bf16.msra.mxu0 %v327
  %389 = vmatpush.bf16.msra.mxu0 %v326
  %390 = vmatpush.bf16.msra.mxu0 %v325
  %391 = vmatpush.bf16.msra.mxu0 %v324
  %392 = vmatpush.bf16.msra.mxu0 %v323
  %393 = vmatpush.bf16.msra.mxu0 %v322
  %394 = vmatmul.bf16.gmra.mxu0 %v154
  %v395 = vpop.f32.mrf.mxu0
  %v396 = vadd.f32 %v98, %v395
  %v397 = vpop.f32.mrf.mxu0
  %v398 = vadd.f32 %v98, %v397
  %399 = vmatmul.bf16.gmra.mxu0 %v158
  %v400 = vpop.f32.mrf.mxu0
  %v401 = vadd.f32 %v98, %v400
  %v402 = vpop.f32.mrf.mxu0
  %v403 = vadd.f32 %v98, %v402
  %404 = vmatmul.bf16.gmra.mxu0 %v162
  %v405 = vpop.f32.mrf.mxu0
  %v406 = vadd.f32 %v98, %v405
  %v407 = vpop.f32.mrf.mxu0
  %v408 = vadd.f32 %v98, %v407
  %409 = vmatmul.bf16.gmra.mxu0 %v166
  %v410 = vpop.f32.mrf.mxu0
  %v411 = vadd.f32 %v98, %v410
  %v412 = vpop.f32.mrf.mxu0
  %v413 = vadd.f32 %v98, %v412
  %414 = vmatmul.bf16.gmra.mxu0 %v170
  %v415 = vpop.f32.mrf.mxu0
  %v416 = vadd.f32 %v98, %v415
  %v417 = vpop.f32.mrf.mxu0
  %418 = vdwg.mxu0
  %419 = vmatpush.bf16.msra.mxu0 %v337
  %420 = vmatpush.bf16.msra.mxu0 %v336
  %421 = vmatpush.bf16.msra.mxu0 %v335
  %422 = vmatpush.bf16.msra.mxu0 %v334
  %423 = vmatpush.bf16.msra.mxu0 %v333
  %424 = vmatpush.bf16.msra.mxu0 %v332
  %425 = vmatpush.bf16.msra.mxu0 %v331
  %426 = vmatpush.bf16.msra.mxu0 %v330
  %427 = vmatmul.bf16.gmra.mxu0 %v155
  %v428 = vpop.f32.mrf.mxu0
  %v429 = vadd.f32 %v396, %v428
  %v430 = vpop.f32.mrf.mxu0
  %v431 = vadd.f32 %v398, %v430
  %432 = vmatmul.bf16.gmra.mxu0 %v159
  %v433 = vpop.f32.mrf.mxu0
  %v434 = vadd.f32 %v401, %v433
  %v435 = vpop.f32.mrf.mxu0
  %v436 = vadd.f32 %v403, %v435
  %437 = vmatmul.bf16.gmra.mxu0 %v163
  %v438 = vpop.f32.mrf.mxu0
  %v439 = vadd.f32 %v406, %v438
  %v440 = vpop.f32.mrf.mxu0
  %v441 = vadd.f32 %v408, %v440
  %442 = vmatmul.bf16.gmra.mxu0 %v167
  %v443 = vpop.f32.mrf.mxu0
  %v444 = vadd.f32 %v411, %v443
  %v445 = vpop.f32.mrf.mxu0
  %v446 = vadd.f32 %v413, %v445
  %447 = vmatmul.bf16.gmra.mxu0 %v171
  %v448 = vpop.f32.mrf.mxu0
  %v449 = vadd.f32 %v416, %v448
  %v450 = vpop.f32.mrf.mxu0
  %451 = vdwg.mxu0
  %452 = vmatpush.bf16.msra.mxu0 %v345
  %453 = vmatpush.bf16.msra.mxu0 %v344
  %454 = vmatpush.bf16.msra.mxu0 %v343
  %455 = vmatpush.bf16.msra.mxu0 %v342
  %456 = vmatpush.bf16.msra.mxu0 %v341
  %457 = vmatpush.bf16.msra.mxu0 %v340
  %458 = vmatpush.bf16.msra.mxu0 %v339
  %459 = vmatpush.bf16.msra.mxu0 %v338
  %460 = vmatmul.bf16.gmra.mxu0 %v156
  %v461 = vpop.f32.mrf.mxu0
  %v462 = vadd.f32 %v429, %v461
  %v463 = vpop.f32.mrf.mxu0
  %v464 = vadd.f32 %v431, %v463
  %465 = vmatmul.bf16.gmra.mxu0 %v160
  %v466 = vpop.f32.mrf.mxu0
  %v467 = vadd.f32 %v434, %v466
  %v468 = vpop.f32.mrf.mxu0
  %v469 = vadd.f32 %v436, %v468
  %470 = vmatmul.bf16.gmra.mxu0 %v164
  %v471 = vpop.f32.mrf.mxu0
  %v472 = vadd.f32 %v439, %v471
  %v473 = vpop.f32.mrf.mxu0
  %v474 = vadd.f32 %v441, %v473
  %475 = vmatmul.bf16.gmra.mxu0 %v168
  %v476 = vpop.f32.mrf.mxu0
  %v477 = vadd.f32 %v444, %v476
  %v478 = vpop.f32.mrf.mxu0
  %v479 = vadd.f32 %v446, %v478
  %480 = vmatmul.bf16.gmra.mxu0 %v172
  %v481 = vpop.f32.mrf.mxu0
  %v482 = vadd.f32 %v449, %v481
  %v483 = vpop.f32.mrf.mxu0
  %484 = vdwg.mxu0
  %485 = vmatpush.bf16.msra.mxu0 %v353
  %486 = vmatpush.bf16.msra.mxu0 %v352
  %487 = vmatpush.bf16.msra.mxu0 %v351
  %488 = vmatpush.bf16.msra.mxu0 %v350
  %489 = vmatpush.bf16.msra.mxu0 %v349
  %490 = vmatpush.bf16.msra.mxu0 %v348
  %491 = vmatpush.bf16.msra.mxu0 %v347
  %492 = vmatpush.bf16.msra.mxu0 %v346
  %493 = vmatmul.bf16.gmra.mxu0 %v157
  %v494 = vpop.f32.mrf.mxu0
  %v495 = vadd.f32 %v462, %v494
  %v496 = vpop.f32.mrf.mxu0
  %v497 = vadd.f32 %v464, %v496
  %498 = vmatmul.bf16.gmra.mxu0 %v161
  %v499 = vpop.f32.mrf.mxu0
  %v500 = vadd.f32 %v467, %v499
  %v501 = vpop.f32.mrf.mxu0
  %v502 = vadd.f32 %v469, %v501
  %503 = vmatmul.bf16.gmra.mxu0 %v165
  %v504 = vpop.f32.mrf.mxu0
  %v505 = vadd.f32 %v472, %v504
  %v506 = vpop.f32.mrf.mxu0
  %v507 = vadd.f32 %v474, %v506
  %508 = vmatmul.bf16.gmra.mxu0 %v169
  %v509 = vpop.f32.mrf.mxu0
  %v510 = vadd.f32 %v477, %v509
  %v511 = vpop.f32.mrf.mxu0
  %v512 = vadd.f32 %v479, %v511
  %513 = vmatmul.bf16.gmra.mxu0 %v173
  %v514 = vpop.f32.mrf.mxu0
  %v515 = vadd.f32 %v482, %v514
  %v516 = vpop.f32.mrf.mxu0
  %517 = vdwg.mxu0
  %v518 = vmax.f32 %v495, 0.0
  %v519 = vmax.f32 %v497, 0.0
  %v520 = vmax.f32 %v500, 0.0
  %v521 = vmax.f32 %v502, 0.0
  %v522 = vmax.f32 %v505, 0.0
  %v523 = vmax.f32 %v507, 0.0
  %v524 = vmax.f32 %v510, 0.0
  %v525 = vmax.f32 %v512, 0.0
  %v526 = vmax.f32 %v515, 0.0
  %v527 = vpack.c.bf16 %v518, %v518
  %v528 = vpack.c.bf16 %v519, %v519
  %v529 = vpack.c.bf16 %v520, %v520
  %v530 = vpack.c.bf16 %v521, %v521
  %v531 = vpack.c.bf16 %v522, %v522
  %v532 = vpack.c.bf16 %v523, %v523
  %v533 = vpack.c.bf16 %v524, %v524
  %v534 = vpack.c.bf16 %v525, %v525
  %v535 = vpack.c.bf16 %v526, %v526
  %vm536 = vcmask 519168
  %537 = vst.msk [vmem:[%s3] sm:$0xf] %vm536, %v527
  %538 = vst.msk [vmem:[%s3 + $0x4] sm:$0xf] %vm536, %v528
  %539 = vst.msk [vmem:[%s3 + $0x8] sm:$0xf] %vm536, %v529
  %540 = vst.msk [vmem:[%s3 + $0xc] sm:$0xf] %vm536, %v530
  %541 = vst.msk [vmem:[%s3 + $0x10] sm:$0xf] %vm536, %v531
  %542 = vst.msk [vmem:[%s3 + $0x14] sm:$0xf] %vm536, %v532
  %543 = vst.msk [vmem:[%s3 + $0x18] sm:$0xf] %vm536, %v533
  %544 = vst.msk [vmem:[%s3 + $0x1c] sm:$0xf] %vm536, %v534
  %545 = vst.msk [vmem:[%s3 + $0x20] sm:$0xf] %vm536, %v535
  // Predicated region
  $region14: #{policy_forward.5} parent=0 // pred_check
    _
  $region15: #{policy_forward.5} parent=0 // pred_check_branch
    %547 = sbr.rel (0) target = $region17
  $region16: #{policy_forward.5} parent=0 // pred_region
    _
  $region17: #{policy_forward.5} parent=0 // pred_fallthru
    _
  // Predicated region
  $region18: #{policy_forward.5} parent=0 // pred_check
    _
  $region19: #{policy_forward.5} parent=0 // pred_check_branch
    %549 = sbr.rel (0) target = $region21
  $region20: #{policy_forward.5} parent=0 // pred_region
    _
  $region21: #{policy_forward.5} parent=0 // pred_fallthru
    _

// kernel: policy_forward.6
$region0: #{policy_forward.6}
  #allocation0 [shape = 'u32[]', space=smem, size = 0x4, offset = 0x4, fixed_abs, tag = 'smem constant byte address 0x4 - core index']
  #allocation1 [shape = 'u32[72,128]{1,0:T(1,128)}', space=vmem, size = 0x9000, scoped, tag = 'internal scratch']
  %s0 = inlined_call_operand.vmem [shape: bf16[32,576], index: 0, kind: input, shape index: {}]
  %s1 = inlined_call_operand.vmem [shape: bf16[576,64], index: 1, kind: input, shape index: {}]
  %s2 = inlined_call_operand.vmem [shape: f32[1,64], index: 2, kind: input, shape index: {}]
  %s3 = inlined_call_operand.vmem [shape: bf16[32,64], index: 3, kind: output, shape index: {}]
  %s4 = sld [smem:[#allocation0]]
  $region22: #{policy_forward.6} parent=0
    _
  %s6 = ssub.s32 1, %s4
  %s7 = scalar_select 0, %s6, %s4
  // Predicated region
  $region2: #{policy_forward.6} parent=0 // pred_check
    _
  $region3: #{policy_forward.6} parent=0 // pred_check_branch
    %9 = sbr.rel (0) target = $region5
  $region4: #{policy_forward.6} parent=0 // pred_region
    _
  $region5: #{policy_forward.6} parent=0 // pred_fallthru
    _
  // Predicated region
  $region6: #{policy_forward.6} parent=0 // pred_check
    _
  $region7: #{policy_forward.6} parent=0 // pred_check_branch
    %11 = sbr.rel (0) target = $region9
  $region8: #{policy_forward.6} parent=0 // pred_region
    _
  $region9: #{policy_forward.6} parent=0 // pred_fallthru
    _
  // Predicated region
  $region10: #{policy_forward.6} parent=0 // pred_check
    _
  $region11: #{policy_forward.6} parent=0 // pred_check_branch
    %13 = sbr.rel (0) target = $region13
  $region12: #{policy_forward.6} parent=0 // pred_region
    _
  $region13: #{policy_forward.6} parent=0 // pred_fallthru
    _
  %v15 = vld [vmem:[%s0] sm:$0xff]
  %v16 = vld [vmem:[%s0 + $0x8] sm:$0xff]
  %v17 = vld [vmem:[%s0 + $0x10] sm:$0xf]
  %v18 = vld [vmem:[%s0 + $0x14] sm:$0xff]
  %v19 = vld [vmem:[%s0 + $0x1c] sm:$0xff]
  %v20 = vld [vmem:[%s0 + $0x24] sm:$0xf]
  %v21 = vld [vmem:[%s0 + $0x28] sm:$0xff]
  %v22 = vld [vmem:[%s0 + $0x30] sm:$0xff]
  %v23 = vld [vmem:[%s0 + $0x38] sm:$0xf]
  %v24 = vld [vmem:[%s0 + $0x3c] sm:$0xff]
  %v25 = vld [vmem:[%s0 + $0x44] sm:$0xff]
  %v26 = vld [vmem:[%s0 + $0x4c] sm:$0xf]
  %v27 = vld [vmem:[%s1] sm:$0xf]
  %v28 = vld [vmem:[%s1 + $0x4] sm:$0xf]
  %v29 = vld [vmem:[%s1 + $0x8] sm:$0xf]
  %v30 = vld [vmem:[%s1 + $0xc] sm:$0xf]
  %v31 = vld [vmem:[%s1 + $0x10] sm:$0xf]
  %v32 = vld [vmem:[%s1 + $0x14] sm:$0xf]
  %v33 = vld [vmem:[%s1 + $0x18] sm:$0xf]
  %v34 = vld [vmem:[%s1 + $0x1c] sm:$0xf]
  %v35 = vld [vmem:[%s1 + $0x20] sm:$0xf]
  %v36 = vld [vmem:[%s1 + $0x24] sm:$0xf]
  %v37 = vld [vmem:[%s1 + $0x28] sm:$0xf]
  %v38 = vld [vmem:[%s1 + $0x2c] sm:$0xf]
  %v39 = vld [vmem:[%s1 + $0x30] sm:$0xf]
  %v40 = vld [vmem:[%s1 + $0x34] sm:$0xf]
  %v41 = vld [vmem:[%s1 + $0x38] sm:$0xf]
  %v42 = vld [vmem:[%s1 + $0x3c] sm:$0xf]
  %v43 = vld [vmem:[%s1 + $0x40] sm:$0xf]
  %v44 = vld [vmem:[%s1 + $0x44] sm:$0xf]
  %v45 = vld [vmem:[%s1 + $0x48] sm:$0xf]
  %v46 = vld [vmem:[%s1 + $0x4c] sm:$0xf]
  %v47 = vld [vmem:[%s1 + $0x50] sm:$0xf]
  %v48 = vld [vmem:[%s1 + $0x54] sm:$0xf]
  %v49 = vld [vmem:[%s1 + $0x58] sm:$0xf]
  %v50 = vld [vmem:[%s1 + $0x5c] sm:$0xf]
  %v51 = vld [vmem:[%s1 + $0x60] sm:$0xf]
  %v52 = vld [vmem:[%s1 + $0x64] sm:$0xf]
  %v53 = vld [vmem:[%s1 + $0x68] sm:$0xf]
  %v54 = vld [vmem:[%s1 + $0x6c] sm:$0xf]
  %v55 = vld [vmem:[%s1 + $0x70] sm:$0xf]
  %v56 = vld [vmem:[%s1 + $0x74] sm:$0xf]
  %v57 = vld [vmem:[%s1 + $0x78] sm:$0xf]
  %v58 = vld [vmem:[%s1 + $0x7c] sm:$0xf]
  %v59 = vld [vmem:[%s1 + $0x80] sm:$0xf]
  %v60 = vld [vmem:[%s1 + $0x84] sm:$0xf]
  %v61 = vld [vmem:[%s1 + $0x88] sm:$0xf]
  %v62 = vld [vmem:[%s1 + $0x8c] sm:$0xf]
  %v63 = vld [vmem:[%s1 + $0x90] sm:$0xf]
  %v64 = vld [vmem:[%s1 + $0x94] sm:$0xf]
  %v65 = vld [vmem:[%s1 + $0x98] sm:$0xf]
  %v66 = vld [vmem:[%s1 + $0x9c] sm:$0xf]
  %v67 = vld [vmem:[%s1 + $0xa0] sm:$0xf]
  %v68 = vld [vmem:[%s1 + $0xa4] sm:$0xf]
  %v69 = vld [vmem:[%s1 + $0xa8] sm:$0xf]
  %v70 = vld [vmem:[%s1 + $0xac] sm:$0xf]
  %v71 = vld [vmem:[%s1 + $0xb0] sm:$0xf]
  %v72 = vld [vmem:[%s1 + $0xb4] sm:$0xf]
  %v73 = vld [vmem:[%s1 + $0xb8] sm:$0xf]
  %v74 = vld [vmem:[%s1 + $0xbc] sm:$0xf]
  %v75 = vld [vmem:[%s1 + $0xc0] sm:$0xf]
  %v76 = vld [vmem:[%s1 + $0xc4] sm:$0xf]
  %v77 = vld [vmem:[%s1 + $0xc8] sm:$0xf]
  %v78 = vld [vmem:[%s1 + $0xcc] sm:$0xf]
  %v79 = vld [vmem:[%s1 + $0xd0] sm:$0xf]
  %v80 = vld [vmem:[%s1 + $0xd4] sm:$0xf]
  %v81 = vld [vmem:[%s1 + $0xd8] sm:$0xf]
  %v82 = vld [vmem:[%s1 + $0xdc] sm:$0xf]
  %v83 = vld [vmem:[%s1 + $0xe0] sm:$0xf]
  %v84 = vld [vmem:[%s1 + $0xe4] sm:$0xf]
  %v85 = vld [vmem:[%s1 + $0xe8] sm:$0xf]
  %v86 = vld [vmem:[%s1 + $0xec] sm:$0xf]
  %v87 = vld [vmem:[%s1 + $0xf0] sm:$0xf]
  %v88 = vld [vmem:[%s1 + $0xf4] sm:$0xf]
  %v89 = vld [vmem:[%s1 + $0xf8] sm:$0xf]
  %v90 = vld [vmem:[%s1 + $0xfc] sm:$0xf]
  %v91 = vld [vmem:[%s1 + $0x100] sm:$0xf]
  %v92 = vld [vmem:[%s1 + $0x104] sm:$0xf]
  %v93 = vld [vmem:[%s1 + $0x108] sm:$0xf]
  %v94 = vld [vmem:[%s1 + $0x10c] sm:$0xf]
  %v95 = vld [vmem:[%s1 + $0x110] sm:$0xf]
  %v96 = vld [vmem:[%s1 + $0x114] sm:$0xf]
  %v97 = vld [vmem:[%s1 + $0x118] sm:$0xf]
  %v98 = vld [vmem:[%s1 + $0x11c] sm:$0xf]
  %v99 = vld [vmem:[%s2] sm:$0x1]
  %v101 = vperm.slane %v99, 0
  %v115 = vunpack.c.l.b16 %v15
  %v116 = vunpack.c.h.b16 %v15
  %v117 = vunpack.c.l.b16 %v16
  %v118 = vunpack.c.h.b16 %v16
  %v119 = vunpack.c.l.b16 %v17
  %v120 = vunpack.c.l.b16 %v18
  %v121 = vunpack.c.h.b16 %v18
  %v122 = vunpack.c.l.b16 %v19
  %v123 = vunpack.c.h.b16 %v19
  %v124 = vunpack.c.l.b16 %v20
  %v125 = vunpack.c.l.b16 %v21
  %v126 = vunpack.c.h.b16 %v21
  %v127 = vunpack.c.l.b16 %v22
  %v128 = vunpack.c.h.b16 %v22
  %v129 = vunpack.c.l.b16 %v23
  %v130 = vunpack.c.l.b16 %v24
  %v131 = vunpack.c.h.b16 %v24
  %v132 = vunpack.c.l.b16 %v25
  %v133 = vunpack.c.h.b16 %v25
  %v134 = vunpack.c.l.b16 %v26
  %v135 = vpack.c.b16 %v120, %v115
  %v136 = vpack.c.b16 %v121, %v116
  %v137 = vpack.c.b16 %v122, %v117
  %v138 = vpack.c.b16 %v123, %v118
  %v139 = vpack.c.b16 %v124, %v119
  %v140 = vpack.c.b16 %v130, %v125
  %v141 = vpack.c.b16 %v131, %v126
  %v142 = vpack.c.b16 %v132, %v127
  %v143 = vpack.c.b16 %v133, %v128
  %v144 = vpack.c.b16 %v134, %v129
  %v225 = vunpack.c.l.b16 %v27
  %v226 = vunpack.c.l.b16 %v28
  %v227 = vunpack.c.l.b16 %v29
  %v228 = vunpack.c.l.b16 %v30
  %v229 = vunpack.c.l.b16 %v31
  %v230 = vunpack.c.l.b16 %v32
  %v231 = vunpack.c.l.b16 %v33
  %v232 = vunpack.c.l.b16 %v34
  %v233 = vunpack.c.l.b16 %v35
  %v234 = vunpack.c.l.b16 %v36
  %v235 = vunpack.c.l.b16 %v37
  %v236 = vunpack.c.l.b16 %v38
  %v237 = vunpack.c.l.b16 %v39
  %v238 = vunpack.c.l.b16 %v40
  %v239 = vunpack.c.l.b16 %v41
  %v240 = vunpack.c.l.b16 %v42
  %v241 = vunpack.c.l.b16 %v43
  %v242 = vunpack.c.l.b16 %v44
  %v243 = vunpack.c.l.b16 %v45
  %v244 = vunpack.c.l.b16 %v46
  %v245 = vunpack.c.l.b16 %v47
  %v246 = vunpack.c.l.b16 %v48
  %v247 = vunpack.c.l.b16 %v49
  %v248 = vunpack.c.l.b16 %v50
  %v249 = vunpack.c.l.b16 %v51
  %v250 = vunpack.c.l.b16 %v52
  %v251 = vunpack.c.l.b16 %v53
  %v252 = vunpack.c.l.b16 %v54
  %v253 = vunpack.c.l.b16 %v55
  %v254 = vunpack.c.l.b16 %v56
  %v255 = vunpack.c.l.b16 %v57
  %v256 = vunpack.c.l.b16 %v58
  %v257 = vunpack.c.l.b16 %v59
  %v258 = vunpack.c.l.b16 %v60
  %v259 = vunpack.c.l.b16 %v61
  %v260 = vunpack.c.l.b16 %v62
  %v261 = vunpack.c.l.b16 %v63
  %v262 = vunpack.c.l.b16 %v64
  %v263 = vunpack.c.l.b16 %v65
  %v264 = vunpack.c.l.b16 %v66
  %v265 = vunpack.c.l.b16 %v67
  %v266 = vunpack.c.l.b16 %v68
  %v267 = vunpack.c.l.b16 %v69
  %v268 = vunpack.c.l.b16 %v70
  %v269 = vunpack.c.l.b16 %v71
  %v270 = vunpack.c.l.b16 %v72
  %v271 = vunpack.c.l.b16 %v73
  %v272 = vunpack.c.l.b16 %v74
  %v273 = vunpack.c.l.b16 %v75
  %v274 = vunpack.c.l.b16 %v76
  %v275 = vunpack.c.l.b16 %v77
  %v276 = vunpack.c.l.b16 %v78
  %v277 = vunpack.c.l.b16 %v79
  %v278 = vunpack.c.l.b16 %v80
  %v279 = vunpack.c.l.b16 %v81
  %v280 = vunpack.c.l.b16 %v82
  %v281 = vunpack.c.l.b16 %v83
  %v282 = vunpack.c.l.b16 %v84
  %v283 = vunpack.c.l.b16 %v85
  %v284 = vunpack.c.l.b16 %v86
  %v285 = vunpack.c.l.b16 %v87
  %v286 = vunpack.c.l.b16 %v88
  %v287 = vunpack.c.l.b16 %v89
  %v288 = vunpack.c.l.b16 %v90
  %v289 = vunpack.c.l.b16 %v91
  %v290 = vunpack.c.l.b16 %v92
  %v291 = vunpack.c.l.b16 %v93
  %v292 = vunpack.c.l.b16 %v94
  %v293 = vunpack.c.l.b16 %v95
  %v294 = vunpack.c.l.b16 %v96
  %v295 = vunpack.c.l.b16 %v97
  %v296 = vunpack.c.l.b16 %v98
  %v297 = vpack.c.b16 %v226, %v225
  %v298 = vpack.c.b16 %v228, %v227
  %v299 = vpack.c.b16 %v230, %v229
  %v300 = vpack.c.b16 %v232, %v231
  %v301 = vpack.c.b16 %v234, %v233
  %v302 = vpack.c.b16 %v236, %v235
  %v303 = vpack.c.b16 %v238, %v237
  %v304 = vpack.c.b16 %v240, %v239
  %v305 = vpack.c.b16 %v242, %v241
  %v306 = vpack.c.b16 %v244, %v243
  %v307 = vpack.c.b16 %v246, %v245
  %v308 = vpack.c.b16 %v248, %v247
  %v309 = vpack.c.b16 %v250, %v249
  %v310 = vpack.c.b16 %v252, %v251
  %v311 = vpack.c.b16 %v254, %v253
  %v312 = vpack.c.b16 %v256, %v255
  %v313 = vpack.c.b16 %v258, %v257
  %v314 = vpack.c.b16 %v260, %v259
  %v315 = vpack.c.b16 %v262, %v261
  %v316 = vpack.c.b16 %v264, %v263
  %v317 = vpack.c.b16 %v266, %v265
  %v318 = vpack.c.b16 %v268, %v267
  %v319 = vpack.c.b16 %v270, %v269
  %v320 = vpack.c.b16 %v272, %v271
  %v321 = vpack.c.b16 %v274, %v273
  %v322 = vpack.c.b16 %v276, %v275
  %v323 = vpack.c.b16 %v278, %v277
  %v324 = vpack.c.b16 %v280, %v279
  %v325 = vpack.c.b16 %v282, %v281
  %v326 = vpack.c.b16 %v284, %v283
  %v327 = vpack.c.b16 %v286, %v285
  %v328 = vpack.c.b16 %v288, %v287
  %v329 = vpack.c.b16 %v290, %v289
  %v330 = vpack.c.b16 %v292, %v291
  %v331 = vpack.c.b16 %v294, %v293
  %v332 = vpack.c.b16 %v296, %v295
  %vm369 = vcmask 523264
  %v371 = vsel %vm369, %v139, 0
  %v374 = vsel %vm369, %v144, 0
  %376 = vmatpush.bf16.msra.mxu0 %v304
  %377 = vmatpush.bf16.msra.mxu0 %v303
  %378 = vmatpush.bf16.msra.mxu0 %v302
  %379 = vmatpush.bf16.msra.mxu0 %v301
  %380 = vmatpush.bf16.msra.mxu0 %v300
  %381 = vmatpush.bf16.msra.mxu0 %v299
  %382 = vmatpush.bf16.msra.mxu0 %v298
  %383 = vmatpush.bf16.msra.mxu0 %v297
  %384 = vmatmul.bf16.gmra.mxu0 %v135
  %v385 = vpop.f32.mrf.mxu0
  %v386 = vadd.f32 %v101, %v385
  %v387 = vpop.f32.mrf.mxu0
  %v388 = vadd.f32 %v101, %v387
  %389 = vmatmul.bf16.gmra.mxu0 %v140
  %v390 = vpop.f32.mrf.mxu0
  %v391 = vadd.f32 %v101, %v390
  %v392 = vpop.f32.mrf.mxu0
  %v393 = vadd.f32 %v101, %v392
  %394 = vdwg.mxu0
  %395 = vmatpush.bf16.msra.mxu0 %v312
  %396 = vmatpush.bf16.msra.mxu0 %v311
  %397 = vmatpush.bf16.msra.mxu0 %v310
  %398 = vmatpush.bf16.msra.mxu0 %v309
  %399 = vmatpush.bf16.msra.mxu0 %v308
  %400 = vmatpush.bf16.msra.mxu0 %v307
  %401 = vmatpush.bf16.msra.mxu0 %v306
  %402 = vmatpush.bf16.msra.mxu0 %v305
  %403 = vmatmul.bf16.gmra.mxu0 %v136
  %v404 = vpop.f32.mrf.mxu0
  %v405 = vadd.f32 %v386, %v404
  %v406 = vpop.f32.mrf.mxu0
  %v407 = vadd.f32 %v388, %v406
  %408 = vmatmul.bf16.gmra.mxu0 %v141
  %v409 = vpop.f32.mrf.mxu0
  %v410 = vadd.f32 %v391, %v409
  %v411 = vpop.f32.mrf.mxu0
  %v412 = vadd.f32 %v393, %v411
  %413 = vdwg.mxu0
  %414 = vmatpush.bf16.msra.mxu0 %v320
  %415 = vmatpush.bf16.msra.mxu0 %v319
  %416 = vmatpush.bf16.msra.mxu0 %v318
  %417 = vmatpush.bf16.msra.mxu0 %v317
  %418 = vmatpush.bf16.msra.mxu0 %v316
  %419 = vmatpush.bf16.msra.mxu0 %v315
  %420 = vmatpush.bf16.msra.mxu0 %v314
  %421 = vmatpush.bf16.msra.mxu0 %v313
  %422 = vmatmul.bf16.gmra.mxu0 %v137
  %v423 = vpop.f32.mrf.mxu0
  %v424 = vadd.f32 %v405, %v423
  %v425 = vpop.f32.mrf.mxu0
  %v426 = vadd.f32 %v407, %v425
  %427 = vmatmul.bf16.gmra.mxu0 %v142
  %v428 = vpop.f32.mrf.mxu0
  %v429 = vadd.f32 %v410, %v428
  %v430 = vpop.f32.mrf.mxu0
  %v431 = vadd.f32 %v412, %v430
  %432 = vdwg.mxu0
  %433 = vmatpush.bf16.msra.mxu0 %v328
  %434 = vmatpush.bf16.msra.mxu0 %v327
  %435 = vmatpush.bf16.msra.mxu0 %v326
  %436 = vmatpush.bf16.msra.mxu0 %v325
  %437 = vmatpush.bf16.msra.mxu0 %v324
  %438 = vmatpush.bf16.msra.mxu0 %v323
  %439 = vmatpush.bf16.msra.mxu0 %v322
  %440 = vmatpush.bf16.msra.mxu0 %v321
  %441 = vmatmul.bf16.gmra.mxu0 %v138
  %v442 = vpop.f32.mrf.mxu0
  %v443 = vadd.f32 %v424, %v442
  %v444 = vpop.f32.mrf.mxu0
  %v445 = vadd.f32 %v426, %v444
  %446 = vmatmul.bf16.gmra.mxu0 %v143
  %v447 = vpop.f32.mrf.mxu0
  %v448 = vadd.f32 %v429, %v447
  %v449 = vpop.f32.mrf.mxu0
  %v450 = vadd.f32 %v431, %v449
  %451 = vdwg.mxu0
  %452 = vmatpush.bf16.msra.mxu0 0
  %453 = vmatpush.bf16.msra.mxu0 0
  %454 = vmatpush.bf16.msra.mxu0 0
  %455 = vmatpush.bf16.msra.mxu0 0
  %456 = vmatpush.bf16.msra.mxu0 %v332
  %457 = vmatpush.bf16.msra.mxu0 %v331
  %458 = vmatpush.bf16.msra.mxu0 %v330
  %459 = vmatpush.bf16.msra.mxu0 %v329
  %460 = vmatmul.bf16.gmra.mxu0 %v371
  %v461 = vpop.f32.mrf.mxu0
  %v462 = vadd.f32 %v443, %v461
  %v463 = vpop.f32.mrf.mxu0
  %v464 = vadd.f32 %v445, %v463
  %465 = vmatmul.bf16.gmra.mxu0 %v374
  %v466 = vpop.f32.mrf.mxu0
  %v467 = vadd.f32 %v448, %v466
  %v468 = vpop.f32.mrf.mxu0
  %v469 = vadd.f32 %v450, %v468
  %470 = vdwg.mxu0
  %v471 = vmax.f32 %v462, 0.0
  %v472 = vmax.f32 %v464, 0.0
  %v473 = vmax.f32 %v467, 0.0
  %v474 = vmax.f32 %v469, 0.0
  %v475 = vpack.c.bf16 %v471, %v471
  %v476 = vpack.c.bf16 %v472, %v472
  %v477 = vpack.c.bf16 %v473, %v473
  %v478 = vpack.c.bf16 %v474, %v474
  %vm479 = vcmask 519168
  %480 = vst.msk [vmem:[%s3] sm:$0xf] %vm479, %v475
  %481 = vst.msk [vmem:[%s3 + $0x4] sm:$0xf] %vm479, %v476
  %482 = vst.msk [vmem:[%s3 + $0x8] sm:$0xf] %vm479, %v477
  %483 = vst.msk [vmem:[%s3 + $0xc] sm:$0xf] %vm479, %v478
  // Predicated region
  $region14: #{policy_forward.6} parent=0 // pred_check
    _
  $region15: #{policy_forward.6} parent=0 // pred_check_branch
    %485 = sbr.rel (0) target = $region17
  $region16: #{policy_forward.6} parent=0 // pred_region
    _
  $region17: #{policy_forward.6} parent=0 // pred_fallthru
    _
  // Predicated region
  $region18: #{policy_forward.6} parent=0 // pred_check
    _
  $region19: #{policy_forward.6} parent=0 // pred_check_branch
    %487 = sbr.rel (0) target = $region21
  $region20: #{policy_forward.6} parent=0 // pred_region
    _
  $region21: #{policy_forward.6} parent=0 // pred_fallthru
    _

// kernel: policy_forward.7
$region0: #{policy_forward.7}
  #allocation0 [shape = 'u32[]', space=smem, size = 0x4, offset = 0x4, fixed_abs, tag = 'smem constant byte address 0x4 - core index']
  #allocation1 [shape = 'u32[72,128]{1,0:T(1,128)}', space=vmem, size = 0x9000, scoped, tag = 'internal scratch']
  %s0 = inlined_call_operand.vmem [shape: bf16[2,1024], index: 0, kind: input, shape index: {}]
  %s1 = inlined_call_operand.vmem [shape: f32[2,8], index: 1, kind: input, shape index: {}]
  %s2 = inlined_call_operand.vmem [shape: bf16[8,64], index: 2, kind: input, shape index: {}]
  %s3 = inlined_call_operand.vmem [shape: f32[1,64], index: 3, kind: input, shape index: {}]
  %s4 = inlined_call_operand.vmem [shape: bf16[1024,512], index: 4, kind: input, shape index: {}]
  %s5 = inlined_call_operand.vmem [shape: bf16[64,512], index: 5, kind: input, shape index: {}]
  %s6 = inlined_call_operand.vmem [shape: f32[1,512], index: 6, kind: input, shape index: {}]
  %s7 = inlined_call_operand.vmem [shape: bf16[512,128], index: 7, kind: input, shape index: {}]
  %s8 = inlined_call_operand.vmem [shape: f32[1,128], index: 8, kind: input, shape index: {}]
  %s9 = inlined_call_operand.vmem [shape: f32[2,128], index: 9, kind: output, shape index: {}]
  %s10 = sld [smem:[#allocation0]]
  $region46: #{policy_forward.7} parent=0
    _
  %s12 = ssub.s32 1, %s10
  %s13 = scalar_select 0, %s12, %s10
  // Predicated region
  $region2: #{policy_forward.7} parent=0 // pred_check
    _
  $region3: #{policy_forward.7} parent=0 // pred_check_branch
    %15 = sbr.rel (0) target = $region5
  $region4: #{policy_forward.7} parent=0 // pred_region
    _
  $region5: #{policy_forward.7} parent=0 // pred_fallthru
    _
  // Predicated region
  $region6: #{policy_forward.7} parent=0 // pred_check
    _
  $region7: #{policy_forward.7} parent=0 // pred_check_branch
    %17 = sbr.rel (0) target = $region9
  $region8: #{policy_forward.7} parent=0 // pred_region
    _
  $region9: #{policy_forward.7} parent=0 // pred_fallthru
    _
  // Predicated region
  $region10: #{policy_forward.7} parent=0 // pred_check
    _
  $region11: #{policy_forward.7} parent=0 // pred_check_branch
    %19 = sbr.rel (0) target = $region13
  $region12: #{policy_forward.7} parent=0 // pred_region
    _
  $region13: #{policy_forward.7} parent=0 // pred_fallthru
    _
  // Predicated region
  $region14: #{policy_forward.7} parent=0 // pred_check
    _
  $region15: #{policy_forward.7} parent=0 // pred_check_branch
    %21 = sbr.rel (0) target = $region17
  $region16: #{policy_forward.7} parent=0 // pred_region
    _
  $region17: #{policy_forward.7} parent=0 // pred_fallthru
    _
  // Predicated region
  $region18: #{policy_forward.7} parent=0 // pred_check
    _
  $region19: #{policy_forward.7} parent=0 // pred_check_branch
    %23 = sbr.rel (0) target = $region21
  $region20: #{policy_forward.7} parent=0 // pred_region
    _
  $region21: #{policy_forward.7} parent=0 // pred_fallthru
    _
  // Predicated region
  $region22: #{policy_forward.7} parent=0 // pred_check
    _
  $region23: #{policy_forward.7} parent=0 // pred_check_branch
    %25 = sbr.rel (0) target = $region25
  $region24: #{policy_forward.7} parent=0 // pred_region
    _
  $region25: #{policy_forward.7} parent=0 // pred_fallthru
    _
  // Predicated region
  $region26: #{policy_forward.7} parent=0 // pred_check
    _
  $region27: #{policy_forward.7} parent=0 // pred_check_branch
    %27 = sbr.rel (0) target = $region29
  $region28: #{policy_forward.7} parent=0 // pred_region
    _
  $region29: #{policy_forward.7} parent=0 // pred_fallthru
    _
  // Predicated region
  $region30: #{policy_forward.7} parent=0 // pred_check
    _
  $region31: #{policy_forward.7} parent=0 // pred_check_branch
    %29 = sbr.rel (0) target = $region33
  $region32: #{policy_forward.7} parent=0 // pred_region
    _
  $region33: #{policy_forward.7} parent=0 // pred_fallthru
    _
  // Predicated region
  $region34: #{policy_forward.7} parent=0 // pred_check
    _
  $region35: #{policy_forward.7} parent=0 // pred_check_branch
    %31 = sbr.rel (0) target = $region37
  $region36: #{policy_forward.7} parent=0 // pred_region
    _
  $region37: #{policy_forward.7} parent=0 // pred_fallthru
    _
  %v33 = vld [vmem:[%s1] sm:$0x3]
  %v34 = vpack.c.bf16 %v33, %v33
  %v35 = vld [vmem:[%s2] sm:$0xf]
  %v36 = vld [vmem:[%s3] sm:$0x1]
  %v38 = vperm.slane %v36, 0
  %vm40 = vcmask 64512
  %v42 = vsel %vm40, %v34, 0
  %vm44 = vcmask 1043456
  %v46 = vsel %vm44, %v35, 0
  %48 = vmatpush.bf16.msra.mxu0 0
  %49 = vmatpush.bf16.msra.mxu0 0
  %50 = vmatpush.bf16.msra.mxu0 0
  %51 = vmatpush.bf16.msra.mxu0 0
  %52 = vmatpush.bf16.msra.mxu0 0
  %53 = vmatpush.bf16.msra.mxu0 0
  %54 = vmatpush.bf16.msra.mxu0 0
  %55 = vmatpush.bf16.msra.mxu0 %v46
  %56 = vmatmul.bf16.gmra.mxu0 %v42
  %v57 = vpop.f32.mrf.mxu0
  %v58 = vadd.f32 %v38, %v57
  %v59 = vpop.f32.mrf.mxu0
  %60 = vdwg.mxu0
  %v61 = vmax.f32 %v58, 0.0
  %v62 = vld [vmem:[%s0] sm:$0xff]
  %v63 = vld [vmem:[%s4] sm:$0xff]
  %v64 = vld [vmem:[%s4 + $0x8] sm:$0xff]
  %v65 = vld [vmem:[%s4 + $0x10] sm:$0xff]
  %v66 = vld [vmem:[%s4 + $0x18] sm:$0xff]
  %v67 = vld [vmem:[%s4 + $0x20] sm:$0xff]
  %v68 = vld [vmem:[%s4 + $0x28] sm:$0xff]
  %v69 = vld [vmem:[%s4 + $0x30] sm:$0xff]
  %v70 = vld [vmem:[%s4 + $0x38] sm:$0xff]
  %v71 = vld [vmem:[%s4 + $0x40] sm:$0xff]
  %v72 = vld [vmem:[%s4 + $0x48] sm:$0xff]
  %v73 = vld [vmem:[%s4 + $0x50] sm:$0xff]
  %v74 = vld [vmem:[%s4 + $0x58] sm:$0xff]
  %v75 = vld [vmem:[%s4 + $0x60] sm:$0xff]
  %v76 = vld [vmem:[%s4 + $0x68] sm:$0xff]
  %v77 = vld [vmem:[%s4 + $0x70] sm:$0xff]
  %v78 = vld [vmem:[%s4 + $0x78] sm:$0xff]
  %v79 = vld [vmem:[%s4 + $0x80] sm:$0xff]
  %v80 = vld [vmem:[%s4 + $0x88] sm:$0xff]
  %v81 = vld [vmem:[%s4 + $0x90] sm:$0xff]
  %v82 = vld [vmem:[%s4 + $0x98] sm:$0xff]
  %v83 = vld [vmem:[%s4 + $0xa0] sm:$0xff]
  %v84 = vld [vmem:[%s4 + $0xa8] sm:$0xff]
  %v85 = vld [vmem:[%s4 + $0xb0] sm:$0xff]
  %v86 = vld [vmem:[%s4 + $0xb8] sm:$0xff]
  %v87 = vld [vmem:[%s4 + $0xc0] sm:$0xff]
  %v88 = vld [vmem:[%s4 + $0xc8] sm:$0xff]
  %v89 = vld [vmem:[%s4 + $0xd0] sm:$0xff]
  %v90 = vld [vmem:[%s4 + $0xd8] sm:$0xff]
  %v91 = vld [vmem:[%s4 + $0xe0] sm:$0xff]
  %v92 = vld [vmem:[%s4 + $0xe8] sm:$0xff]
  %v93 = vld [vmem:[%s4 + $0xf0] sm:$0xff]
  %v94 = vld [vmem:[%s4 + $0xf8] sm:$0xff]
  %v95 = vld [vmem:[%s4 + $0x100] sm:$0xff]
  %v96 = vld [vmem:[%s4 + $0x108] sm:$0xff]
  %v97 = vld [vmem:[%s4 + $0x110] sm:$0xff]
  %v98 = vld [vmem:[%s4 + $0x118] sm:$0xff]
  %v99 = vld [vmem:[%s4 + $0x120] sm:$0xff]
  %v100 = vld [vmem:[%s4 + $0x128] sm:$0xff]
  %v101 = vld [vmem:[%s4 + $0x130] sm:$0xff]
  %v102 = vld [vmem:[%s4 + $0x138] sm:$0xff]
  %v103 = vld [vmem:[%s4 + $0x140] sm:$0xff]
  %v104 = vld [vmem:[%s4 + $0x148] sm:$0xff]
  %v105 = vld [vmem:[%s4 + $0x150] sm:$0xff]
  %v106 = vld [vmem:[%s4 + $0x158] sm:$0xff]
  %v107 = vld [vmem:[%s4 + $0x160] sm:$0xff]
  %v108 = vld [vmem:[%s4 + $0x168] sm:$0xff]
  %v109 = vld [vmem:[%s4 + $0x170] sm:$0xff]
  %v110 = vld [vmem:[%s4 + $0x178] sm:$0xff]
  %v111 = vld [vmem:[%s4 + $0x180] sm:$0xff]
  %v112 = vld [vmem:[%s4 + $0x188] sm:$0xff]
  %v113 = vld [vmem:[%s4 + $0x190] sm:$0xff]
  %v114 = vld [vmem:[%s4 + $0x198] sm:$0xff]
  %v115 = vld [vmem:[%s4 + $0x1a0] sm:$0xff]
  %v116 = vld [vmem:[%s4 + $0x1a8] sm:$0xff]
  %v117 = vld [vmem:[%s4 + $0x1b0] sm:$0xff]
  %v118 = vld [vmem:[%s4 + $0x1b8] sm:$0xff]
  %v119 = vld [vmem:[%s4 + $0x1c0] sm:$0xff]
  %v120 = vld [vmem:[%s4 + $0x1c8] sm:$0xff]
  %v121 = vld [vmem:[%s4 + $0x1d0] sm:$0xff]
  %v122 = vld [vmem:[%s4 + $0x1d8] sm:$0xff]
  %v123 = vld [vmem:[%s4 + $0x1e0] sm:$0xff]
  %v124 = vld [vmem:[%s4 + $0x1e8] sm:$0xff]
  %v125 = vld [vmem:[%s4 + $0x1f0] sm:$0xff]
  %v126 = vld [vmem:[%s4 + $0x1f8] sm:$0xff]
  %v127 = vld [vmem:[%s4 + $0x200] sm:$0xff]
  %v128 = vld [vmem:[%s4 + $0x208] sm:$0xff]
  %v129 = vld [vmem:[%s4 + $0x210] sm:$0xff]
  %v130 = vld [vmem:[%s4 + $0x218] sm:$0xff]
  %v131 = vld [vmem:[%s4 + $0x220] sm:$0xff]
  %v132 = vld [vmem:[%s4 + $0x228] sm:$0xff]
  %v133 = vld [vmem:[%s4 + $0x230] sm:$0xff]
  %v134 = vld [vmem:[%s4 + $0x238] sm:$0xff]
  %v135 = vld [vmem:[%s4 + $0x240] sm:$0xff]
  %v136 = vld [vmem:[%s4 + $0x248] sm:$0xff]
  %v137 = vld [vmem:[%s4 + $0x250] sm:$0xff]
  %v138 = vld [vmem:[%s4 + $0x258] sm:$0xff]
  %v139 = vld [vmem:[%s4 + $0x260] sm:$0xff]
  %v140 = vld [vmem:[%s4 + $0x268] sm:$0xff]
  %v141 = vld [vmem:[%s4 + $0x270] sm:$0xff]
  %v142 = vld [vmem:[%s4 + $0x278] sm:$0xff]
  %v143 = vld [vmem:[%s4 + $0x280] sm:$0xff]
  %v144 = vld [vmem:[%s4 + $0x288] sm:$0xff]
  %v145 = vld [vmem:[%s4 + $0x290] sm:$0xff]
  %v146 = vld [vmem:[%s4 + $0x298] sm:$0xff]
  %v147 = vld [vmem:[%s4 + $0x2a0] sm:$0xff]
  %v148 = vld [vmem:[%s4 + $0x2a8] sm:$0xff]
  %v149 = vld [vmem:[%s4 + $0x2b0] sm:$0xff]
  %v150 = vld [vmem:[%s4 + $0x2b8] sm:$0xff]
  %v151 = vld [vmem:[%s4 + $0x2c0] sm:$0xff]
  %v152 = vld [vmem:[%s4 + $0x2c8] sm:$0xff]
  %v153 = vld [vmem:[%s4 + $0x2d0] sm:$0xff]
  %v154 = vld [vmem:[%s4 + $0x2d8] sm:$0xff]
  %v155 = vld [vmem:[%s4 + $0x2e0] sm:$0xff]
  %v156 = vld [vmem:[%s4 + $0x2e8] sm:$0xff]
  %v157 = vld [vmem:[%s4 + $0x2f0] sm:$0xff]
  %v158 = vld [vmem:[%s4 + $0x2f8] sm:$0xff]
  %v159 = vld [vmem:[%s4 + $0x300] sm:$0xff]
  %v160 = vld [vmem:[%s4 + $0x308] sm:$0xff]
  %v161 = vld [vmem:[%s4 + $0x310] sm:$0xff]
  %v162 = vld [vmem:[%s4 + $0x318] sm:$0xff]
  %v163 = vld [vmem:[%s4 + $0x320] sm:$0xff]
  %v164 = vld [vmem:[%s4 + $0x328] sm:$0xff]
  %v165 = vld [vmem:[%s4 + $0x330] sm:$0xff]
  %v166 = vld [vmem:[%s4 + $0x338] sm:$0xff]
  %v167 = vld [vmem:[%s4 + $0x340] sm:$0xff]
  %v168 = vld [vmem:[%s4 + $0x348] sm:$0xff]
  %v169 = vld [vmem:[%s4 + $0x350] sm:$0xff]
  %v170 = vld [vmem:[%s4 + $0x358] sm:$0xff]
  %v171 = vld [vmem:[%s4 + $0x360] sm:$0xff]
  %v172 = vld [vmem:[%s4 + $0x368] sm:$0xff]
  %v173 = vld [vmem:[%s4 + $0x370] sm:$0xff]
  %v174 = vld [vmem:[%s4 + $0x378] sm:$0xff]
  %v175 = vld [vmem:[%s4 + $0x380] sm:$0xff]
  %v176 = vld [vmem:[%s4 + $0x388] sm:$0xff]
  %v177 = vld [vmem:[%s4 + $0x390] sm:$0xff]
  %v178 = vld [vmem:[%s4 + $0x398] sm:$0xff]
  %v179 = vld [vmem:[%s4 + $0x3a0] sm:$0xff]
  %v180 = vld [vmem:[%s4 + $0x3a8] sm:$0xff]
  %v181 = vld [vmem:[%s4 + $0x3b0] sm:$0xff]
  %v182 = vld [vmem:[%s4 + $0x3b8] sm:$0xff]
  %v183 = vld [vmem:[%s4 + $0x3c0] sm:$0xff]
  %v184 = vld [vmem:[%s4 + $0x3c8] sm:$0xff]
  %v185 = vld [vmem:[%s4 + $0x3d0] sm:$0xff]
  %v186 = vld [vmem:[%s4 + $0x3d8] sm:$0xff]
  %v187 = vld [vmem:[%s4 + $0x3e0] sm:$0xff]
  %v188 = vld [vmem:[%s4 + $0x3e8] sm:$0xff]
  %v189 = vld [vmem:[%s4 + $0x3f0] sm:$0xff]
  %v190 = vld [vmem:[%s4 + $0x3f8] sm:$0xff]
  %v191 = vld [vmem:[%s4 + $0x400] sm:$0xff]
  %v192 = vld [vmem:[%s4 + $0x408] sm:$0xff]
  %v193 = vld [vmem:[%s4 + $0x410] sm:$0xff]
  %v194 = vld [vmem:[%s4 + $0x418] sm:$0xff]
  %v195 = vld [vmem:[%s4 + $0x420] sm:$0xff]
  %v196 = vld [vmem:[%s4 + $0x428] sm:$0xff]
  %v197 = vld [vmem:[%s4 + $0x430] sm:$0xff]
  %v198 = vld [vmem:[%s4 + $0x438] sm:$0xff]
  %v199 = vld [vmem:[%s4 + $0x440] sm:$0xff]
  %v200 = vld [vmem:[%s4 + $0x448] sm:$0xff]
  %v201 = vld [vmem:[%s4 + $0x450] sm:$0xff]
  %v202 = vld [vmem:[%s4 + $0x458] sm:$0xff]
  %v203 = vld [vmem:[%s4 + $0x460] sm:$0xff]
  %v204 = vld [vmem:[%s4 + $0x468] sm:$0xff]
  %v205 = vld [vmem:[%s4 + $0x470] sm:$0xff]
  %v206 = vld [vmem:[%s4 + $0x478] sm:$0xff]
  %v207 = vld [vmem:[%s4 + $0x480] sm:$0xff]
  %v208 = vld [vmem:[%s4 + $0x488] sm:$0xff]
  %v209 = vld [vmem:[%s4 + $0x490] sm:$0xff]
  %v210 = vld [vmem:[%s4 + $0x498] sm:$0xff]
  %v211 = vld [vmem:[%s4 + $0x4a0] sm:$0xff]
  %v212 = vld [vmem:[%s4 + $0x4a8] sm:$0xff]
  %v213 = vld [vmem:[%s4 + $0x4b0] sm:$0xff]
  %v214 = vld [vmem:[%s4 + $0x4b8] sm:$0xff]
  %v215 = vld [vmem:[%s4 + $0x4c0] sm:$0xff]
  %v216 = vld [vmem:[%s4 + $0x4c8] sm:$0xff]
  %v217 = vld [vmem:[%s4 + $0x4d0] sm:$0xff]
  %v218 = vld [vmem:[%s4 + $0x4d8] sm:$0xff]
  %v219 = vld [vmem:[%s4 + $0x4e0] sm:$0xff]
  %v220 = vld [vmem:[%s4 + $0x4e8] sm:$0xff]
  %v221 = vld [vmem:[%s4 + $0x4f0] sm:$0xff]
  %v222 = vld [vmem:[%s4 + $0x4f8] sm:$0xff]
  %v223 = vld [vmem:[%s4 + $0x500] sm:$0xff]
  %v224 = vld [vmem:[%s4 + $0x508] sm:$0xff]
  %v225 = vld [vmem:[%s4 + $0x510] sm:$0xff]
  %v226 = vld [vmem:[%s4 + $0x518] sm:$0xff]
  %v227 = vld [vmem:[%s4 + $0x520] sm:$0xff]
  %v228 = vld [vmem:[%s4 + $0x528] sm:$0xff]
  %v229 = vld [vmem:[%s4 + $0x530] sm:$0xff]
  %v230 = vld [vmem:[%s4 + $0x538] sm:$0xff]
  %v231 = vld [vmem:[%s4 + $0x540] sm:$0xff]
  %v232 = vld [vmem:[%s4 + $0x548] sm:$0xff]
  %v233 = vld [vmem:[%s4 + $0x550] sm:$0xff]
  %v234 = vld [vmem:[%s4 + $0x558] sm:$0xff]
  %v235 = vld [vmem:[%s4 + $0x560] sm:$0xff]
  %v236 = vld [vmem:[%s4 + $0x568] sm:$0xff]
  %v237 = vld [vmem:[%s4 + $0x570] sm:$0xff]
  %v238 = vld [vmem:[%s4 + $0x578] sm:$0xff]
  %v239 = vld [vmem:[%s4 + $0x580] sm:$0xff]
  %v240 = vld [vmem:[%s4 + $0x588] sm:$0xff]
  %v241 = vld [vmem:[%s4 + $0x590] sm:$0xff]
  %v242 = vld [vmem:[%s4 + $0x598] sm:$0xff]
  %v243 = vld [vmem:[%s4 + $0x5a0] sm:$0xff]
  %v244 = vld [vmem:[%s4 + $0x5a8] sm:$0xff]
  %v245 = vld [vmem:[%s4 + $0x5b0] sm:$0xff]
  %v246 = vld [vmem:[%s4 + $0x5b8] sm:$0xff]
  %v247 = vld [vmem:[%s4 + $0x5c0] sm:$0xff]
  %v248 = vld [vmem:[%s4 + $0x5c8] sm:$0xff]
  %v249 = vld [vmem:[%s4 + $0x5d0] sm:$0xff]
  %v250 = vld [vmem:[%s4 + $0x5d8] sm:$0xff]
  %v251 = vld [vmem:[%s4 + $0x5e0] sm:$0xff]
  %v252 = vld [vmem:[%s4 + $0x5e8] sm:$0xff]
  %v253 = vld [vmem:[%s4 + $0x5f0] sm:$0xff]
  %v254 = vld [vmem:[%s4 + $0x5f8] sm:$0xff]
  %v255 = vld [vmem:[%s4 + $0x600] sm:$0xff]
  %v256 = vld [vmem:[%s4 + $0x608] sm:$0xff]
  %v257 = vld [vmem:[%s4 + $0x610] sm:$0xff]
  %v258 = vld [vmem:[%s4 + $0x618] sm:$0xff]
  %v259 = vld [vmem:[%s4 + $0x620] sm:$0xff]
  %v260 = vld [vmem:[%s4 + $0x628] sm:$0xff]
  %v261 = vld [vmem:[%s4 + $0x630] sm:$0xff]
  %v262 = vld [vmem:[%s4 + $0x638] sm:$0xff]
  %v263 = vld [vmem:[%s4 + $0x640] sm:$0xff]
  %v264 = vld [vmem:[%s4 + $0x648] sm:$0xff]
  %v265 = vld [vmem:[%s4 + $0x650] sm:$0xff]
  %v266 = vld [vmem:[%s4 + $0x658] sm:$0xff]
  %v267 = vld [vmem:[%s4 + $0x660] sm:$0xff]
  %v268 = vld [vmem:[%s4 + $0x668] sm:$0xff]
  %v269 = vld [vmem:[%s4 + $0x670] sm:$0xff]
  %v270 = vld [vmem:[%s4 + $0x678] sm:$0xff]
  %v271 = vld [vmem:[%s4 + $0x680] sm:$0xff]
  %v272 = vld [vmem:[%s4 + $0x688] sm:$0xff]
  %v273 = vld [vmem:[%s4 + $0x690] sm:$0xff]
  %v274 = vld [vmem:[%s4 + $0x698] sm:$0xff]
  %v275 = vld [vmem:[%s4 + $0x6a0] sm:$0xff]
  %v276 = vld [vmem:[%s4 + $0x6a8] sm:$0xff]
  %v277 = vld [vmem:[%s4 + $0x6b0] sm:$0xff]
  %v278 = vld [vmem:[%s4 + $0x6b8] sm:$0xff]
  %v279 = vld [vmem:[%s4 + $0x6c0] sm:$0xff]
  %v280 = vld [vmem:[%s4 + $0x6c8] sm:$0xff]
  %v281 = vld [vmem:[%s4 + $0x6d0] sm:$0xff]
  %v282 = vld [vmem:[%s4 + $0x6d8] sm:$0xff]
  %v283 = vld [vmem:[%s4 + $0x6e0] sm:$0xff]
  %v284 = vld [vmem:[%s4 + $0x6e8] sm:$0xff]
  %v285 = vld [vmem:[%s4 + $0x6f0] sm:$0xff]
  %v286 = vld [vmem:[%s4 + $0x6f8] sm:$0xff]
  %v287 = vld [vmem:[%s4 + $0x700] sm:$0xff]
  %v288 = vld [vmem:[%s4 + $0x708] sm:$0xff]
  %v289 = vld [vmem:[%s4 + $0x710] sm:$0xff]
  %v290 = vld [vmem:[%s4 + $0x718] sm:$0xff]
  %v291 = vld [vmem:[%s4 + $0x720] sm:$0xff]
  %v292 = vld [vmem:[%s4 + $0x728] sm:$0xff]
  %v293 = vld [vmem:[%s4 + $0x730] sm:$0xff]
  %v294 = vld [vmem:[%s4 + $0x738] sm:$0xff]
  %v295 = vld [vmem:[%s4 + $0x740] sm:$0xff]
  %v296 = vld [vmem:[%s4 + $0x748] sm:$0xff]
  %v297 = vld [vmem:[%s4 + $0x750] sm:$0xff]
  %v298 = vld [vmem:[%s4 + $0x758] sm:$0xff]
  %v299 = vld [vmem:[%s4 + $0x760] sm:$0xff]
  %v300 = vld [vmem:[%s4 + $0x768] sm:$0xff]
  %v301 = vld [vmem:[%s4 + $0x770] sm:$0xff]
  %v302 = vld [vmem:[%s4 + $0x778] sm:$0xff]
  %v303 = vld [vmem:[%s4 + $0x780] sm:$0xff]
  %v304 = vld [vmem:[%s4 + $0x788] sm:$0xff]
  %v305 = vld [vmem:[%s4 + $0x790] sm:$0xff]
  %v306 = vld [vmem:[%s4 + $0x798] sm:$0xff]
  %v307 = vld [vmem:[%s4 + $0x7a0] sm:$0xff]
  %v308 = vld [vmem:[%s4 + $0x7a8] sm:$0xff]
  %v309 = vld [vmem:[%s4 + $0x7b0] sm:$0xff]
  %v310 = vld [vmem:[%s4 + $0x7b8] sm:$0xff]
  %v311 = vld [vmem:[%s4 + $0x7c0] sm:$0xff]
  %v312 = vld [vmem:[%s4 + $0x7c8] sm:$0xff]
  %v313 = vld [vmem:[%s4 + $0x7d0] sm:$0xff]
  %v314 = vld [vmem:[%s4 + $0x7d8] sm:$0xff]
  %v315 = vld [vmem:[%s4 + $0x7e0] sm:$0xff]
  %v316 = vld [vmem:[%s4 + $0x7e8] sm:$0xff]
  %v317 = vld [vmem:[%s4 + $0x7f0] sm:$0xff]
  %v318 = vld [vmem:[%s4 + $0x7f8] sm:$0xff]
  %v319 = vpack.c.bf16 %v61, %v61
  %v320 = vld [vmem:[%s5] sm:$0xff]
  %v321 = vld [vmem:[%s5 + $0x8] sm:$0xff]
  %v322 = vld [vmem:[%s5 + $0x10] sm:$0xff]
  %v323 = vld [vmem:[%s5 + $0x18] sm:$0xff]
  %v324 = vld [vmem:[%s5 + $0x20] sm:$0xff]
  %v325 = vld [vmem:[%s5 + $0x28] sm:$0xff]
  %v326 = vld [vmem:[%s5 + $0x30] sm:$0xff]
  %v327 = vld [vmem:[%s5 + $0x38] sm:$0xff]
  %v328 = vld [vmem:[%s5 + $0x40] sm:$0xff]
  %v329 = vld [vmem:[%s5 + $0x48] sm:$0xff]
  %v330 = vld [vmem:[%s5 + $0x50] sm:$0xff]
  %v331 = vld [vmem:[%s5 + $0x58] sm:$0xff]
  %v332 = vld [vmem:[%s5 + $0x60] sm:$0xff]
  %v333 = vld [vmem:[%s5 + $0x68] sm:$0xff]
  %v334 = vld [vmem:[%s5 + $0x70] sm:$0xff]
  %v335 = vld [vmem:[%s5 + $0x78] sm:$0xff]
  %v352 = vunpack.c.l.b16 %v320
  %v353 = vunpack.c.h.b16 %v320
  %v354 = vunpack.c.l.b16 %v321
  %v355 = vunpack.c.h.b16 %v321
  %v356 = vunpack.c.l.b16 %v322
  %v357 = vunpack.c.h.b16 %v322
  %v358 = vunpack.c.l.b16 %v323
  %v359 = vunpack.c.h.b16 %v323
  %v360 = vunpack.c.l.b16 %v324
  %v361 = vunpack.c.h.b16 %v324
  %v362 = vunpack.c.l.b16 %v325
  %v363 = vunpack.c.h.b16 %v325
  %v364 = vunpack.c.l.b16 %v326
  %v365 = vunpack.c.h.b16 %v326
  %v366 = vunpack.c.l.b16 %v327
  %v367 = vunpack.c.h.b16 %v327
  %v368 = vunpack.c.l.b16 %v328
  %v369 = vunpack.c.h.b16 %v328
  %v370 = vunpack.c.l.b16 %v329
  %v371 = vunpack.c.h.b16 %v329
  %v372 = vunpack.c.l.b16 %v330
  %v373 = vunpack.c.h.b16 %v330
  %v374 = vunpack.c.l.b16 %v331
  %v375 = vunpack.c.h.b16 %v331
  %v376 = vunpack.c.l.b16 %v332
  %v377 = vunpack.c.h.b16 %v332
  %v378 = vunpack.c.l.b16 %v333
  %v379 = vunpack.c.h.b16 %v333
  %v380 = vunpack.c.l.b16 %v334
  %v381 = vunpack.c.h.b16 %v334
  %v382 = vunpack.c.l.b16 %v335
  %v383 = vunpack.c.h.b16 %v335
  %v384 = vpack.c.b16 %v356, %v352
  %v385 = vpack.c.b16 %v357, %v353
  %v386 = vpack.c.b16 %v358, %v354
  %v387 = vpack.c.b16 %v359, %v355
  %v388 = vpack.c.b16 %v364, %v360
  %v389 = vpack.c.b16 %v365, %v361
  %v390 = vpack.c.b16 %v366, %v362
  %v391 = vpack.c.b16 %v367, %v363
  %v392 = vpack.c.b16 %v372, %v368
  %v393 = vpack.c.b16 %v373, %v369
  %v394 = vpack.c.b16 %v374, %v370
  %v395 = vpack.c.b16 %v375, %v371
  %v396 = vpack.c.b16 %v380, %v376
  %v397 = vpack.c.b16 %v381, %v377
  %v398 = vpack.c.b16 %v382, %v378
  %v399 = vpack.c.b16 %v383, %v379
  %vm416 = vcmask 523264
  %v418 = vsel %vm416, %v319, 0
  %420 = vmatpush.bf16.msra.mxu0 0
  %421 = vmatpush.bf16.msra.mxu0 0
  %422 = vmatpush.bf16.msra.mxu0 0
  %423 = vmatpush.bf16.msra.mxu0 0
  %424 = vmatpush.bf16.msra.mxu0 %v396
  %425 = vmatpush.bf16.msra.mxu0 %v392
  %426 = vmatpush.bf16.msra.mxu0 %v388
  %427 = vmatpush.bf16.msra.mxu0 %v384
  %428 = vmatmul.bf16.gmra.mxu0 %v418
  %v429 = vpop.f32.mrf.mxu0
  %v430 = vadd.f32 0.0, %v429
  %v431 = vpop.f32.mrf.mxu0
  %432 = vdwg.mxu0
  %433 = vmatpush.bf16.msra.mxu0 0
  %434 = vmatpush.bf16.msra.mxu0 0
  %435 = vmatpush.bf16.msra.mxu0 0
  %436 = vmatpush.bf16.msra.mxu0 0
  %437 = vmatpush.bf16.msra.mxu0 %v397
  %438 = vmatpush.bf16.msra.mxu0 %v393
  %439 = vmatpush.bf16.msra.mxu0 %v389
  %440 = vmatpush.bf16.msra.mxu0 %v385
  %441 = vmatmul.bf16.gmra.mxu0 %v418
  %v442 = vpop.f32.mrf.mxu0
  %v443 = vadd.f32 0.0, %v442
  %v444 = vpop.f32.mrf.mxu0
  %445 = vdwg.mxu0
  %446 = vmatpush.bf16.msra.mxu0 0
  %447 = vmatpush.bf16.msra.mxu0 0
  %448 = vmatpush.bf16.msra.mxu0 0
  %449 = vmatpush.bf16.msra.mxu0 0
  %450 = vmatpush.bf16.msra.mxu0 %v398
  %451 = vmatpush.bf16.msra.mxu0 %v394
  %452 = vmatpush.bf16.msra.mxu0 %v390
  %453 = vmatpush.bf16.msra.mxu0 %v386
  %454 = vmatmul.bf16.gmra.mxu0 %v418
  %v455 = vpop.f32.mrf.mxu0
  %v456 = vadd.f32 0.0, %v455
  %v457 = vpop.f32.mrf.mxu0
  %458 = vdwg.mxu0
  %459 = vmatpush.bf16.msra.mxu0 0
  %460 = vmatpush.bf16.msra.mxu0 0
  %461 = vmatpush.bf16.msra.mxu0 0
  %462 = vmatpush.bf16.msra.mxu0 0
  %463 = vmatpush.bf16.msra.mxu0 %v399
  %464 = vmatpush.bf16.msra.mxu0 %v395
  %465 = vmatpush.bf16.msra.mxu0 %v391
  %466 = vmatpush.bf16.msra.mxu0 %v387
  %467 = vmatmul.bf16.gmra.mxu0 %v418
  %v468 = vpop.f32.mrf.mxu0
  %v469 = vadd.f32 0.0, %v468
  %v470 = vpop.f32.mrf.mxu0
  %471 = vdwg.mxu0
  %473 = vst [vmem:[#allocation1] ss:$9 sm:$0xff] %v62
  %v474 = vld [vmem:[#allocation1] sm:$0xff]
  %v475 = vld [vmem:[#allocation1 + $0x9] sm:$0xff]
  %v476 = vld [vmem:[#allocation1 + $0x12] sm:$0xff]
  %v477 = vld [vmem:[#allocation1 + $0x1b] sm:$0xff]
  %v478 = vld [vmem:[#allocation1 + $0x24] sm:$0xff]
  %v479 = vld [vmem:[#allocation1 + $0x2d] sm:$0xff]
  %v480 = vld [vmem:[#allocation1 + $0x36] sm:$0xff]
  %v481 = vld [vmem:[#allocation1 + $0x3f] sm:$0xff]
  %v746 = vunpack.c.l.b16 %v63
  %v747 = vunpack.c.h.b16 %v63
  %v748 = vunpack.c.l.b16 %v64
  %v749 = vunpack.c.h.b16 %v64
  %v750 = vunpack.c.l.b16 %v65
  %v751 = vunpack.c.h.b16 %v65
  %v752 = vunpack.c.l.b16 %v66
  %v753 = vunpack.c.h.b16 %v66
  %v754 = vunpack.c.l.b16 %v67
  %v755 = vunpack.c.h.b16 %v67
  %v756 = vunpack.c.l.b16 %v68
  %v757 = vunpack.c.h.b16 %v68
  %v758 = vunpack.c.l.b16 %v69
  %v759 = vunpack.c.h.b16 %v69
  %v760 = vunpack.c.l.b16 %v70
  %v761 = vunpack.c.h.b16 %v70
  %v762 = vunpack.c.l.b16 %v71
  %v763 = vunpack.c.h.b16 %v71
  %v764 = vunpack.c.l.b16 %v72
  %v765 = vunpack.c.h.b16 %v72
  %v766 = vunpack.c.l.b16 %v73
  %v767 = vunpack.c.h.b16 %v73
  %v768 = vunpack.c.l.b16 %v74
  %v769 = vunpack.c.h.b16 %v74
  %v770 = vunpack.c.l.b16 %v75
  %v771 = vunpack.c.h.b16 %v75
  %v772 = vunpack.c.l.b16 %v76
  %v773 = vunpack.c.h.b16 %v76
  %v774 = vunpack.c.l.b16 %v77
  %v775 = vunpack.c.h.b16 %v77
  %v776 = vunpack.c.l.b16 %v78
  %v777 = vunpack.c.h.b16 %v78
  %v778 = vunpack.c.l.b16 %v79
  %v779 = vunpack.c.h.b16 %v79
  %v780 = vunpack.c.l.b16 %v80
  %v781 = vunpack.c.h.b16 %v80
  %v782 = vunpack.c.l.b16 %v81
  %v783 = vunpack.c.h.b16 %v81
  %v784 = vunpack.c.l.b16 %v82
  %v785 = vunpack.c.h.b16 %v82
  %v786 = vunpack.c.l.b16 %v83
  %v787 = vunpack.c.h.b16 %v83
  %v788 = vunpack.c.l.b16 %v84
  %v789 = vunpack.c.h.b16 %v84
  %v790 = vunpack.c.l.b16 %v85
  %v791 = vunpack.c.h.b16 %v85
  %v792 = vunpack.c.l.b16 %v86
  %v793 = vunpack.c.h.b16 %v86
  %v794 = vunpack.c.l.b16 %v87
  %v795 = vunpack.c.h.b16 %v87
  %v796 = vunpack.c.l.b16 %v88
  %v797 = vunpack.c.h.b16 %v88
  %v798 = vunpack.c.l.b16 %v89
  %v799 = vunpack.c.h.b16 %v89
  %v800 = vunpack.c.l.b16 %v90
  %v801 = vunpack.c.h.b16 %v90
  %v802 = vunpack.c.l.b16 %v91
  %v803 = vunpack.c.h.b16 %v91
  %v804 = vunpack.c.l.b16 %v92
  %v805 = vunpack.c.h.b16 %v92
  %v806 = vunpack.c.l.b16 %v93
  %v807 = vunpack.c.h.b16 %v93
  %v808 = vunpack.c.l.b16 %v94
  %v809 = vunpack.c.h.b16 %v94
  %v810 = vunpack.c.l.b16 %v95
  %v811 = vunpack.c.h.b16 %v95
  %v812 = vunpack.c.l.b16 %v96
  %v813 = vunpack.c.h.b16 %v96
  %v814 = vunpack.c.l.b16 %v97
  %v815 = vunpack.c.h.b16 %v97
  %v816 = vunpack.c.l.b16 %v98
  %v817 = vunpack.c.h.b16 %v98
  %v818 = vunpack.c.l.b16 %v99
  %v819 = vunpack.c.h.b16 %v99
  %v820 = vunpack.c.l.b16 %v100
  %v821 = vunpack.c.h.b16 %v100
  %v822 = vunpack.c.l.b16 %v101
  %v823 = vunpack.c.h.b16 %v101
  %v824 = vunpack.c.l.b16 %v102
  %v825 = vunpack.c.h.b16 %v102
  %v826 = vunpack.c.l.b16 %v103
  %v827 = vunpack.c.h.b16 %v103
  %v828 = vunpack.c.l.b16 %v104
  %v829 = vunpack.c.h.b16 %v104
  %v830 = vunpack.c.l.b16 %v105
  %v831 = vunpack.c.h.b16 %v105
  %v832 = vunpack.c.l.b16 %v106
  %v833 = vunpack.c.h.b16 %v106
  %v834 = vunpack.c.l.b16 %v107
  %v835 = vunpack.c.h.b16 %v107
  %v836 = vunpack.c.l.b16 %v108
  %v837 = vunpack.c.h.b16 %v108
  %v838 = vunpack.c.l.b16 %v109
  %v839 = vunpack.c.h.b16 %v109
  %v840 = vunpack.c.l.b16 %v110
  %v841 = vunpack.c.h.b16 %v110
  %v842 = vunpack.c.l.b16 %v111
  %v843 = vunpack.c.h.b16 %v111
  %v844 = vunpack.c.l.b16 %v112
  %v845 = vunpack.c.h.b16 %v112
  %v846 = vunpack.c.l.b16 %v113
  %v847 = vunpack.c.h.b16 %v113
  %v848 = vunpack.c.l.b16 %v114
  %v849 = vunpack.c.h.b16 %v114
  %v850 = vunpack.c.l.b16 %v115
  %v851 = vunpack.c.h.b16 %v115
  %v852 = vunpack.c.l.b16 %v116
  %v853 = vunpack.c.h.b16 %v116
  %v854 = vunpack.c.l.b16 %v117
  %v855 = vunpack.c.h.b16 %v117
  %v856 = vunpack.c.l.b16 %v118
  %v857 = vunpack.c.h.b16 %v118
  %v858 = vunpack.c.l.b16 %v119
  %v859 = vunpack.c.h.b16 %v119
  %v860 = vunpack.c.l.b16 %v120
  %v861 = vunpack.c.h.b16 %v120
  %v862 = vunpack.c.l.b16 %v121
  %v863 = vunpack.c.h.b16 %v121
  %v864 = vunpack.c.l.b16 %v122
  %v865 = vunpack.c.h.b16 %v122
  %v866 = vunpack.c.l.b16 %v123
  %v867 = vunpack.c.h.b16 %v123
  %v868 = vunpack.c.l.b16 %v124
  %v869 = vunpack.c.h.b16 %v124
  %v870 = vunpack.c.l.b16 %v125
  %v871 = vunpack.c.h.b16 %v125
  %v872 = vunpack.c.l.b16 %v126
  %v873 = vunpack.c.h.b16 %v126
  %v874 = vunpack.c.l.b16 %v127
  %v875 = vunpack.c.h.b16 %v127
  %v876 = vunpack.c.l.b16 %v128
  %v877 = vunpack.c.h.b16 %v128
  %v878 = vunpack.c.l.b16 %v129
  %v879 = vunpack.c.h.b16 %v129
  %v880 = vunpack.c.l.b16 %v130
  %v881 = vunpack.c.h.b16 %v130
  %v882 = vunpack.c.l.b16 %v131
  %v883 = vunpack.c.h.b16 %v131
  %v884 = vunpack.c.l.b16 %v132
  %v885 = vunpack.c.h.b16 %v132
  %v886 = vunpack.c.l.b16 %v133
  %v887 = vunpack.c.h.b16 %v133
  %v888 = vunpack.c.l.b16 %v134
  %v889 = vunpack.c.h.b16 %v134
  %v890 = vunpack.c.l.b16 %v135
  %v891 = vunpack.c.h.b16 %v135
  %v892 = vunpack.c.l.b16 %v136
  %v893 = vunpack.c.h.b16 %v136
  %v894 = vunpack.c.l.b16 %v137
  %v895 = vunpack.c.h.b16 %v137
  %v896 = vunpack.c.l.b16 %v138
  %v897 = vunpack.c.h.b16 %v138
  %v898 = vunpack.c.l.b16 %v139
  %v899 = vunpack.c.h.b16 %v139
  %v900 = vunpack.c.l.b16 %v140
  %v901 = vunpack.c.h.b16 %v140
  %v902 = vunpack.c.l.b16 %v141
  %v903 = vunpack.c.h.b16 %v141
  %v904 = vunpack.c.l.b16 %v142
  %v905 = vunpack.c.h.b16 %v142
  %v906 = vunpack.c.l.b16 %v143
  %v907 = vunpack.c.h.b16 %v143
  %v908 = vunpack.c.l.b16 %v144
  %v909 = vunpack.c.h.b16 %v144
  %v910 = vunpack.c.l.b16 %v145
  %v911 = vunpack.c.h.b16 %v145
  %v912 = vunpack.c.l.b16 %v146
  %v913 = vunpack.c.h.b16 %v146
  %v914 = vunpack.c.l.b16 %v147
  %v915 = vunpack.c.h.b16 %v147
  %v916 = vunpack.c.l.b16 %v148
  %v917 = vunpack.c.h.b16 %v148
  %v918 = vunpack.c.l.b16 %v149
  %v919 = vunpack.c.h.b16 %v149
  %v920 = vunpack.c.l.b16 %v150
  %v921 = vunpack.c.h.b16 %v150
  %v922 = vunpack.c.l.b16 %v151
  %v923 = vunpack.c.h.b16 %v151
  %v924 = vunpack.c.l.b16 %v152
  %v925 = vunpack.c.h.b16 %v152
  %v926 = vunpack.c.l.b16 %v153
  %v927 = vunpack.c.h.b16 %v153
  %v928 = vunpack.c.l.b16 %v154
  %v929 = vunpack.c.h.b16 %v154
  %v930 = vunpack.c.l.b16 %v155
  %v931 = vunpack.c.h.b16 %v155
  %v932 = vunpack.c.l.b16 %v156
  %v933 = vunpack.c.h.b16 %v156
  %v934 = vunpack.c.l.b16 %v157
  %v935 = vunpack.c.h.b16 %v157
  %v936 = vunpack.c.l.b16 %v158
  %v937 = vunpack.c.h.b16 %v158
  %v938 = vunpack.c.l.b16 %v159
  %v939 = vunpack.c.h.b16 %v159
  %v940 = vunpack.c.l.b16 %v160
  %v941 = vunpack.c.h.b16 %v160
  %v942 = vunpack.c.l.b16 %v161
  %v943 = vunpack.c.h.b16 %v161
  %v944 = vunpack.c.l.b16 %v162
  %v945 = vunpack.c.h.b16 %v162
  %v946 = vunpack.c.l.b16 %v163
  %v947 = vunpack.c.h.b16 %v163
  %v948 = vunpack.c.l.b16 %v164
  %v949 = vunpack.c.h.b16 %v164
  %v950 = vunpack.c.l.b16 %v165
  %v951 = vunpack.c.h.b16 %v165
  %v952 = vunpack.c.l.b16 %v166
  %v953 = vunpack.c.h.b16 %v166
  %v954 = vunpack.c.l.b16 %v167
  %v955 = vunpack.c.h.b16 %v167
  %v956 = vunpack.c.l.b16 %v168
  %v957 = vunpack.c.h.b16 %v168
  %v958 = vunpack.c.l.b16 %v169
  %v959 = vunpack.c.h.b16 %v169
  %v960 = vunpack.c.l.b16 %v170
  %v961 = vunpack.c.h.b16 %v170
  %v962 = vunpack.c.l.b16 %v171
  %v963 = vunpack.c.h.b16 %v171
  %v964 = vunpack.c.l.b16 %v172
  %v965 = vunpack.c.h.b16 %v172
  %v966 = vunpack.c.l.b16 %v173
  %v967 = vunpack.c.h.b16 %v173
  %v968 = vunpack.c.l.b16 %v174
  %v969 = vunpack.c.h.b16 %v174
  %v970 = vunpack.c.l.b16 %v175
  %v971 = vunpack.c.h.b16 %v175
  %v972 = vunpack.c.l.b16 %v176
  %v973 = vunpack.c.h.b16 %v176
  %v974 = vunpack.c.l.b16 %v177
  %v975 = vunpack.c.h.b16 %v177
  %v976 = vunpack.c.l.b16 %v178
  %v977 = vunpack.c.h.b16 %v178
  %v978 = vunpack.c.l.b16 %v179
  %v979 = vunpack.c.h.b16 %v179
  %v980 = vunpack.c.l.b16 %v180
  %v981 = vunpack.c.h.b16 %v180
  %v982 = vunpack.c.l.b16 %v181
  %v983 = vunpack.c.h.b16 %v181
  %v984 = vunpack.c.l.b16 %v182
  %v985 = vunpack.c.h.b16 %v182
  %v986 = vunpack.c.l.b16 %v183
  %v987 = vunpack.c.h.b16 %v183
  %v988 = vunpack.c.l.b16 %v184
  %v989 = vunpack.c.h.b16 %v184
  %v990 = vunpack.c.l.b16 %v185
  %v991 = vunpack.c.h.b16 %v185
  %v992 = vunpack.c.l.b16 %v186
  %v993 = vunpack.c.h.b16 %v186
  %v994 = vunpack.c.l.b16 %v187
  %v995 = vunpack.c.h.b16 %v187
  %v996 = vunpack.c.l.b16 %v188
  %v997 = vunpack.c.h.b16 %v188
  %v998 = vunpack.c.l.b16 %v189
  %v999 = vunpack.c.h.b16 %v189
  %v1000 = vunpack.c.l.b16 %v190
  %v1001 = vunpack.c.h.b16 %v190
  %v1002 = vunpack.c.l.b16 %v191
  %v1003 = vunpack.c.h.b16 %v191
  %v1004 = vunpack.c.l.b16 %v192
  %v1005 = vunpack.c.h.b16 %v192
  %v1006 = vunpack.c.l.b16 %v193
  %v1007 = vunpack.c.h.b16 %v193
  %v1008 = vunpack.c.l.b16 %v194
  %v1009 = vunpack.c.h.b16 %v194
  %v1010 = vunpack.c.l.b16 %v195
  %v1011 = vunpack.c.h.b16 %v195
  %v1012 = vunpack.c.l.b16 %v196
  %v1013 = vunpack.c.h.b16 %v196
  %v1014 = vunpack.c.l.b16 %v197
  %v1015 = vunpack.c.h.b16 %v197
  %v1016 = vunpack.c.l.b16 %v198
  %v1017 = vunpack.c.h.b16 %v198
  %v1018 = vunpack.c.l.b16 %v199
  %v1019 = vunpack.c.h.b16 %v199
  %v1020 = vunpack.c.l.b16 %v200
  %v1021 = vunpack.c.h.b16 %v200
  %v1022 = vunpack.c.l.b16 %v201
  %v1023 = vunpack.c.h.b16 %v201
  %v1024 = vunpack.c.l.b16 %v202
  %v1025 = vunpack.c.h.b16 %v202
  %v1026 = vunpack.c.l.b16 %v203
  %v1027 = vunpack.c.h.b16 %v203
  %v1028 = vunpack.c.l.b16 %v204
  %v1029 = vunpack.c.h.b16 %v204
  %v1030 = vunpack.c.l.b16 %v205
  %v1031 = vunpack.c.h.b16 %v205
  %v1032 = vunpack.c.l.b16 %v206
  %v1033 = vunpack.c.h.b16 %v206
  %v1034 = vunpack.c.l.b16 %v207
  %v1035 = vunpack.c.h.b16 %v207
  %v1036 = vunpack.c.l.b16 %v208
  %v1037 = vunpack.c.h.b16 %v208
  %v1038 = vunpack.c.l.b16 %v209
  %v1039 = vunpack.c.h.b16 %v209
  %v1040 = vunpack.c.l.b16 %v210
  %v1041 = vunpack.c.h.b16 %v210
  %v1042 = vunpack.c.l.b16 %v211
  %v1043 = vunpack.c.h.b16 %v211
  %v1044 = vunpack.c.l.b16 %v212
  %v1045 = vunpack.c.h.b16 %v212
  %v1046 = vunpack.c.l.b16 %v213
  %v1047 = vunpack.c.h.b16 %v213
  %v1048 = vunpack.c.l.b16 %v214
  %v1049 = vunpack.c.h.b16 %v214
  %v1050 = vunpack.c.l.b16 %v215
  %v1051 = vunpack.c.h.b16 %v215
  %v1052 = vunpack.c.l.b16 %v216
  %v1053 = vunpack.c.h.b16 %v216
  %v1054 = vunpack.c.l.b16 %v217
  %v1055 = vunpack.c.h.b16 %v217
  %v1056 = vunpack.c.l.b16 %v218
  %v1057 = vunpack.c.h.b16 %v218
  %v1058 = vunpack.c.l.b16 %v219
  %v1059 = vunpack.c.h.b16 %v219
  %v1060 = vunpack.c.l.b16 %v220
  %v1061 = vunpack.c.h.b16 %v220
  %v1062 = vunpack.c.l.b16 %v221
  %v1063 = vunpack.c.h.b16 %v221
  %v1064 = vunpack.c.l.b16 %v222
  %v1065 = vunpack.c.h.b16 %v222
  %v1066 = vunpack.c.l.b16 %v223
  %v1067 = vunpack.c.h.b16 %v223
  %v1068 = vunpack.c.l.b16 %v224
  %v1069 = vunpack.c.h.b16 %v224
  %v1070 = vunpack.c.l.b16 %v225
  %v1071 = vunpack.c.h.b16 %v225
  %v1072 = vunpack.c.l.b16 %v226
  %v1073 = vunpack.c.h.b16 %v226
  %v1074 = vunpack.c.l.b16 %v227
  %v1075 = vunpack.c.h.b16 %v227
  %v1076 = vunpack.c.l.b16 %v228
  %v1077 = vunpack.c.h.b16 %v228
  %v1078 = vunpack.c.l.b16 %v229
  %v1079 = vunpack.c.h.b16 %v229
  %v1080 = vunpack.c.l.b16 %v230
  %v1081 = vunpack.c.h.b16 %v230
  %v1082 = vunpack.c.l.b16 %v231
  %v1083 = vunpack.c.h.b16 %v231
  %v1084 = vunpack.c.l.b16 %v232
  %v1085 = vunpack.c.h.b16 %v232
  %v1086 = vunpack.c.l.b16 %v233
  %v1087 = vunpack.c.h.b16 %v233
  %v1088 = vunpack.c.l.b16 %v234
  %v1089 = vunpack.c.h.b16 %v234
  %v1090 = vunpack.c.l.b16 %v235
  %v1091 = vunpack.c.h.b16 %v235
  %v1092 = vunpack.c.l.b16 %v236
  %v1093 = vunpack.c.h.b16 %v236
  %v1094 = vunpack.c.l.b16 %v237
  %v1095 = vunpack.c.h.b16 %v237
  %v1096 = vunpack.c.l.b16 %v238
  %v1097 = vunpack.c.h.b16 %v238
  %v1098 = vunpack.c.l.b16 %v239
  %v1099 = vunpack.c.h.b16 %v239
  %v1100 = vunpack.c.l.b16 %v240
  %v1101 = vunpack.c.h.b16 %v240
  %v1102 = vunpack.c.l.b16 %v241
  %v1103 = vunpack.c.h.b16 %v241
  %v1104 = vunpack.c.l.b16 %v242
  %v1105 = vunpack.c.h.b16 %v242
  %v1106 = vunpack.c.l.b16 %v243
  %v1107 = vunpack.c.h.b16 %v243
  %v1108 = vunpack.c.l.b16 %v244
  %v1109 = vunpack.c.h.b16 %v244
  %v1110 = vunpack.c.l.b16 %v245
  %v1111 = vunpack.c.h.b16 %v245
  %v1112 = vunpack.c.l.b16 %v246
  %v1113 = vunpack.c.h.b16 %v246
  %v1114 = vunpack.c.l.b16 %v247
  %v1115 = vunpack.c.h.b16 %v247
  %v1116 = vunpack.c.l.b16 %v248
  %v1117 = vunpack.c.h.b16 %v248
  %v1118 = vunpack.c.l.b16 %v249
  %v1119 = vunpack.c.h.b16 %v249
  %v1120 = vunpack.c.l.b16 %v250
  %v1121 = vunpack.c.h.b16 %v250
  %v1122 = vunpack.c.l.b16 %v251
  %v1123 = vunpack.c.h.b16 %v251
  %v1124 = vunpack.c.l.b16 %v252
  %v1125 = vunpack.c.h.b16 %v252
  %v1126 = vunpack.c.l.b16 %v253
  %v1127 = vunpack.c.h.b16 %v253
  %v1128 = vunpack.c.l.b16 %v254
  %v1129 = vunpack.c.h.b16 %v254
  %v1130 = vunpack.c.l.b16 %v255
  %v1131 = vunpack.c.h.b16 %v255
  %v1132 = vunpack.c.l.b16 %v256
  %v1133 = vunpack.c.h.b16 %v256
  %v1134 = vunpack.c.l.b16 %v257
  %v1135 = vunpack.c.h.b16 %v257
  %v1136 = vunpack.c.l.b16 %v258
  %v1137 = vunpack.c.h.b16 %v258
  %v1138 = vunpack.c.l.b16 %v259
  %v1139 = vunpack.c.h.b16 %v259
  %v1140 = vunpack.c.l.b16 %v260
  %v1141 = vunpack.c.h.b16 %v260
  %v1142 = vunpack.c.l.b16 %v261
  %v1143 = vunpack.c.h.b16 %v261
  %v1144 = vunpack.c.l.b16 %v262
  %v1145 = vunpack.c.h.b16 %v262
  %v1146 = vunpack.c.l.b16 %v263
  %v1147 = vunpack.c.h.b16 %v263
  %v1148 = vunpack.c.l.b16 %v264
  %v1149 = vunpack.c.h.b16 %v264
  %v1150 = vunpack.c.l.b16 %v265
  %v1151 = vunpack.c.h.b16 %v265
  %v1152 = vunpack.c.l.b16 %v266
  %v1153 = vunpack.c.h.b16 %v266
  %v1154 = vunpack.c.l.b16 %v267
  %v1155 = vunpack.c.h.b16 %v267
  %v1156 = vunpack.c.l.b16 %v268
  %v1157 = vunpack.c.h.b16 %v268
  %v1158 = vunpack.c.l.b16 %v269
  %v1159 = vunpack.c.h.b16 %v269
  %v1160 = vunpack.c.l.b16 %v270
  %v1161 = vunpack.c.h.b16 %v270
  %v1162 = vunpack.c.l.b16 %v271
  %v1163 = vunpack.c.h.b16 %v271
  %v1164 = vunpack.c.l.b16 %v272
  %v1165 = vunpack.c.h.b16 %v272
  %v1166 = vunpack.c.l.b16 %v273
  %v1167 = vunpack.c.h.b16 %v273
  %v1168 = vunpack.c.l.b16 %v274
  %v1169 = vunpack.c.h.b16 %v274
  %v1170 = vunpack.c.l.b16 %v275
  %v1171 = vunpack.c.h.b16 %v275
  %v1172 = vunpack.c.l.b16 %v276
  %v1173 = vunpack.c.h.b16 %v276
  %v1174 = vunpack.c.l.b16 %v277
  %v1175 = vunpack.c.h.b16 %v277
  %v1176 = vunpack.c.l.b16 %v278
  %v1177 = vunpack.c.h.b16 %v278
  %v1178 = vunpack.c.l.b16 %v279
  %v1179 = vunpack.c.h.b16 %v279
  %v1180 = vunpack.c.l.b16 %v280
  %v1181 = vunpack.c.h.b16 %v280
  %v1182 = vunpack.c.l.b16 %v281
  %v1183 = vunpack.c.h.b16 %v281
  %v1184 = vunpack.c.l.b16 %v282
  %v1185 = vunpack.c.h.b16 %v282
  %v1186 = vunpack.c.l.b16 %v283
  %v1187 = vunpack.c.h.b16 %v283
  %v1188 = vunpack.c.l.b16 %v284
  %v1189 = vunpack.c.h.b16 %v284
  %v1190 = vunpack.c.l.b16 %v285
  %v1191 = vunpack.c.h.b16 %v285
  %v1192 = vunpack.c.l.b16 %v286
  %v1193 = vunpack.c.h.b16 %v286
  %v1194 = vunpack.c.l.b16 %v287
  %v1195 = vunpack.c.h.b16 %v287
  %v1196 = vunpack.c.l.b16 %v288
  %v1197 = vunpack.c.h.b16 %v288
  %v1198 = vunpack.c.l.b16 %v289
  %v1199 = vunpack.c.h.b16 %v289
  %v1200 = vunpack.c.l.b16 %v290
  %v1201 = vunpack.c.h.b16 %v290
  %v1202 = vunpack.c.l.b16 %v291
  %v1203 = vunpack.c.h.b16 %v291
  %v1204 = vunpack.c.l.b16 %v292
  %v1205 = vunpack.c.h.b16 %v292
  %v1206 = vunpack.c.l.b16 %v293
  %v1207 = vunpack.c.h.b16 %v293
  %v1208 = vunpack.c.l.b16 %v294
  %v1209 = vunpack.c.h.b16 %v294
  %v1210 = vunpack.c.l.b16 %v295
  %v1211 = vunpack.c.h.b16 %v295
  %v1212 = vunpack.c.l.b16 %v296
  %v1213 = vunpack.c.h.b16 %v296
  %v1214 = vunpack.c.l.b16 %v297
  %v1215 = vunpack.c.h.b16 %v297
  %v1216 = vunpack.c.l.b16 %v298
  %v1217 = vunpack.c.h.b16 %v298
  %v1218 = vunpack.c.l.b16 %v299
  %v1219 = vunpack.c.h.b16 %v299
  %v1220 = vunpack.c.l.b16 %v300
  %v1221 = vunpack.c.h.b16 %v300
  %v1222 = vunpack.c.l.b16 %v301
  %v1223 = vunpack.c.h.b16 %v301
  %v1224 = vunpack.c.l.b16 %v302
  %v1225 = vunpack.c.h.b16 %v302
  %v1226 = vunpack.c.l.b16 %v303
  %v1227 = vunpack.c.h.b16 %v303
  %v1228 = vunpack.c.l.b16 %v304
  %v1229 = vunpack.c.h.b16 %v304
  %v1230 = vunpack.c.l.b16 %v305
  %v1231 = vunpack.c.h.b16 %v305
  %v1232 = vunpack.c.l.b16 %v306
  %v1233 = vunpack.c.h.b16 %v306
  %v1234 = vunpack.c.l.b16 %v307
  %v1235 = vunpack.c.h.b16 %v307
  %v1236 = vunpack.c.l.b16 %v308
  %v1237 = vunpack.c.h.b16 %v308
  %v1238 = vunpack.c.l.b16 %v309
  %v1239 = vunpack.c.h.b16 %v309
  %v1240 = vunpack.c.l.b16 %v310
  %v1241 = vunpack.c.h.b16 %v310
  %v1242 = vunpack.c.l.b16 %v311
  %v1243 = vunpack.c.h.b16 %v311
  %v1244 = vunpack.c.l.b16 %v312
  %v1245 = vunpack.c.h.b16 %v312
  %v1246 = vunpack.c.l.b16 %v313
  %v1247 = vunpack.c.h.b16 %v313
  %v1248 = vunpack.c.l.b16 %v314
  %v1249 = vunpack.c.h.b16 %v314
  %v1250 = vunpack.c.l.b16 %v315
  %v1251 = vunpack.c.h.b16 %v315
  %v1252 = vunpack.c.l.b16 %v316
  %v1253 = vunpack.c.h.b16 %v316
  %v1254 = vunpack.c.l.b16 %v317
  %v1255 = vunpack.c.h.b16 %v317
  %v1256 = vunpack.c.l.b16 %v318
  %v1257 = vunpack.c.h.b16 %v318
  %v1258 = vpack.c.b16 %v750, %v746
  %v1259 = vpack.c.b16 %v751, %v747
  %v1260 = vpack.c.b16 %v752, %v748
  %v1261 = vpack.c.b16 %v753, %v749
  %v1262 = vpack.c.b16 %v758, %v754
  %v1263 = vpack.c.b16 %v759, %v755
  %v1264 = vpack.c.b16 %v760, %v756
  %v1265 = vpack.c.b16 %v761, %v757
  %v1266 = vpack.c.b16 %v766, %v762
  %v1267 = vpack.c.b16 %v767, %v763
  %v1268 = vpack.c.b16 %v768, %v764
  %v1269 = vpack.c.b16 %v769, %v765
  %v1270 = vpack.c.b16 %v774, %v770
  %v1271 = vpack.c.b16 %v775, %v771
  %v1272 = vpack.c.b16 %v776, %v772
  %v1273 = vpack.c.b16 %v777, %v773
  %v1274 = vpack.c.b16 %v782, %v778
  %v1275 = vpack.c.b16 %v783, %v779
  %v1276 = vpack.c.b16 %v784, %v780
  %v1277 = vpack.c.b16 %v785, %v781
  %v1278 = vpack.c.b16 %v790, %v786
  %v1279 = vpack.c.b16 %v791, %v787
  %v1280 = vpack.c.b16 %v792, %v788
  %v1281 = vpack.c.b16 %v793, %v789
  %v1282 = vpack.c.b16 %v798, %v794
  %v1283 = vpack.c.b16 %v799, %v795
  %v1284 = vpack.c.b16 %v800, %v796
  %v1285 = vpack.c.b16 %v801, %v797
  %v1286 = vpack.c.b16 %v806, %v802
  %v1287 = vpack.c.b16 %v807, %v803
  %v1288 = vpack.c.b16 %v808, %v804
  %v1289 = vpack.c.b16 %v809, %v805
  %v1290 = vpack.c.b16 %v814, %v810
  %v1291 = vpack.c.b16 %v815, %v811
  %v1292 = vpack.c.b16 %v816, %v812
  %v1293 = vpack.c.b16 %v817, %v813
  %v1294 = vpack.c.b16 %v822, %v818
  %v1295 = vpack.c.b16 %v823, %v819
  %v1296 = vpack.c.b16 %v824, %v820
  %v1297 = vpack.c.b16 %v825, %v821
  %v1298 = vpack.c.b16 %v830, %v826
  %v1299 = vpack.c.b16 %v831, %v827
  %v1300 = vpack.c.b16 %v832, %v828
  %v1301 = vpack.c.b16 %v833, %v829
  %v1302 = vpack.c.b16 %v838, %v834
  %v1303 = vpack.c.b16 %v839, %v835
  %v1304 = vpack.c.b16 %v840, %v836
  %v1305 = vpack.c.b16 %v841, %v837
  %v1306 = vpack.c.b16 %v846, %v842
  %v1307 = vpack.c.b16 %v847, %v843
  %v1308 = vpack.c.b16 %v848, %v844
  %v1309 = vpack.c.b16 %v849, %v845
  %v1310 = vpack.c.b16 %v854, %v850
  %v1311 = vpack.c.b16 %v855, %v851
  %v1312 = vpack.c.b16 %v856, %v852
  %v1313 = vpack.c.b16 %v857, %v853
  %v1314 = vpack.c.b16 %v862, %v858
  %v1315 = vpack.c.b16 %v863, %v859
  %v1316 = vpack.c.b16 %v864, %v860
  %v1317 = vpack.c.b16 %v865, %v861
  %v1318 = vpack.c.b16 %v870, %v866
  %v1319 = vpack.c.b16 %v871, %v867
  %v1320 = vpack.c.b16 %v872, %v868
  %v1321 = vpack.c.b16 %v873, %v869
  %v1322 = vpack.c.b16 %v878, %v874
  %v1323 = vpack.c.b16 %v879, %v875
  %v1324 = vpack.c.b16 %v880, %v876
  %v1325 = vpack.c.b16 %v881, %v877
  %v1326 = vpack.c.b16 %v886, %v882
  %v1327 = vpack.c.b16 %v887, %v883
  %v1328 = vpack.c.b16 %v888, %v884
  %v1329 = vpack.c.b16 %v889, %v885
  %v1330 = vpack.c.b16 %v894, %v890
  %v1331 = vpack.c.b16 %v895, %v891
  %v1332 = vpack.c.b16 %v896, %v892
  %v1333 = vpack.c.b16 %v897, %v893
  %v1334 = vpack.c.b16 %v902, %v898
  %v1335 = vpack.c.b16 %v903, %v899
  %v1336 = vpack.c.b16 %v904, %v900
  %v1337 = vpack.c.b16 %v905, %v901
  %v1338 = vpack.c.b16 %v910, %v906
  %v1339 = vpack.c.b16 %v911, %v907
  %v1340 = vpack.c.b16 %v912, %v908
  %v1341 = vpack.c.b16 %v913, %v909
  %v1342 = vpack.c.b16 %v918, %v914
  %v1343 = vpack.c.b16 %v919, %v915
  %v1344 = vpack.c.b16 %v920, %v916
  %v1345 = vpack.c.b16 %v921, %v917
  %v1346 = vpack.c.b16 %v926, %v922
  %v1347 = vpack.c.b16 %v927, %v923
  %v1348 = vpack.c.b16 %v928, %v924
  %v1349 = vpack.c.b16 %v929, %v925
  %v1350 = vpack.c.b16 %v934, %v930
  %v1351 = vpack.c.b16 %v935, %v931
  %v1352 = vpack.c.b16 %v936, %v932
  %v1353 = vpack.c.b16 %v937, %v933
  %v1354 = vpack.c.b16 %v942, %v938
  %v1355 = vpack.c.b16 %v943, %v939
  %v1356 = vpack.c.b16 %v944, %v940
  %v1357 = vpack.c.b16 %v945, %v941
  %v1358 = vpack.c.b16 %v950, %v946
  %v1359 = vpack.c.b16 %v951, %v947
  %v1360 = vpack.c.b16 %v952, %v948
  %v1361 = vpack.c.b16 %v953, %v949
  %v1362 = vpack.c.b16 %v958, %v954
  %v1363 = vpack.c.b16 %v959, %v955
  %v1364 = vpack.c.b16 %v960, %v956
  %v1365 = vpack.c.b16 %v961, %v957
  %v1366 = vpack.c.b16 %v966, %v962
  %v1367 = vpack.c.b16 %v967, %v963
  %v1368 = vpack.c.b16 %v968, %v964
  %v1369 = vpack.c.b16 %v969, %v965
  %v1370 = vpack.c.b16 %v974, %v970
  %v1371 = vpack.c.b16 %v975, %v971
  %v1372 = vpack.c.b16 %v976, %v972
  %v1373 = vpack.c.b16 %v977, %v973
  %v1374 = vpack.c.b16 %v982, %v978
  %v1375 = vpack.c.b16 %v983, %v979
  %v1376 = vpack.c.b16 %v984, %v980
  %v1377 = vpack.c.b16 %v985, %v981
  %v1378 = vpack.c.b16 %v990, %v986
  %v1379 = vpack.c.b16 %v991, %v987
  %v1380 = vpack.c.b16 %v992, %v988
  %v1381 = vpack.c.b16 %v993, %v989
  %v1382 = vpack.c.b16 %v998, %v994
  %v1383 = vpack.c.b16 %v999, %v995
  %v1384 = vpack.c.b16 %v1000, %v996
  %v1385 = vpack.c.b16 %v1001, %v997
  %v1386 = vpack.c.b16 %v1006, %v1002
  %v1387 = vpack.c.b16 %v1007, %v1003
  %v1388 = vpack.c.b16 %v1008, %v1004
  %v1389 = vpack.c.b16 %v1009, %v1005
  %v1390 = vpack.c.b16 %v1014, %v1010
  %v1391 = vpack.c.b16 %v1015, %v1011
  %v1392 = vpack.c.b16 %v1016, %v1012
  %v1393 = vpack.c.b16 %v1017, %v1013
  %v1394 = vpack.c.b16 %v1022, %v1018
  %v1395 = vpack.c.b16 %v1023, %v1019
  %v1396 = vpack.c.b16 %v1024, %v1020
  %v1397 = vpack.c.b16 %v1025, %v1021
  %v1398 = vpack.c.b16 %v1030, %v1026
  %v1399 = vpack.c.b16 %v1031, %v1027
  %v1400 = vpack.c.b16 %v1032, %v1028
  %v1401 = vpack.c.b16 %v1033, %v1029
  %v1402 = vpack.c.b16 %v1038, %v1034
  %v1403 = vpack.c.b16 %v1039, %v1035
  %v1404 = vpack.c.b16 %v1040, %v1036
  %v1405 = vpack.c.b16 %v1041, %v1037
  %v1406 = vpack.c.b16 %v1046, %v1042
  %v1407 = vpack.c.b16 %v1047, %v1043
  %v1408 = vpack.c.b16 %v1048, %v1044
  %v1409 = vpack.c.b16 %v1049, %v1045
  %v1410 = vpack.c.b16 %v1054, %v1050
  %v1411 = vpack.c.b16 %v1055, %v1051
  %v1412 = vpack.c.b16 %v1056, %v1052
  %v1413 = vpack.c.b16 %v1057, %v1053
  %v1414 = vpack.c.b16 %v1062, %v1058
  %v1415 = vpack.c.b16 %v1063, %v1059
  %v1416 = vpack.c.b16 %v1064, %v1060
  %v1417 = vpack.c.b16 %v1065, %v1061
  %v1418 = vpack.c.b16 %v1070, %v1066
  %v1419 = vpack.c.b16 %v1071, %v1067
  %v1420 = vpack.c.b16 %v1072, %v1068
  %v1421 = vpack.c.b16 %v1073, %v1069
  %v1422 = vpack.c.b16 %v1078, %v1074
  %v1423 = vpack.c.b16 %v1079, %v1075
  %v1424 = vpack.c.b16 %v1080, %v1076
  %v1425 = vpack.c.b16 %v1081, %v1077
  %v1426 = vpack.c.b16 %v1086, %v1082
  %v1427 = vpack.c.b16 %v1087, %v1083
  %v1428 = vpack.c.b16 %v1088, %v1084
  %v1429 = vpack.c.b16 %v1089, %v1085
  %v1430 = vpack.c.b16 %v1094, %v1090
  %v1431 = vpack.c.b16 %v1095, %v1091
  %v1432 = vpack.c.b16 %v1096, %v1092
  %v1433 = vpack.c.b16 %v1097, %v1093
  %v1434 = vpack.c.b16 %v1102, %v1098
  %v1435 = vpack.c.b16 %v1103, %v1099
  %v1436 = vpack.c.b16 %v1104, %v1100
  %v1437 = vpack.c.b16 %v1105, %v1101
  %v1438 = vpack.c.b16 %v1110, %v1106
  %v1439 = vpack.c.b16 %v1111, %v1107
  %v1440 = vpack.c.b16 %v1112, %v1108
  %v1441 = vpack.c.b16 %v1113, %v1109
  %v1442 = vpack.c.b16 %v1118, %v1114
  %v1443 = vpack.c.b16 %v1119, %v1115
  %v1444 = vpack.c.b16 %v1120, %v1116
  %v1445 = vpack.c.b16 %v1121, %v1117
  %v1446 = vpack.c.b16 %v1126, %v1122
  %v1447 = vpack.c.b16 %v1127, %v1123
  %v1448 = vpack.c.b16 %v1128, %v1124
  %v1449 = vpack.c.b16 %v1129, %v1125
  %v1450 = vpack.c.b16 %v1134, %v1130
  %v1451 = vpack.c.b16 %v1135, %v1131
  %v1452 = vpack.c.b16 %v1136, %v1132
  %v1453 = vpack.c.b16 %v1137, %v1133
  %v1454 = vpack.c.b16 %v1142, %v1138
  %v1455 = vpack.c.b16 %v1143, %v1139
  %v1456 = vpack.c.b16 %v1144, %v1140
  %v1457 = vpack.c.b16 %v1145, %v1141
  %v1458 = vpack.c.b16 %v1150, %v1146
  %v1459 = vpack.c.b16 %v1151, %v1147
  %v1460 = vpack.c.b16 %v1152, %v1148
  %v1461 = vpack.c.b16 %v1153, %v1149
  %v1462 = vpack.c.b16 %v1158, %v1154
  %v1463 = vpack.c.b16 %v1159, %v1155
  %v1464 = vpack.c.b16 %v1160, %v1156
  %v1465 = vpack.c.b16 %v1161, %v1157
  %v1466 = vpack.c.b16 %v1166, %v1162
  %v1467 = vpack.c.b16 %v1167, %v1163
  %v1468 = vpack.c.b16 %v1168, %v1164
  %v1469 = vpack.c.b16 %v1169, %v1165
  %v1470 = vpack.c.b16 %v1174, %v1170
  %v1471 = vpack.c.b16 %v1175, %v1171
  %v1472 = vpack.c.b16 %v1176, %v1172
  %v1473 = vpack.c.b16 %v1177, %v1173
  %v1474 = vpack.c.b16 %v1182, %v1178
  %v1475 = vpack.c.b16 %v1183, %v1179
  %v1476 = vpack.c.b16 %v1184, %v1180
  %v1477 = vpack.c.b16 %v1185, %v1181
  %v1478 = vpack.c.b16 %v1190, %v1186
  %v1479 = vpack.c.b16 %v1191, %v1187
  %v1480 = vpack.c.b16 %v1192, %v1188
  %v1481 = vpack.c.b16 %v1193, %v1189
  %v1482 = vpack.c.b16 %v1198, %v1194
  %v1483 = vpack.c.b16 %v1199, %v1195
  %v1484 = vpack.c.b16 %v1200, %v1196
  %v1485 = vpack.c.b16 %v1201, %v1197
  %v1486 = vpack.c.b16 %v1206, %v1202
  %v1487 = vpack.c.b16 %v1207, %v1203
  %v1488 = vpack.c.b16 %v1208, %v1204
  %v1489 = vpack.c.b16 %v1209, %v1205
  %v1490 = vpack.c.b16 %v1214, %v1210
  %v1491 = vpack.c.b16 %v1215, %v1211
  %v1492 = vpack.c.b16 %v1216, %v1212
  %v1493 = vpack.c.b16 %v1217, %v1213
  %v1494 = vpack.c.b16 %v1222, %v1218
  %v1495 = vpack.c.b16 %v1223, %v1219
  %v1496 = vpack.c.b16 %v1224, %v1220
  %v1497 = vpack.c.b16 %v1225, %v1221
  %v1498 = vpack.c.b16 %v1230, %v1226
  %v1499 = vpack.c.b16 %v1231, %v1227
  %v1500 = vpack.c.b16 %v1232, %v1228
  %v1501 = vpack.c.b16 %v1233, %v1229
  %v1502 = vpack.c.b16 %v1238, %v1234
  %v1503 = vpack.c.b16 %v1239, %v1235
  %v1504 = vpack.c.b16 %v1240, %v1236
  %v1505 = vpack.c.b16 %v1241, %v1237
  %v1506 = vpack.c.b16 %v1246, %v1242
  %v1507 = vpack.c.b16 %v1247, %v1243
  %v1508 = vpack.c.b16 %v1248, %v1244
  %v1509 = vpack.c.b16 %v1249, %v1245
  %v1510 = vpack.c.b16 %v1254, %v1250
  %v1511 = vpack.c.b16 %v1255, %v1251
  %v1512 = vpack.c.b16 %v1256, %v1252
  %v1513 = vpack.c.b16 %v1257, %v1253
  %1770 = vmatpush.bf16.msra.mxu0 %v1286
  %1771 = vmatpush.bf16.msra.mxu0 %v1282
  %1772 = vmatpush.bf16.msra.mxu0 %v1278
  %1773 = vmatpush.bf16.msra.mxu0 %v1274
  %1774 = vmatpush.bf16.msra.mxu0 %v1270
  %1775 = vmatpush.bf16.msra.mxu0 %v1266
  %1776 = vmatpush.bf16.msra.mxu0 %v1262
  %1777 = vmatpush.bf16.msra.mxu0 %v1258
  %1778 = vmatmul.bf16.gmra.mxu0 %v474
  %v1779 = vpop.f32.mrf.mxu0
  %v1780 = vadd.f32 %v430, %v1779
  %v1781 = vpop.f32.mrf.mxu0
  %1782 = vdwg.mxu0
  %1783 = vmatpush.bf16.msra.mxu0 %v1318
  %1784 = vmatpush.bf16.msra.mxu0 %v1314
  %1785 = vmatpush.bf16.msra.mxu0 %v1310
  %1786 = vmatpush.bf16.msra.mxu0 %v1306
  %1787 = vmatpush.bf16.msra.mxu0 %v1302
  %1788 = vmatpush.bf16.msra.mxu0 %v1298
  %1789 = vmatpush.bf16.msra.mxu0 %v1294
  %1790 = vmatpush.bf16.msra.mxu0 %v1290
  %1791 = vmatmul.bf16.gmra.mxu0 %v475
  %v1792 = vpop.f32.mrf.mxu0
  %v1793 = vadd.f32 %v1780, %v1792
  %v1794 = vpop.f32.mrf.mxu0
  %1795 = vdwg.mxu0
  %1796 = vmatpush.bf16.msra.mxu0 %v1350
  %1797 = vmatpush.bf16.msra.mxu0 %v1346
  %1798 = vmatpush.bf16.msra.mxu0 %v1342
  %1799 = vmatpush.bf16.msra.mxu0 %v1338
  %1800 = vmatpush.bf16.msra.mxu0 %v1334
  %1801 = vmatpush.bf16.msra.mxu0 %v1330
  %1802 = vmatpush.bf16.msra.mxu0 %v1326
  %1803 = vmatpush.bf16.msra.mxu0 %v1322
  %1804 = vmatmul.bf16.gmra.mxu0 %v476
  %v1805 = vpop.f32.mrf.mxu0
  %v1806 = vadd.f32 %v1793, %v1805
  %v1807 = vpop.f32.mrf.mxu0
  %1808 = vdwg.mxu0
  %1809 = vmatpush.bf16.msra.mxu0 %v1382
  %1810 = vmatpush.bf16.msra.mxu0 %v1378
  %1811 = vmatpush.bf16.msra.mxu0 %v1374
  %1812 = vmatpush.bf16.msra.mxu0 %v1370
  %1813 = vmatpush.bf16.msra.mxu0 %v1366
  %1814 = vmatpush.bf16.msra.mxu0 %v1362
  %1815 = vmatpush.bf16.msra.mxu0 %v1358
  %1816 = vmatpush.bf16.msra.mxu0 %v1354
  %1817 = vmatmul.bf16.gmra.mxu0 %v477
  %v1818 = vpop.f32.mrf.mxu0
  %v1819 = vadd.f32 %v1806, %v1818
  %v1820 = vpop.f32.mrf.mxu0
  %1821 = vdwg.mxu0
  %1822 = vmatpush.bf16.msra.mxu0 %v1414
  %1823 = vmatpush.bf16.msra.mxu0 %v1410
  %1824 = vmatpush.bf16.msra.mxu0 %v1406
  %1825 = vmatpush.bf16.msra.mxu0 %v1402
  %1826 = vmatpush.bf16.msra.mxu0 %v1398
  %1827 = vmatpush.bf16.msra.mxu0 %v1394
  %1828 = vmatpush.bf16.msra.mxu0 %v1390
  %1829 = vmatpush.bf16.msra.mxu0 %v1386
  %1830 = vmatmul.bf16.gmra.mxu0 %v478
  %v1831 = vpop.f32.mrf.mxu0
  %v1832 = vadd.f32 %v1819, %v1831
  %v1833 = vpop.f32.mrf.mxu0
  %1834 = vdwg.mxu0
  %1835 = vmatpush.bf16.msra.mxu0 %v1446
  %1836 = vmatpush.bf16.msra.mxu0 %v1442
  %1837 = vmatpush.bf16.msra.mxu0 %v1438
  %1838 = vmatpush.bf16.msra.mxu0 %v1434
  %1839 = vmatpush.bf16.msra.mxu0 %v1430
  %1840 = vmatpush.bf16.msra.mxu0 %v1426
  %1841 = vmatpush.bf16.msra.mxu0 %v1422
  %1842 = vmatpush.bf16.msra.mxu0 %v1418
  %1843 = vmatmul.bf16.gmra.mxu0 %v479
  %v1844 = vpop.f32.mrf.mxu0
  %v1845 = vadd.f32 %v1832, %v1844
  %v1846 = vpop.f32.mrf.mxu0
  %1847 = vdwg.mxu0
  %1848 = vmatpush.bf16.msra.mxu0 %v1478
  %1849 = vmatpush.bf16.msra.mxu0 %v1474
  %1850 = vmatpush.bf16.msra.mxu0 %v1470
  %1851 = vmatpush.bf16.msra.mxu0 %v1466
  %1852 = vmatpush.bf16.msra.mxu0 %v1462
  %1853 = vmatpush.bf16.msra.mxu0 %v1458
  %1854 = vmatpush.bf16.msra.mxu0 %v1454
  %1855 = vmatpush.bf16.msra.mxu0 %v1450
  %1856 = vmatmul.bf16.gmra.mxu0 %v480
  %v1857 = vpop.f32.mrf.mxu0
  %v1858 = vadd.f32 %v1845, %v1857
  %v1859 = vpop.f32.mrf.mxu0
  %1860 = vdwg.mxu0
  %1861 = vmatpush.bf16.msra.mxu0 %v1510
  %1862 = vmatpush.bf16.msra.mxu0 %v1506
  %1863 = vmatpush.bf16.msra.mxu0 %v1502
  %1864 = vmatpush.bf16.msra.mxu0 %v1498
  %1865 = vmatpush.bf16.msra.mxu0 %v1494
  %1866 = vmatpush.bf16.msra.mxu0 %v1490
  %1867 = vmatpush.bf16.msra.mxu0 %v1486
  %1868 = vmatpush.bf16.msra.mxu0 %v1482
  %1869 = vmatmul.bf16.gmra.mxu0 %v481
  %v1870 = vpop.f32.mrf.mxu0
  %v1871 = vadd.f32 %v1858, %v1870
  %v1872 = vpop.f32.mrf.mxu0
  %1873 = vdwg.mxu0
  %1874 = vmatpush.bf16.msra.mxu0 %v1287
  %1875 = vmatpush.bf16.msra.mxu0 %v1283
  %1876 = vmatpush.bf16.msra.mxu0 %v1279
  %1877 = vmatpush.bf16.msra.mxu0 %v1275
  %1878 = vmatpush.bf16.msra.mxu0 %v1271
  %1879 = vmatpush.bf16.msra.mxu0 %v1267
  %1880 = vmatpush.bf16.msra.mxu0 %v1263
  %1881 = vmatpush.bf16.msra.mxu0 %v1259
  %1882 = vmatmul.bf16.gmra.mxu0 %v474
  %v1883 = vpop.f32.mrf.mxu0
  %v1884 = vadd.f32 %v443, %v1883
  %v1885 = vpop.f32.mrf.mxu0
  %1886 = vdwg.mxu0
  %1887 = vmatpush.bf16.msra.mxu0 %v1319
  %1888 = vmatpush.bf16.msra.mxu0 %v1315
  %1889 = vmatpush.bf16.msra.mxu0 %v1311
  %1890 = vmatpush.bf16.msra.mxu0 %v1307
  %1891 = vmatpush.bf16.msra.mxu0 %v1303
  %1892 = vmatpush.bf16.msra.mxu0 %v1299
  %1893 = vmatpush.bf16.msra.mxu0 %v1295
  %1894 = vmatpush.bf16.msra.mxu0 %v1291
  %1895 = vmatmul.bf16.gmra.mxu0 %v475
  %v1896 = vpop.f32.mrf.mxu0
  %v1897 = vadd.f32 %v1884, %v1896
  %v1898 = vpop.f32.mrf.mxu0
  %1899 = vdwg.mxu0
  %1900 = vmatpush.bf16.msra.mxu0 %v1351
  %1901 = vmatpush.bf16.msra.mxu0 %v1347
  %1902 = vmatpush.bf16.msra.mxu0 %v1343
  %1903 = vmatpush.bf16.msra.mxu0 %v1339
  %1904 = vmatpush.bf16.msra.mxu0 %v1335
  %1905 = vmatpush.bf16.msra.mxu0 %v1331
  %1906 = vmatpush.bf16.msra.mxu0 %v1327
  %1907 = vmatpush.bf16.msra.mxu0 %v1323
  %1908 = vmatmul.bf16.gmra.mxu0 %v476
  %v1909 = vpop.f32.mrf.mxu0
  %v1910 = vadd.f32 %v1897, %v1909
  %v1911 = vpop.f32.mrf.mxu0
  %1912 = vdwg.mxu0
  %1913 = vmatpush.bf16.msra.mxu0 %v1383
  %1914 = vmatpush.bf16.msra.mxu0 %v1379
  %1915 = vmatpush.bf16.msra.mxu0 %v1375
  %1916 = vmatpush.bf16.msra.mxu0 %v1371
  %1917 = vmatpush.bf16.msra.mxu0 %v1367
  %1918 = vmatpush.bf16.msra.mxu0 %v1363
  %1919 = vmatpush.bf16.msra.mxu0 %v1359
  %1920 = vmatpush.bf16.msra.mxu0 %v1355
  %1921 = vmatmul.bf16.gmra.mxu0 %v477
  %v1922 = vpop.f32.mrf.mxu0
  %v1923 = vadd.f32 %v1910, %v1922
  %v1924 = vpop.f32.mrf.mxu0
  %1925 = vdwg.mxu0
  %1926 = vmatpush.bf16.msra.mxu0 %v1415
  %1927 = vmatpush.bf16.msra.mxu0 %v1411
  %1928 = vmatpush.bf16.msra.mxu0 %v1407
  %1929 = vmatpush.bf16.msra.mxu0 %v1403
  %1930 = vmatpush.bf16.msra.mxu0 %v1399
  %1931 = vmatpush.bf16.msra.mxu0 %v1395
  %1932 = vmatpush.bf16.msra.mxu0 %v1391
  %1933 = vmatpush.bf16.msra.mxu0 %v1387
  %1934 = vmatmul.bf16.gmra.mxu0 %v478
  %v1935 = vpop.f32.mrf.mxu0
  %v1936 = vadd.f32 %v1923, %v1935
  %v1937 = vpop.f32.mrf.mxu0
  %1938 = vdwg.mxu0
  %1939 = vmatpush.bf16.msra.mxu0 %v1447
  %1940 = vmatpush.bf16.msra.mxu0 %v1443
  %1941 = vmatpush.bf16.msra.mxu0 %v1439
  %1942 = vmatpush.bf16.msra.mxu0 %v1435
  %1943 = vmatpush.bf16.msra.mxu0 %v1431
  %1944 = vmatpush.bf16.msra.mxu0 %v1427
  %1945 = vmatpush.bf16.msra.mxu0 %v1423
  %1946 = vmatpush.bf16.msra.mxu0 %v1419
  %1947 = vmatmul.bf16.gmra.mxu0 %v479
  %v1948 = vpop.f32.mrf.mxu0
  %v1949 = vadd.f32 %v1936, %v1948
  %v1950 = vpop.f32.mrf.mxu0
  %1951 = vdwg.mxu0
  %1952 = vmatpush.bf16.msra.mxu0 %v1479
  %1953 = vmatpush.bf16.msra.mxu0 %v1475
  %1954 = vmatpush.bf16.msra.mxu0 %v1471
  %1955 = vmatpush.bf16.msra.mxu0 %v1467
  %1956 = vmatpush.bf16.msra.mxu0 %v1463
  %1957 = vmatpush.bf16.msra.mxu0 %v1459
  %1958 = vmatpush.bf16.msra.mxu0 %v1455
  %1959 = vmatpush.bf16.msra.mxu0 %v1451
  %1960 = vmatmul.bf16.gmra.mxu0 %v480
  %v1961 = vpop.f32.mrf.mxu0
  %v1962 = vadd.f32 %v1949, %v1961
  %v1963 = vpop.f32.mrf.mxu0
  %1964 = vdwg.mxu0
  %1965 = vmatpush.bf16.msra.mxu0 %v1511
  %1966 = vmatpush.bf16.msra.mxu0 %v1507
  %1967 = vmatpush.bf16.msra.mxu0 %v1503
  %1968 = vmatpush.bf16.msra.mxu0 %v1499
  %1969 = vmatpush.bf16.msra.mxu0 %v1495
  %1970 = vmatpush.bf16.msra.mxu0 %v1491
  %1971 = vmatpush.bf16.msra.mxu0 %v1487
  %1972 = vmatpush.bf16.msra.mxu0 %v1483
  %1973 = vmatmul.bf16.gmra.mxu0 %v481
  %v1974 = vpop.f32.mrf.mxu0
  %v1975 = vadd.f32 %v1962, %v1974
  %v1976 = vpop.f32.mrf.mxu0
  %1977 = vdwg.mxu0
  %1978 = vmatpush.bf16.msra.mxu0 %v1288
  %1979 = vmatpush.bf16.msra.mxu0 %v1284
  %1980 = vmatpush.bf16.msra.mxu0 %v1280
  %1981 = vmatpush.bf16.msra.mxu0 %v1276
  %1982 = vmatpush.bf16.msra.mxu0 %v1272
  %1983 = vmatpush.bf16.msra.mxu0 %v1268
  %1984 = vmatpush.bf16.msra.mxu0 %v1264
  %1985 = vmatpush.bf16.msra.mxu0 %v1260
  %1986 = vmatmul.bf16.gmra.mxu0 %v474
  %v1987 = vpop.f32.mrf.mxu0
  %v1988 = vadd.f32 %v456, %v1987
  %v1989 = vpop.f32.mrf.mxu0
  %1990 = vdwg.mxu0
  %1991 = vmatpush.bf16.msra.mxu0 %v1320
  %1992 = vmatpush.bf16.msra.mxu0 %v1316
  %1993 = vmatpush.bf16.msra.mxu0 %v1312
  %1994 = vmatpush.bf16.msra.mxu0 %v1308
  %1995 = vmatpush.bf16.msra.mxu0 %v1304
  %1996 = vmatpush.bf16.msra.mxu0 %v1300
  %1997 = vmatpush.bf16.msra.mxu0 %v1296
  %1998 = vmatpush.bf16.msra.mxu0 %v1292
  %1999 = vmatmul.bf16.gmra.mxu0 %v475
  %v2000 = vpop.f32.mrf.mxu0
  %v2001 = vadd.f32 %v1988, %v2000
  %v2002 = vpop.f32.mrf.mxu0
  %2003 = vdwg.mxu0
  %2004 = vmatpush.bf16.msra.mxu0 %v1352
  %2005 = vmatpush.bf16.msra.mxu0 %v1348
  %2006 = vmatpush.bf16.msra.mxu0 %v1344
  %2007 = vmatpush.bf16.msra.mxu0 %v1340
  %2008 = vmatpush.bf16.msra.mxu0 %v1336
  %2009 = vmatpush.bf16.msra.mxu0 %v1332
  %2010 = vmatpush.bf16.msra.mxu0 %v1328
  %2011 = vmatpush.bf16.msra.mxu0 %v1324
  %2012 = vmatmul.bf16.gmra.mxu0 %v476
  %v2013 = vpop.f32.mrf.mxu0
  %v2014 = vadd.f32 %v2001, %v2013
  %v2015 = vpop.f32.mrf.mxu0
  %2016 = vdwg.mxu0
  %2017 = vmatpush.bf16.msra.mxu0 %v1384
  %2018 = vmatpush.bf16.msra.mxu0 %v1380
  %2019 = vmatpush.bf16.msra.mxu0 %v1376
  %2020 = vmatpush.bf16.msra.mxu0 %v1372
  %2021 = vmatpush.bf16.msra.mxu0 %v1368
  %2022 = vmatpush.bf16.msra.mxu0 %v1364
  %2023 = vmatpush.bf16.msra.mxu0 %v1360
  %2024 = vmatpush.bf16.msra.mxu0 %v1356
  %2025 = vmatmul.bf16.gmra.mxu0 %v477
  %v2026 = vpop.f32.mrf.mxu0
  %v2027 = vadd.f32 %v2014, %v2026
  %v2028 = vpop.f32.mrf.mxu0
  %2029 = vdwg.mxu0
  %2030 = vmatpush.bf16.msra.mxu0 %v1416
  %2031 = vmatpush.bf16.msra.mxu0 %v1412
  %2032 = vmatpush.bf16.msra.mxu0 %v1408
  %2033 = vmatpush.bf16.msra.mxu0 %v1404
  %2034 = vmatpush.bf16.msra.mxu0 %v1400
  %2035 = vmatpush.bf16.msra.mxu0 %v1396
  %2036 = vmatpush.bf16.msra.mxu0 %v1392
  %2037 = vmatpush.bf16.msra.mxu0 %v1388
  %2038 = vmatmul.bf16.gmra.mxu0 %v478
  %v2039 = vpop.f32.mrf.mxu0
  %v2040 = vadd.f32 %v2027, %v2039
  %v2041 = vpop.f32.mrf.mxu0
  %2042 = vdwg.mxu0
  %2043 = vmatpush.bf16.msra.mxu0 %v1448
  %2044 = vmatpush.bf16.msra.mxu0 %v1444
  %2045 = vmatpush.bf16.msra.mxu0 %v1440
  %2046 = vmatpush.bf16.msra.mxu0 %v1436
  %2047 = vmatpush.bf16.msra.mxu0 %v1432
  %2048 = vmatpush.bf16.msra.mxu0 %v1428
  %2049 = vmatpush.bf16.msra.mxu0 %v1424
  %2050 = vmatpush.bf16.msra.mxu0 %v1420
  %2051 = vmatmul.bf16.gmra.mxu0 %v479
  %v2052 = vpop.f32.mrf.mxu0
  %v2053 = vadd.f32 %v2040, %v2052
  %v2054 = vpop.f32.mrf.mxu0
  %2055 = vdwg.mxu0
  %2056 = vmatpush.bf16.msra.mxu0 %v1480
  %2057 = vmatpush.bf16.msra.mxu0 %v1476
  %2058 = vmatpush.bf16.msra.mxu0 %v1472
  %2059 = vmatpush.bf16.msra.mxu0 %v1468
  %2060 = vmatpush.bf16.msra.mxu0 %v1464
  %2061 = vmatpush.bf16.msra.mxu0 %v1460
  %2062 = vmatpush.bf16.msra.mxu0 %v1456
  %2063 = vmatpush.bf16.msra.mxu0 %v1452
  %2064 = vmatmul.bf16.gmra.mxu0 %v480
  %v2065 = vpop.f32.mrf.mxu0
  %v2066 = vadd.f32 %v2053, %v2065
  %v2067 = vpop.f32.mrf.mxu0
  %2068 = vdwg.mxu0
  %2069 = vmatpush.bf16.msra.mxu0 %v1512
  %2070 = vmatpush.bf16.msra.mxu0 %v1508
  %2071 = vmatpush.bf16.msra.mxu0 %v1504
  %2072 = vmatpush.bf16.msra.mxu0 %v1500
  %2073 = vmatpush.bf16.msra.mxu0 %v1496
  %2074 = vmatpush.bf16.msra.mxu0 %v1492
  %2075 = vmatpush.bf16.msra.mxu0 %v1488
  %2076 = vmatpush.bf16.msra.mxu0 %v1484
  %2077 = vmatmul.bf16.gmra.mxu0 %v481
  %v2078 = vpop.f32.mrf.mxu0
  %v2079 = vadd.f32 %v2066, %v2078
  %v2080 = vpop.f32.mrf.mxu0
  %2081 = vdwg.mxu0
  %2082 = vmatpush.bf16.msra.mxu0 %v1289
  %2083 = vmatpush.bf16.msra.mxu0 %v1285
  %2084 = vmatpush.bf16.msra.mxu0 %v1281
  %2085 = vmatpush.bf16.msra.mxu0 %v1277
  %2086 = vmatpush.bf16.msra.mxu0 %v1273
  %2087 = vmatpush.bf16.msra.mxu0 %v1269
  %2088 = vmatpush.bf16.msra.mxu0 %v1265
  %2089 = vmatpush.bf16.msra.mxu0 %v1261
  %2090 = vmatmul.bf16.gmra.mxu0 %v474
  %v2091 = vpop.f32.mrf.mxu0
  %v2092 = vadd.f32 %v469, %v2091
  %v2093 = vpop.f32.mrf.mxu0
  %2094 = vdwg.mxu0
  %2095 = vmatpush.bf16.msra.mxu0 %v1321
  %2096 = vmatpush.bf16.msra.mxu0 %v1317
  %2097 = vmatpush.bf16.msra.mxu0 %v1313
  %2098 = vmatpush.bf16.msra.mxu0 %v1309
  %2099 = vmatpush.bf16.msra.mxu0 %v1305
  %2100 = vmatpush.bf16.msra.mxu0 %v1301
  %2101 = vmatpush.bf16.msra.mxu0 %v1297
  %2102 = vmatpush.bf16.msra.mxu0 %v1293
  %2103 = vmatmul.bf16.gmra.mxu0 %v475
  %v2104 = vpop.f32.mrf.mxu0
  %v2105 = vadd.f32 %v2092, %v2104
  %v2106 = vpop.f32.mrf.mxu0
  %2107 = vdwg.mxu0
  %2108 = vmatpush.bf16.msra.mxu0 %v1353
  %2109 = vmatpush.bf16.msra.mxu0 %v1349
  %2110 = vmatpush.bf16.msra.mxu0 %v1345
  %2111 = vmatpush.bf16.msra.mxu0 %v1341
  %2112 = vmatpush.bf16.msra.mxu0 %v1337
  %2113 = vmatpush.bf16.msra.mxu0 %v1333
  %2114 = vmatpush.bf16.msra.mxu0 %v1329
  %2115 = vmatpush.bf16.msra.mxu0 %v1325
  %2116 = vmatmul.bf16.gmra.mxu0 %v476
  %v2117 = vpop.f32.mrf.mxu0
  %v2118 = vadd.f32 %v2105, %v2117
  %v2119 = vpop.f32.mrf.mxu0
  %2120 = vdwg.mxu0
  %2121 = vmatpush.bf16.msra.mxu0 %v1385
  %2122 = vmatpush.bf16.msra.mxu0 %v1381
  %2123 = vmatpush.bf16.msra.mxu0 %v1377
  %2124 = vmatpush.bf16.msra.mxu0 %v1373
  %2125 = vmatpush.bf16.msra.mxu0 %v1369
  %2126 = vmatpush.bf16.msra.mxu0 %v1365
  %2127 = vmatpush.bf16.msra.mxu0 %v1361
  %2128 = vmatpush.bf16.msra.mxu0 %v1357
  %2129 = vmatmul.bf16.gmra.mxu0 %v477
  %v2130 = vpop.f32.mrf.mxu0
  %v2131 = vadd.f32 %v2118, %v2130
  %v2132 = vpop.f32.mrf.mxu0
  %2133 = vdwg.mxu0
  %2134 = vmatpush.bf16.msra.mxu0 %v1417
  %2135 = vmatpush.bf16.msra.mxu0 %v1413
  %2136 = vmatpush.bf16.msra.mxu0 %v1409
  %2137 = vmatpush.bf16.msra.mxu0 %v1405
  %2138 = vmatpush.bf16.msra.mxu0 %v1401
  %2139 = vmatpush.bf16.msra.mxu0 %v1397
  %2140 = vmatpush.bf16.msra.mxu0 %v1393
  %2141 = vmatpush.bf16.msra.mxu0 %v1389
  %2142 = vmatmul.bf16.gmra.mxu0 %v478
  %v2143 = vpop.f32.mrf.mxu0
  %v2144 = vadd.f32 %v2131, %v2143
  %v2145 = vpop.f32.mrf.mxu0
  %2146 = vdwg.mxu0
  %2147 = vmatpush.bf16.msra.mxu0 %v1449
  %2148 = vmatpush.bf16.msra.mxu0 %v1445
  %2149 = vmatpush.bf16.msra.mxu0 %v1441
  %2150 = vmatpush.bf16.msra.mxu0 %v1437
  %2151 = vmatpush.bf16.msra.mxu0 %v1433
  %2152 = vmatpush.bf16.msra.mxu0 %v1429
  %2153 = vmatpush.bf16.msra.mxu0 %v1425
  %2154 = vmatpush.bf16.msra.mxu0 %v1421
  %2155 = vmatmul.bf16.gmra.mxu0 %v479
  %v2156 = vpop.f32.mrf.mxu0
  %v2157 = vadd.f32 %v2144, %v2156
  %v2158 = vpop.f32.mrf.mxu0
  %2159 = vdwg.mxu0
  %2160 = vmatpush.bf16.msra.mxu0 %v1481
  %2161 = vmatpush.bf16.msra.mxu0 %v1477
  %2162 = vmatpush.bf16.msra.mxu0 %v1473
  %2163 = vmatpush.bf16.msra.mxu0 %v1469
  %2164 = vmatpush.bf16.msra.mxu0 %v1465
  %2165 = vmatpush.bf16.msra.mxu0 %v1461
  %2166 = vmatpush.bf16.msra.mxu0 %v1457
  %2167 = vmatpush.bf16.msra.mxu0 %v1453
  %2168 = vmatmul.bf16.gmra.mxu0 %v480
  %v2169 = vpop.f32.mrf.mxu0
  %v2170 = vadd.f32 %v2157, %v2169
  %v2171 = vpop.f32.mrf.mxu0
  %2172 = vdwg.mxu0
  %2173 = vmatpush.bf16.msra.mxu0 %v1513
  %2174 = vmatpush.bf16.msra.mxu0 %v1509
  %2175 = vmatpush.bf16.msra.mxu0 %v1505
  %2176 = vmatpush.bf16.msra.mxu0 %v1501
  %2177 = vmatpush.bf16.msra.mxu0 %v1497
  %2178 = vmatpush.bf16.msra.mxu0 %v1493
  %2179 = vmatpush.bf16.msra.mxu0 %v1489
  %2180 = vmatpush.bf16.msra.mxu0 %v1485
  %2181 = vmatmul.bf16.gmra.mxu0 %v481
  %v2182 = vpop.f32.mrf.mxu0
  %v2183 = vadd.f32 %v2170, %v2182
  %v2184 = vpop.f32.mrf.mxu0
  %2185 = vdwg.mxu0
  %v2186 = vld [vmem:[%s6] sm:$0xf]
  %v2188 = vperm.slane %v2186, 0
  %v2189 = vperm.slane %v2186, 1
  %v2190 = vperm.slane %v2186, 2
  %v2191 = vperm.slane %v2186, 3
  %v2196 = vadd.f32 %v1871, %v2188
  %v2197 = vadd.f32 %v1975, %v2189
  %v2198 = vadd.f32 %v2079, %v2190
  %v2199 = vadd.f32 %v2183, %v2191
  %v2200 = vmax.f32 %v2196, 0.0
  %v2201 = vmax.f32 %v2197, 0.0
  %v2202 = vmax.f32 %v2198, 0.0
  %v2203 = vmax.f32 %v2199, 0.0
  %v2204 = vpack.c.bf16 %v2200, %v2200
  %v2205 = vpack.c.bf16 %v2201, %v2201
  %v2206 = vpack.c.bf16 %v2202, %v2202
  %v2207 = vpack.c.bf16 %v2203, %v2203
  %v2208 = vld [vmem:[%s7] sm:$0xf]
  %v2209 = vld [vmem:[%s7 + $0x4] sm:$0xf]
  %v2210 = vld [vmem:[%s7 + $0x8] sm:$0xf]
  %v2211 = vld [vmem:[%s7 + $0xc] sm:$0xf]
  %v2212 = vld [vmem:[%s7 + $0x10] sm:$0xf]
  %v2213 = vld [vmem:[%s7 + $0x14] sm:$0xf]
  %v2214 = vld [vmem:[%s7 + $0x18] sm:$0xf]
  %v2215 = vld [vmem:[%s7 + $0x1c] sm:$0xf]
  %v2216 = vld [vmem:[%s7 + $0x20] sm:$0xf]
  %v2217 = vld [vmem:[%s7 + $0x24] sm:$0xf]
  %v2218 = vld [vmem:[%s7 + $0x28] sm:$0xf]
  %v2219 = vld [vmem:[%s7 + $0x2c] sm:$0xf]
  %v2220 = vld [vmem:[%s7 + $0x30] sm:$0xf]
  %v2221 = vld [vmem:[%s7 + $0x34] sm:$0xf]
  %v2222 = vld [vmem:[%s7 + $0x38] sm:$0xf]
  %v2223 = vld [vmem:[%s7 + $0x3c] sm:$0xf]
  %v2224 = vld [vmem:[%s7 + $0x40] sm:$0xf]
  %v2225 = vld [vmem:[%s7 + $0x44] sm:$0xf]
  %v2226 = vld [vmem:[%s7 + $0x48] sm:$0xf]
  %v2227 = vld [vmem:[%s7 + $0x4c] sm:$0xf]
  %v2228 = vld [vmem:[%s7 + $0x50] sm:$0xf]
  %v2229 = vld [vmem:[%s7 + $0x54] sm:$0xf]
  %v2230 = vld [vmem:[%s7 + $0x58] sm:$0xf]
  %v2231 = vld [vmem:[%s7 + $0x5c] sm:$0xf]
  %v2232 = vld [vmem:[%s7 + $0x60] sm:$0xf]
  %v2233 = vld [vmem:[%s7 + $0x64] sm:$0xf]
  %v2234 = vld [vmem:[%s7 + $0x68] sm:$0xf]
  %v2235 = vld [vmem:[%s7 + $0x6c] sm:$0xf]
  %v2236 = vld [vmem:[%s7 + $0x70] sm:$0xf]
  %v2237 = vld [vmem:[%s7 + $0x74] sm:$0xf]
  %v2238 = vld [vmem:[%s7 + $0x78] sm:$0xf]
  %v2239 = vld [vmem:[%s7 + $0x7c] sm:$0xf]
  %v2240 = vld [vmem:[%s7 + $0x80] sm:$0xf]
  %v2241 = vld [vmem:[%s7 + $0x84] sm:$0xf]
  %v2242 = vld [vmem:[%s7 + $0x88] sm:$0xf]
  %v2243 = vld [vmem:[%s7 + $0x8c] sm:$0xf]
  %v2244 = vld [vmem:[%s7 + $0x90] sm:$0xf]
  %v2245 = vld [vmem:[%s7 + $0x94] sm:$0xf]
  %v2246 = vld [vmem:[%s7 + $0x98] sm:$0xf]
  %v2247 = vld [vmem:[%s7 + $0x9c] sm:$0xf]
  %v2248 = vld [vmem:[%s7 + $0xa0] sm:$0xf]
  %v2249 = vld [vmem:[%s7 + $0xa4] sm:$0xf]
  %v2250 = vld [vmem:[%s7 + $0xa8] sm:$0xf]
  %v2251 = vld [vmem:[%s7 + $0xac] sm:$0xf]
  %v2252 = vld [vmem:[%s7 + $0xb0] sm:$0xf]
  %v2253 = vld [vmem:[%s7 + $0xb4] sm:$0xf]
  %v2254 = vld [vmem:[%s7 + $0xb8] sm:$0xf]
  %v2255 = vld [vmem:[%s7 + $0xbc] sm:$0xf]
  %v2256 = vld [vmem:[%s7 + $0xc0] sm:$0xf]
  %v2257 = vld [vmem:[%s7 + $0xc4] sm:$0xf]
  %v2258 = vld [vmem:[%s7 + $0xc8] sm:$0xf]
  %v2259 = vld [vmem:[%s7 + $0xcc] sm:$0xf]
  %v2260 = vld [vmem:[%s7 + $0xd0] sm:$0xf]
  %v2261 = vld [vmem:[%s7 + $0xd4] sm:$0xf]
  %v2262 = vld [vmem:[%s7 + $0xd8] sm:$0xf]
  %v2263 = vld [vmem:[%s7 + $0xdc] sm:$0xf]
  %v2264 = vld [vmem:[%s7 + $0xe0] sm:$0xf]
  %v2265 = vld [vmem:[%s7 + $0xe4] sm:$0xf]
  %v2266 = vld [vmem:[%s7 + $0xe8] sm:$0xf]
  %v2267 = vld [vmem:[%s7 + $0xec] sm:$0xf]
  %v2268 = vld [vmem:[%s7 + $0xf0] sm:$0xf]
  %v2269 = vld [vmem:[%s7 + $0xf4] sm:$0xf]
  %v2270 = vld [vmem:[%s7 + $0xf8] sm:$0xf]
  %v2271 = vld [vmem:[%s7 + $0xfc] sm:$0xf]
  %v2272 = vld [vmem:[%s8] sm:$0x1]
  %v2274 = vperm.slane %v2272, 0
  %v2340 = vunpack.c.l.b16 %v2208
  %v2341 = vunpack.c.l.b16 %v2209
  %v2342 = vunpack.c.l.b16 %v2210
  %v2343 = vunpack.c.l.b16 %v2211
  %v2344 = vunpack.c.l.b16 %v2212
  %v2345 = vunpack.c.l.b16 %v2213
  %v2346 = vunpack.c.l.b16 %v2214
  %v2347 = vunpack.c.l.b16 %v2215
  %v2348 = vunpack.c.l.b16 %v2216
  %v2349 = vunpack.c.l.b16 %v2217
  %v2350 = vunpack.c.l.b16 %v2218
  %v2351 = vunpack.c.l.b16 %v2219
  %v2352 = vunpack.c.l.b16 %v2220
  %v2353 = vunpack.c.l.b16 %v2221
  %v2354 = vunpack.c.l.b16 %v2222
  %v2355 = vunpack.c.l.b16 %v2223
  %v2356 = vunpack.c.l.b16 %v2224
  %v2357 = vunpack.c.l.b16 %v2225
  %v2358 = vunpack.c.l.b16 %v2226
  %v2359 = vunpack.c.l.b16 %v2227
  %v2360 = vunpack.c.l.b16 %v2228
  %v2361 = vunpack.c.l.b16 %v2229
  %v2362 = vunpack.c.l.b16 %v2230
  %v2363 = vunpack.c.l.b16 %v2231
  %v2364 = vunpack.c.l.b16 %v2232
  %v2365 = vunpack.c.l.b16 %v2233
  %v2366 = vunpack.c.l.b16 %v2234
  %v2367 = vunpack.c.l.b16 %v2235
  %v2368 = vunpack.c.l.b16 %v2236
  %v2369 = vunpack.c.l.b16 %v2237
  %v2370 = vunpack.c.l.b16 %v2238
  %v2371 = vunpack.c.l.b16 %v2239
  %v2372 = vunpack.c.l.b16 %v2240
  %v2373 = vunpack.c.l.b16 %v2241
  %v2374 = vunpack.c.l.b16 %v2242
  %v2375 = vunpack.c.l.b16 %v2243
  %v2376 = vunpack.c.l.b16 %v2244
  %v2377 = vunpack.c.l.b16 %v2245
  %v2378 = vunpack.c.l.b16 %v2246
  %v2379 = vunpack.c.l.b16 %v2247
  %v2380 = vunpack.c.l.b16 %v2248
  %v2381 = vunpack.c.l.b16 %v2249
  %v2382 = vunpack.c.l.b16 %v2250
  %v2383 = vunpack.c.l.b16 %v2251
  %v2384 = vunpack.c.l.b16 %v2252
  %v2385 = vunpack.c.l.b16 %v2253
  %v2386 = vunpack.c.l.b16 %v2254
  %v2387 = vunpack.c.l.b16 %v2255
  %v2388 = vunpack.c.l.b16 %v2256
  %v2389 = vunpack.c.l.b16 %v2257
  %v2390 = vunpack.c.l.b16 %v2258
  %v2391 = vunpack.c.l.b16 %v2259
  %v2392 = vunpack.c.l.b16 %v2260
  %v2393 = vunpack.c.l.b16 %v2261
  %v2394 = vunpack.c.l.b16 %v2262
  %v2395 = vunpack.c.l.b16 %v2263
  %v2396 = vunpack.c.l.b16 %v2264
  %v2397 = vunpack.c.l.b16 %v2265
  %v2398 = vunpack.c.l.b16 %v2266
  %v2399 = vunpack.c.l.b16 %v2267
  %v2400 = vunpack.c.l.b16 %v2268
  %v2401 = vunpack.c.l.b16 %v2269
  %v2402 = vunpack.c.l.b16 %v2270
  %v2403 = vunpack.c.l.b16 %v2271
  %v2404 = vpack.c.b16 %v2341, %v2340
  %v2405 = vpack.c.b16 %v2343, %v2342
  %v2406 = vpack.c.b16 %v2345, %v2344
  %v2407 = vpack.c.b16 %v2347, %v2346
  %v2408 = vpack.c.b16 %v2349, %v2348
  %v2409 = vpack.c.b16 %v2351, %v2350
  %v2410 = vpack.c.b16 %v2353, %v2352
  %v2411 = vpack.c.b16 %v2355, %v2354
  %v2412 = vpack.c.b16 %v2357, %v2356
  %v2413 = vpack.c.b16 %v2359, %v2358
  %v2414 = vpack.c.b16 %v2361, %v2360
  %v2415 = vpack.c.b16 %v2363, %v2362
  %v2416 = vpack.c.b16 %v2365, %v2364
  %v2417 = vpack.c.b16 %v2367, %v2366
  %v2418 = vpack.c.b16 %v2369, %v2368
  %v2419 = vpack.c.b16 %v2371, %v2370
  %v2420 = vpack.c.b16 %v2373, %v2372
  %v2421 = vpack.c.b16 %v2375, %v2374
  %v2422 = vpack.c.b16 %v2377, %v2376
  %v2423 = vpack.c.b16 %v2379, %v2378
  %v2424 = vpack.c.b16 %v2381, %v2380
  %v2425 = vpack.c.b16 %v2383, %v2382
  %v2426 = vpack.c.b16 %v2385, %v2384
  %v2427 = vpack.c.b16 %v2387, %v2386
  %v2428 = vpack.c.b16 %v2389, %v2388
  %v2429 = vpack.c.b16 %v2391, %v2390
  %v2430 = vpack.c.b16 %v2393, %v2392
  %v2431 = vpack.c.b16 %v2395, %v2394
  %v2432 = vpack.c.b16 %v2397, %v2396
  %v2433 = vpack.c.b16 %v2399, %v2398
  %v2434 = vpack.c.b16 %v2401, %v2400
  %v2435 = vpack.c.b16 %v2403, %v2402
  %2468 = vmatpush.bf16.msra.mxu0 %v2411
  %2469 = vmatpush.bf16.msra.mxu0 %v2410
  %2470 = vmatpush.bf16.msra.mxu0 %v2409
  %2471 = vmatpush.bf16.msra.mxu0 %v2408
  %2472 = vmatpush.bf16.msra.mxu0 %v2407
  %2473 = vmatpush.bf16.msra.mxu0 %v2406
  %2474 = vmatpush.bf16.msra.mxu0 %v2405
  %2475 = vmatpush.bf16.msra.mxu0 %v2404
  %2476 = vmatmul.bf16.gmra.mxu0 %v2204
  %v2477 = vpop.f32.mrf.mxu0
  %v2478 = vadd.f32 %v2274, %v2477
  %v2479 = vpop.f32.mrf.mxu0
  %2480 = vdwg.mxu0
  %2481 = vmatpush.bf16.msra.mxu0 %v2419
  %2482 = vmatpush.bf16.msra.mxu0 %v2418
  %2483 = vmatpush.bf16.msra.mxu0 %v2417
  %2484 = vmatpush.bf16.msra.mxu0 %v2416
  %2485 = vmatpush.bf16.msra.mxu0 %v2415
  %2486 = vmatpush.bf16.msra.mxu0 %v2414
  %2487 = vmatpush.bf16.msra.mxu0 %v2413
  %2488 = vmatpush.bf16.msra.mxu0 %v2412
  %2489 = vmatmul.bf16.gmra.mxu0 %v2205
  %v2490 = vpop.f32.mrf.mxu0
  %v2491 = vadd.f32 %v2478, %v2490
  %v2492 = vpop.f32.mrf.mxu0
  %2493 = vdwg.mxu0
  %2494 = vmatpush.bf16.msra.mxu0 %v2427
  %2495 = vmatpush.bf16.msra.mxu0 %v2426
  %2496 = vmatpush.bf16.msra.mxu0 %v2425
  %2497 = vmatpush.bf16.msra.mxu0 %v2424
  %2498 = vmatpush.bf16.msra.mxu0 %v2423
  %2499 = vmatpush.bf16.msra.mxu0 %v2422
  %2500 = vmatpush.bf16.msra.mxu0 %v2421
  %2501 = vmatpush.bf16.msra.mxu0 %v2420
  %2502 = vmatmul.bf16.gmra.mxu0 %v2206
  %v2503 = vpop.f32.mrf.mxu0
  %v2504 = vadd.f32 %v2491, %v2503
  %v2505 = vpop.f32.mrf.mxu0
  %2506 = vdwg.mxu0
  %2507 = vmatpush.bf16.msra.mxu0 %v2435
  %2508 = vmatpush.bf16.msra.mxu0 %v2434
  %2509 = vmatpush.bf16.msra.mxu0 %v2433
  %2510 = vmatpush.bf16.msra.mxu0 %v2432
  %2511 = vmatpush.bf16.msra.mxu0 %v2431
  %2512 = vmatpush.bf16.msra.mxu0 %v2430
  %2513 = vmatpush.bf16.msra.mxu0 %v2429
  %2514 = vmatpush.bf16.msra.mxu0 %v2428
  %2515 = vmatmul.bf16.gmra.mxu0 %v2207
  %v2516 = vpop.f32.mrf.mxu0
  %v2517 = vadd.f32 %v2504, %v2516
  %v2518 = vpop.f32.mrf.mxu0
  %2519 = vdwg.mxu0
  %v2520 = vlaneseq
  %v2521 = vand.u32 %v2520, 127
  %vm2522 = vcmp.ge.s32.totalorder %v2521, 4
  %vm2523 = vcmp.lt.s32.totalorder %v2521, 8
  %vm2524 = vmand %vm2522, %vm2523
  %v2525 = vmax.f32 %v2517, -20.0
  %v2526 = vmin.f32 %v2525, 2.0
  %v2527 = vsel %vm2524, %v2526, %v2517
  %2528 = vst [vmem:[%s9] sm:$0x3] %v2527
  // Predicated region
  $region38: #{policy_forward.7} parent=0 // pred_check
    _
  $region39: #{policy_forward.7} parent=0 // pred_check_branch
    %2530 = sbr.rel (0) target = $region41
  $region40: #{policy_forward.7} parent=0 // pred_region
    _
  $region41: #{policy_forward.7} parent=0 // pred_fallthru
    _
  // Predicated region
  $region42: #{policy_forward.7} parent=0 // pred_check
    _
  $region43: #{policy_forward.7} parent=0 // pred_check_branch
    %2532 = sbr.rel (0) target = $region45
  $region44: #{policy_forward.7} parent=0 // pred_region
    _
  $region45: #{policy_forward.7} parent=0 // pred_fallthru
    _

</llo_original>
